<compile_context>
chip_gen: v7x
topology: tpu7x:2x2x1
jax: 0.10.0
libtpu: 0.0.40
codegen_flags: <defaults>
</compile_context>

<pallas_src>
import functools

import jax
import jax.numpy as jnp
from jax import lax
from jax.experimental import pallas as pl
from jax.experimental.pallas import tpu as pltpu

BN_EPS = 1e-5


def _round_up(x, m):
    return (x + m - 1) // m * m


@functools.lru_cache(maxsize=None)
def _conv_vmem_limit():
    """Generation-aware scoped-VMEM limit: ~half of physical, clamped to [32, 96] MiB."""
    phys = None
    try:
        info = pltpu.get_tpu_info()
        phys = getattr(info, "vmem_capacity_bytes", None)
    except Exception:
        phys = None
    if not phys:
        phys = 64 * 1024 * 1024  # safe fallback (v7x physical VMEM)
    return int(min(96 * 1024 * 1024, max(32 * 1024 * 1024, phys // 2)))


# ----------------------------- MaxPool 2x2 kernel -----------------------------
def _maxpool2x2_kernel(x_ref, o_ref):
    # x_ref: (1, 2*TH, W//2, 2*C)  -- W-pairs pre-folded into the lane dim by a free reshape
    # o_ref: (1, TH,   W//2,   C)
    _, h2, w2, c2 = x_ref.shape
    c = c2 // 2
    x = x_ref[0].reshape(h2 // 2, 2, w2, c2)            # leading-dim split only (free)
    m = jnp.maximum(x[:, 0], x[:, 1])                   # max over H pairs
    o_ref[0] = jnp.maximum(m[:, :, :c], m[:, :, c:])    # max over W pairs (lane halves)


def maxpool2x2(x_nhwc, *, vmem_limit):
    """2x2 / stride-2 max pool, NHWC in / NHWC out (no layout transposes)."""
    N, H, W, C = x_nhwc.shape
    assert H % 2 == 0 and W % 2 == 0, "maxpool2x2 requires even H and W"
    H2, W2 = H // 2, W // 2
    x = x_nhwc.reshape(N, H, W2, 2 * C)                 # free reshape (W, C contiguous)

    # VMEM-budget-driven output tile height + cdiv grid (no divisor collapse).
    row_bytes = W2 * 2 * C * x.dtype.itemsize           # one input row
    budget = 2 * 1024 * 1024                            # per input block (double-buffered)
    th = max(1, min(H2, budget // max(1, 2 * row_bytes)))
    if th >= 8:
        th -= th % 8
    grid_h = pl.cdiv(H2, th)

    return pl.pallas_call(
        _maxpool2x2_kernel,
        grid=(N, grid_h),
        in_specs=[pl.BlockSpec((1, 2 * th, W2, 2 * C), lambda n, t: (n, t, 0, 0))],
        out_specs=pl.BlockSpec((1, th, W2, C), lambda n, t: (n, t, 0, 0)),
        out_shape=jax.ShapeDtypeStruct((N, H2, W2, C), x_nhwc.dtype),
        compiler_params=pltpu.CompilerParams(
            dimension_semantics=("parallel", "parallel"),
            vmem_limit_bytes=vmem_limit),
    )(x)


# ----------------------- Conv3x3 + BatchNorm + ReLU kernels ---------------------
def _conv_acc_flat(x_ref, w_ref, *, Mout, Wp):
    """9 accumulating tap matmuls on the flat padded frame (fallback, any Cin)."""
    cp = w_ref.shape[-1]
    acc = jnp.zeros((Mout, cp), jnp.float32)
    for t in range(9):                                   # static unroll over taps
        dy, dx = divmod(t, 3)
        off = dy * Wp + dx                               # contiguous row slice per tap
        acc = acc + jnp.dot(x_ref[0, off:off + Mout, :], w_ref[t],
                            preferred_element_type=jnp.float32)
    return acc


def _conv_acc_grouped(x_ref, w_ref, lhs_ref, *, Mout, Wp):
    """kw-grouped taps: stage (ms, 3*Cin) once in VMEM, then 3 matmuls with K=3*Cin."""
    cp = w_ref.shape[-1]
    cin = x_ref.shape[-1]
    ms = Mout + 2 * Wp
    for dx in range(3):                                  # lane-aligned column blocks
        lhs_ref[:, dx * cin:(dx + 1) * cin] = x_ref[0, dx:dx + ms, :]
    acc = jnp.zeros((Mout, cp), jnp.float32)
    for dy in range(3):
        acc = acc + jnp.dot(lhs_ref[dy * Wp:dy * Wp + Mout, :], w_ref[dy],
                            preferred_element_type=jnp.float32)
    return acc


def _conv_stats_kernel(x_ref, w_ref, y_ref, stats_ref, *scratch, Wp, W, Mout, grouped):
    """Pass 1: conv (once) -> materialize y + accumulate per-channel sum / sum-of-squares."""
    @pl.when(pl.program_id(0) == 0)
    def _init():
        stats_ref[...] = jnp.zeros_like(stats_ref)

    if grouped:
        acc = _conv_acc_grouped(x_ref, w_ref, scratch[0], Mout=Mout, Wp=Wp)
    else:
        acc = _conv_acc_flat(x_ref, w_ref, Mout=Mout, Wp=Wp)

    # In-kernel validity mask for the 2 padded-width columns (no HBM mask operand).
    col = lax.broadcasted_iota(jnp.int32, acc.shape, 0) % Wp
    ym = jnp.where(col < W, acc, 0.0)
    s1 = jnp.sum(ym, axis=0, keepdims=True)              # (1, Cp)
    s2 = jnp.sum(ym * ym, axis=0, keepdims=True)         # (1, Cp)
    stats_ref[...] += jnp.concatenate([s1, s2], axis=0)

    y_ref[0] = acc.astype(y_ref.dtype)                    # bf16/f32 conv output, no recompute


def _bn_relu_frame_kernel(y_ref, scale_ref, shift_ref, o_ref, *, Wp, W, Mout):
    """Pass 2: fused scale/shift/ReLU, emitted directly in the NEXT conv's padded frame."""
    M2 = o_ref.shape[1]
    cp = o_ref.shape[-1]
    y = y_ref[0].astype(jnp.float32)                      # (Mout, Cp)
    z = jnp.maximum(y * scale_ref[...] + shift_ref[...], 0.0)
    col = lax.broadcasted_iota(jnp.int32, z.shape, 0) % Wp
    z = jnp.where(col < W, z, 0.0)                        # zero garbage cols -> valid padding
    # Canonical frame: data (h, w) lives at flat row (h+1)*Wp + (w+1); everything else is 0.
    o_ref[0, 0:Wp + 1, :] = jnp.zeros((Wp + 1, cp), o_ref.dtype)
    o_ref[0, Wp + 1:Wp + 1 + Mout, :] = z.astype(o_ref.dtype)
    o_ref[0, Wp + 1 + Mout:M2, :] = jnp.zeros((M2 - Mout - Wp - 1, cp), o_ref.dtype)


def conv3x3_bn_relu_frame(x_frame, H, W, w_oihw, gamma, beta, *, compute_dtype, vmem_limit):
    """Conv2d(3x3, pad=1) -> BatchNorm2d (training-mode batch stats) -> ReLU.

    Input/output are canonical zero-padded frames: shape (N, (H+3)*(W+2), C_frame), with
    data (h, w) at flat row (h+1)*(W+2) + (w+1) and zeros elsewhere.  The output frame's
    channel count is Cout rounded up to 128 (padded channels are exactly zero), so it can
    feed the next conv directly with zero XLA glue.

    The conv bias is intentionally omitted: under training-mode BatchNorm the per-channel
    bias is exactly cancelled by the mean subtraction.
    """
    N, M2, Cin_f = x_frame.shape
    Wp = W + 2
    Mout = H * Wp
    assert M2 == (H + 3) * Wp
    Cout, Cin = w_oihw.shape[:2]
    assert Cin <= Cin_f
    Cp = _round_up(Cout, 128)                 # lane-dense matmuls / stores

    # Per-tap weights: (Cout, Cin, 3, 3) -> (kh, kw, Cin_f, Cp), zero-padded on both C dims.
    wt = jnp.transpose(w_oihw, (2, 3, 1, 0))
    wt = jnp.pad(wt, ((0, 0), (0, 0), (0, Cin_f - Cin), (0, Cp - Cout))).astype(compute_dtype)

    grouped = (Cin_f % 128 == 0)              # lane-aligned staging only (see TODO above)
    if grouped:
        wt = wt.reshape(3, 3 * Cin_f, Cp)
        w_spec = pl.BlockSpec((3, 3 * Cin_f, Cp), lambda n: (0, 0, 0))
        scratch = [pltpu.VMEM((Mout + 2 * Wp, 3 * Cin_f), compute_dtype)]
    else:
        wt = wt.reshape(9, Cin_f, Cp)
        w_spec = pl.BlockSpec((9, Cin_f, Cp), lambda n: (0, 0, 0))
        scratch = []

    # ---- pass 1: conv (materialized once) + per-channel batch statistics -------------
    kern1 = functools.partial(_conv_stats_kernel, Wp=Wp, W=W, Mout=Mout, grouped=grouped)
    y, stats = pl.pallas_call(
        kern1,
        grid=(N,),
        in_specs=[pl.BlockSpec((1, M2, Cin_f), lambda n: (n, 0, 0)), w_spec],
        out_specs=[pl.BlockSpec((1, Mout, Cp), lambda n: (n, 0, 0)),
                   pl.BlockSpec((2, Cp), lambda n: (0, 0))],          # resident accumulator
        out_shape=(jax.ShapeDtypeStruct((N, Mout, Cp), compute_dtype),
                   jax.ShapeDtypeStruct((2, Cp), jnp.float32)),
        scratch_shapes=scratch,
        compiler_params=pltpu.CompilerParams(
            dimension_semantics=("arbitrary",),
            vmem_limit_bytes=vmem_limit),
    )(x_frame, wt)

    # Fold BN into a per-channel scale/shift (tiny Cout-length math, plain JAX).
    cnt = float(N * H * W)
    mean = stats[0] / cnt
    var = jnp.maximum(stats[1] / cnt - mean * mean, 0.0)
    g = jnp.pad(gamma.astype(jnp.float32), (0, Cp - Cout))
    b = jnp.pad(beta.astype(jnp.float32), (0, Cp - Cout))
    scale = g * lax.rsqrt(var + BN_EPS)
    shift = b - mean * scale

    # ---- pass 2: elementwise scale/shift/ReLU -> next conv's padded frame -------------
    kern2 = functools.partial(_bn_relu_frame_kernel, Wp=Wp, W=W, Mout=Mout)
    frame = pl.pallas_call(
        kern2,
        grid=(N,),
        in_specs=[pl.BlockSpec((1, Mout, Cp), lambda n: (n, 0, 0)),
                  pl.BlockSpec((1, Cp), lambda n: (0, 0)),
                  pl.BlockSpec((1, Cp), lambda n: (0, 0))],
        out_specs=pl.BlockSpec((1, M2, Cp), lambda n: (n, 0, 0)),
        out_shape=jax.ShapeDtypeStruct((N, M2, Cp), compute_dtype),
        compiler_params=pltpu.CompilerParams(
            dimension_semantics=("parallel",),
            vmem_limit_bytes=vmem_limit),
    )(y, scale.reshape(1, Cp), shift.reshape(1, Cp))
    return frame


# ------------------------------- Down module -----------------------------------
def init_down_params(key, in_ch, out_ch):
    k1, k2, k3, k4 = jax.random.split(key, 4)

    def conv_init(kw, kb, cin, cout):
        fan_in = cin * 9
        bound = 1.0 / (fan_in ** 0.5)
        w = jax.random.uniform(kw, (cout, cin, 3, 3), jnp.float32, -bound, bound)
        b = jax.random.uniform(kb, (cout,), jnp.float32, -bound, bound)
        return w, b

    w1, b1 = conv_init(k1, k2, in_ch, out_ch)
    w2, b2 = conv_init(k3, k4, out_ch, out_ch)
    # b1/b2 are kept for PyTorch-parity (Conv2d has bias) but only the reference uses them:
    # the kernel path omits the bias exactly (cancelled by training-mode BN).
    return dict(
        w1=w1, b1=b1, g1=jnp.ones((out_ch,), jnp.float32), be1=jnp.zeros((out_ch,), jnp.float32),
        w2=w2, b2=b2, g2=jnp.ones((out_ch,), jnp.float32), be2=jnp.zeros((out_ch,), jnp.float32),
    )


def down_forward(params, x_nchw, compute_dtype=jnp.bfloat16):
    """Down: MaxPool2d(2,2) -> DoubleConv.  NCHW in / NCHW out (PyTorch semantics)."""
    vmem_limit = _conv_vmem_limit()
    N, Cin, _, _ = x_nchw.shape

    # Cast BEFORE the transpose and pool: both are HBM-bound, max is exact in bf16.
    x = jnp.transpose(x_nchw.astype(compute_dtype), (0, 2, 3, 1))   # NCHW -> NHWC
    x = maxpool2x2(x, vmem_limit=vmem_limit)
    _, H2, W2, _ = x.shape
    Wp = W2 + 2
    M2 = (H2 + 3) * Wp

    # Pool output -> canonical padded frame (the only activation pad in the module).
    # TODO(synk): fuse this pad into the pool kernel's output frame.
    frame = jnp.pad(x, ((0, 0), (1, 2), (1, 1), (0, 0))).reshape(N, M2, Cin)

    frame = conv3x3_bn_relu_frame(frame, H2, W2, params["w1"], params["g1"], params["be1"],
                                  compute_dtype=compute_dtype, vmem_limit=vmem_limit)
    frame = conv3x3_bn_relu_frame(frame, H2, W2, params["w2"], params["g2"], params["be2"],
                                  compute_dtype=compute_dtype, vmem_limit=vmem_limit)

    # Strip Wp/Cp padding exactly once, at the module boundary.
    Cout = params["w2"].shape[0]
    y = frame.reshape(N, H2 + 3, Wp, -1)[:, 1:H2 + 1, 1:W2 + 1, :Cout]
    return jnp.transpose(y.astype(jnp.float32), (0, 3, 1, 2))       # NHWC -> NCHW


# ------------------------------ pure-JAX reference ------------------------------
def _ref_conv_bn_relu(x, w, b, g, beta):
    y = lax.conv_general_dilated(x, w, (1, 1), [(1, 1), (1, 1)],
                                 dimension_numbers=("NCHW", "OIHW", "NCHW"))
    y = y + b[None, :, None, None]
    mean = jnp.mean(y, axis=(0, 2, 3), keepdims=True)
    var = jnp.mean((y - mean) ** 2, axis=(0, 2, 3), keepdims=True)
    y = (y - mean) / jnp.sqrt(var + BN_EPS)
    y = y * g[None, :, None, None] + beta[None, :, None, None]
    return jnp.maximum(y, 0.0)


def down_ref(params, x):
    N, C, H, W = x.shape
    xp = x.reshape(N, C, H // 2, 2, W // 2, 2).max(axis=(3, 5))
    y = _ref_conv_bn_relu(xp, params["w1"], params["b1"], params["g1"], params["be1"])
    y = _ref_conv_bn_relu(y, params["w2"], params["b2"], params["g2"], params["be2"])
    return y


if __name__ == "__main__":
    key = jax.random.PRNGKey(0)
    kx, kp = jax.random.split(key)
    in_ch, out_ch = 4, 8
    x = jax.random.normal(kx, (2, in_ch, 16, 16), jnp.float32)
    params = init_down_params(kp, in_ch, out_ch)

    ref = down_ref(params, x)

    # f32 compute path: tight correctness gate vs. the PyTorch-equivalent reference.
    # (conv1 exercises the 9-tap path, conv2 the kw-grouped path since its frame Cin = 128)
    fwd_f32 = jax.jit(functools.partial(down_forward, compute_dtype=jnp.float32))
    out32 = jax.block_until_ready(fwd_f32(params, x))
    assert out32.shape == (2, out_ch, 8, 8), out32.shape
    err32 = float(jnp.max(jnp.abs(out32 - ref)))
    assert err32 < 1e-3, f"f32 path max abs err {err32}"

    # bf16 MXU path (performance configuration): loose sanity bound vs the f32 reference.
    fwd_bf16 = jax.jit(functools.partial(down_forward, compute_dtype=jnp.bfloat16))
    out16 = jax.block_until_ready(fwd_bf16(params, x))
    assert out16.shape == (2, out_ch, 8, 8), out16.shape
    err16 = float(jnp.max(jnp.abs(out16 - ref)))
    assert err16 < 0.25, f"bf16 path max abs err {err16}"

    print("KERNEL_OK")
</pallas_src>

<mosaic_0001>
module attributes {stable_mosaic.version = 11 : i64} {
  func.func @_maxpool2x2_kernel(%arg0: i32, %arg1: i32, %arg2: memref<1x16x8x8xf32, #tpu.memory_space<vmem>>, %arg3: memref<1x8x8x4xf32, #tpu.memory_space<vmem>>) attributes {dimension_semantics = [#tpu.dimension_semantics<parallel>, #tpu.dimension_semantics<parallel>], iteration_bounds = array<i64: 2, 1>, scalar_prefetch = 0 : i64, scratch_operands = 0 : i64, tpu.core_type = #tpu.core_type<tc>, window_params = [{transform_indices = @transform_0, window_bounds = array<i64: 1, 16, 8, 8>}, {transform_indices = @transform_1, window_bounds = array<i64: 1, 8, 8, 4>}]} {
    %c0 = arith.constant 0 : index
    %c0_0 = arith.constant 0 : index
    %c0_1 = arith.constant 0 : index
    %c0_2 = arith.constant 0 : index
    %0 = vector.load %arg2[%c0, %c0_0, %c0_1, %c0_2] : memref<1x16x8x8xf32, #tpu.memory_space<vmem>>, vector<1x16x8x8xf32>
    %1 = vector.shape_cast %0 : vector<1x16x8x8xf32> to vector<16x8x8xf32>
    %2 = vector.shape_cast %1 : vector<16x8x8xf32> to vector<8x2x8x8xf32>
    %3 = vector.extract_strided_slice %2 {offsets = [0, 0, 0, 0], sizes = [8, 1, 8, 8], strides = [1, 1, 1, 1]} : vector<8x2x8x8xf32> to vector<8x1x8x8xf32>
    %4 = vector.shape_cast %3 : vector<8x1x8x8xf32> to vector<8x8x8xf32>
    %5 = vector.extract_strided_slice %2 {offsets = [0, 1, 0, 0], sizes = [8, 1, 8, 8], strides = [1, 1, 1, 1]} : vector<8x2x8x8xf32> to vector<8x1x8x8xf32>
    %6 = vector.shape_cast %5 : vector<8x1x8x8xf32> to vector<8x8x8xf32>
    %7 = arith.maximumf %4, %6 : vector<8x8x8xf32>
    %8 = vector.extract_strided_slice %7 {offsets = [0, 0, 0], sizes = [8, 8, 4], strides = [1, 1, 1]} : vector<8x8x8xf32> to vector<8x8x4xf32>
    %9 = vector.extract_strided_slice %7 {offsets = [0, 0, 4], sizes = [8, 8, 4], strides = [1, 1, 1]} : vector<8x8x8xf32> to vector<8x8x4xf32>
    %10 = arith.maximumf %8, %9 : vector<8x8x4xf32>
    %c0_3 = arith.constant 0 : index
    %c0_4 = arith.constant 0 : index
    %c0_5 = arith.constant 0 : index
    %c0_6 = arith.constant 0 : index
    %11 = vector.load %arg3[%c0_3, %c0_4, %c0_5, %c0_6] : memref<1x8x8x4xf32, #tpu.memory_space<vmem>>, vector<1x8x8x4xf32>
    %12 = vector.shape_cast %11 : vector<1x8x8x4xf32> to vector<8x8x4xf32>
    %13 = vector.shape_cast %10 : vector<8x8x4xf32> to vector<1x8x8x4xf32>
    tpu.vector_store %arg3[%c0_3, %c0_4, %c0_5, %c0_6], %13 {strides = array<i32>} : memref<1x8x8x4xf32, #tpu.memory_space<vmem>>, vector<1x8x8x4xf32>,
    return
  }
  func.func @transform_0(%arg0: i32, %arg1: i32) -> (i32, i32, i32, i32) {
    %c0_i32 = arith.constant 0 : i32
    %c0_i32_0 = arith.constant 0 : i32
    %c0_i32_1 = arith.constant 0 : i32
    return %arg0, %arg1, %c0_i32, %c0_i32_0 : i32, i32, i32, i32
  }
  func.func @transform_1(%arg0: i32, %arg1: i32) -> (i32, i32, i32, i32) {
    %c0_i32 = arith.constant 0 : i32
    %c0_i32_0 = arith.constant 0 : i32
    %c0_i32_1 = arith.constant 0 : i32
    return %arg0, %arg1, %c0_i32, %c0_i32_0 : i32, i32, i32, i32
  }
}

module attributes {stable_mosaic.version = 11 : i64} {
  func.func @_conv_stats_kernel(%arg0: i32, %arg1: memref<1x110x4xf32, #tpu.memory_space<vmem>>, %arg2: memref<9x4x128xf32, #tpu.memory_space<vmem>>, %arg3: memref<1x80x128xf32, #tpu.memory_space<vmem>>, %arg4: memref<2x128xf32, #tpu.memory_space<vmem>>) attributes {dimension_semantics = [#tpu.dimension_semantics<arbitrary>], iteration_bounds = array<i64: 2>, scalar_prefetch = 0 : i64, scratch_operands = 0 : i64, tpu.core_type = #tpu.core_type<tc>, window_params = [{transform_indices = @transform_0, window_bounds = array<i64: 1, 110, 4>}, {pipeline_mode = #tpu.pipeline_mode<synchronous>, transform_indices = @transform_1, window_bounds = array<i64: 9, 4, 128>}, {transform_indices = @transform_2, window_bounds = array<i64: 1, 80, 128>}, {pipeline_mode = #tpu.pipeline_mode<synchronous>, transform_indices = @transform_3, window_bounds = array<i64: 2, 128>}]} {
    %c0_i32 = arith.constant 0 : i32
    %0 = arith.cmpi eq, %arg0, %c0_i32 : i32
    %1 = arith.extui %0 : i1 to i32
    %c0_i32_0 = arith.constant 0 : i32
    %2 = arith.cmpi ne, %1, %c0_i32_0 : i32
    scf.if %2 {
      %cst_63 = arith.constant 0.000000e+00 : f32
      %91 = vector.broadcast %cst_63 : f32 to vector<2x128xf32>
      %c0_64 = arith.constant 0 : index
      %c0_65 = arith.constant 0 : index
      %92 = vector.load %arg4[%c0_64, %c0_65] : memref<2x128xf32, #tpu.memory_space<vmem>>, vector<2x128xf32>
      tpu.vector_store %arg4[%c0_64, %c0_65], %91 {strides = array<i32>} : memref<2x128xf32, #tpu.memory_space<vmem>>, vector<2x128xf32>,
    } else {
    }
    %cst = arith.constant 0.000000e+00 : f32
    %3 = vector.broadcast %cst : f32 to vector<80x128xf32>
    %c0 = arith.constant 0 : index
    %c0_1 = arith.constant 0 : index
    %c0_2 = arith.constant 0 : index
    %4 = vector.load %arg1[%c0, %c0_1, %c0_2] : memref<1x110x4xf32, #tpu.memory_space<vmem>>, vector<1x80x4xf32>
    %5 = vector.shape_cast %4 : vector<1x80x4xf32> to vector<80x4xf32>
    %c0_3 = arith.constant 0 : index
    %c0_4 = arith.constant 0 : index
    %c0_5 = arith.constant 0 : index
    %6 = vector.load %arg2[%c0_3, %c0_4, %c0_5] : memref<9x4x128xf32, #tpu.memory_space<vmem>>, vector<1x4x128xf32>
    %7 = vector.shape_cast %6 : vector<1x4x128xf32> to vector<4x128xf32>
    %cst_6 = arith.constant dense<0.000000e+00> : vector<80x128xf32>
    %8 = tpu.matmul %5, %7, %cst_6 {dimension_numbers = #tpu.dot_dimension_numbers<[1], [0], [0], [1], [0, 0, 1, 1], [], []>} : vector<80x4xf32>, vector<4x128xf32>, vector<80x128xf32> -> vector<80x128xf32>
    %9 = arith.addf %3, %8 : vector<80x128xf32>
    %c0_7 = arith.constant 0 : index
    %c1 = arith.constant 1 : index
    %c0_8 = arith.constant 0 : index
    %10 = vector.load %arg1[%c0_7, %c1, %c0_8] : memref<1x110x4xf32, #tpu.memory_space<vmem>>, vector<1x80x4xf32>
    %11 = vector.shape_cast %10 : vector<1x80x4xf32> to vector<80x4xf32>
    %c1_9 = arith.constant 1 : index
    %c0_10 = arith.constant 0 : index
    %c0_11 = arith.constant 0 : index
    %12 = vector.load %arg2[%c1_9, %c0_10, %c0_11] : memref<9x4x128xf32, #tpu.memory_space<vmem>>, vector<1x4x128xf32>
    %13 = vector.shape_cast %12 : vector<1x4x128xf32> to vector<4x128xf32>
    %cst_12 = arith.constant dense<0.000000e+00> : vector<80x128xf32>
    %14 = tpu.matmul %11, %13, %cst_12 {dimension_numbers = #tpu.dot_dimension_numbers<[1], [0], [0], [1], [0, 0, 1, 1], [], []>} : vector<80x4xf32>, vector<4x128xf32>, vector<80x128xf32> -> vector<80x128xf32>
    %15 = arith.addf %9, %14 : vector<80x128xf32>
    %c0_13 = arith.constant 0 : index
    %c2 = arith.constant 2 : index
    %c0_14 = arith.constant 0 : index
    %16 = vector.load %arg1[%c0_13, %c2, %c0_14] : memref<1x110x4xf32, #tpu.memory_space<vmem>>, vector<1x80x4xf32>
    %17 = vector.shape_cast %16 : vector<1x80x4xf32> to vector<80x4xf32>
    %c2_15 = arith.constant 2 : index
    %c0_16 = arith.constant 0 : index
    %c0_17 = arith.constant 0 : index
    %18 = vector.load %arg2[%c2_15, %c0_16, %c0_17] : memref<9x4x128xf32, #tpu.memory_space<vmem>>, vector<1x4x128xf32>
    %19 = vector.shape_cast %18 : vector<1x4x128xf32> to vector<4x128xf32>
    %cst_18 = arith.constant dense<0.000000e+00> : vector<80x128xf32>
    %20 = tpu.matmul %17, %19, %cst_18 {dimension_numbers = #tpu.dot_dimension_numbers<[1], [0], [0], [1], [0, 0, 1, 1], [], []>} : vector<80x4xf32>, vector<4x128xf32>, vector<80x128xf32> -> vector<80x128xf32>
    %21 = arith.addf %15, %20 : vector<80x128xf32>
    %c0_19 = arith.constant 0 : index
    %c10 = arith.constant 10 : index
    %c0_20 = arith.constant 0 : index
    %22 = vector.load %arg1[%c0_19, %c10, %c0_20] : memref<1x110x4xf32, #tpu.memory_space<vmem>>, vector<1x80x4xf32>
    %23 = vector.shape_cast %22 : vector<1x80x4xf32> to vector<80x4xf32>
    %c3 = arith.constant 3 : index
    %c0_21 = arith.constant 0 : index
    %c0_22 = arith.constant 0 : index
    %24 = vector.load %arg2[%c3, %c0_21, %c0_22] : memref<9x4x128xf32, #tpu.memory_space<vmem>>, vector<1x4x128xf32>
    %25 = vector.shape_cast %24 : vector<1x4x128xf32> to vector<4x128xf32>
    %cst_23 = arith.constant dense<0.000000e+00> : vector<80x128xf32>
    %26 = tpu.matmul %23, %25, %cst_23 {dimension_numbers = #tpu.dot_dimension_numbers<[1], [0], [0], [1], [0, 0, 1, 1], [], []>} : vector<80x4xf32>, vector<4x128xf32>, vector<80x128xf32> -> vector<80x128xf32>
    %27 = arith.addf %21, %26 : vector<80x128xf32>
    %c0_24 = arith.constant 0 : index
    %c11 = arith.constant 11 : index
    %c0_25 = arith.constant 0 : index
    %28 = vector.load %arg1[%c0_24, %c11, %c0_25] : memref<1x110x4xf32, #tpu.memory_space<vmem>>, vector<1x80x4xf32>
    %29 = vector.shape_cast %28 : vector<1x80x4xf32> to vector<80x4xf32>
    %c4 = arith.constant 4 : index
    %c0_26 = arith.constant 0 : index
    %c0_27 = arith.constant 0 : index
    %30 = vector.load %arg2[%c4, %c0_26, %c0_27] : memref<9x4x128xf32, #tpu.memory_space<vmem>>, vector<1x4x128xf32>
    %31 = vector.shape_cast %30 : vector<1x4x128xf32> to vector<4x128xf32>
    %cst_28 = arith.constant dense<0.000000e+00> : vector<80x128xf32>
    %32 = tpu.matmul %29, %31, %cst_28 {dimension_numbers = #tpu.dot_dimension_numbers<[1], [0], [0], [1], [0, 0, 1, 1], [], []>} : vector<80x4xf32>, vector<4x128xf32>, vector<80x128xf32> -> vector<80x128xf32>
    %33 = arith.addf %27, %32 : vector<80x128xf32>
    %c0_29 = arith.constant 0 : index
    %c12 = arith.constant 12 : index
    %c0_30 = arith.constant 0 : index
    %34 = vector.load %arg1[%c0_29, %c12, %c0_30] : memref<1x110x4xf32, #tpu.memory_space<vmem>>, vector<1x80x4xf32>
    %35 = vector.shape_cast %34 : vector<1x80x4xf32> to vector<80x4xf32>
    %c5 = arith.constant 5 : index
    %c0_31 = arith.constant 0 : index
    %c0_32 = arith.constant 0 : index
    %36 = vector.load %arg2[%c5, %c0_31, %c0_32] : memref<9x4x128xf32, #tpu.memory_space<vmem>>, vector<1x4x128xf32>
    %37 = vector.shape_cast %36 : vector<1x4x128xf32> to vector<4x128xf32>
    %cst_33 = arith.constant dense<0.000000e+00> : vector<80x128xf32>
    %38 = tpu.matmul %35, %37, %cst_33 {dimension_numbers = #tpu.dot_dimension_numbers<[1], [0], [0], [1], [0, 0, 1, 1], [], []>} : vector<80x4xf32>, vector<4x128xf32>, vector<80x128xf32> -> vector<80x128xf32>
    %39 = arith.addf %33, %38 : vector<80x128xf32>
    %c0_34 = arith.constant 0 : index
    %c20 = arith.constant 20 : index
    %c0_35 = arith.constant 0 : index
    %40 = vector.load %arg1[%c0_34, %c20, %c0_35] : memref<1x110x4xf32, #tpu.memory_space<vmem>>, vector<1x80x4xf32>
    %41 = vector.shape_cast %40 : vector<1x80x4xf32> to vector<80x4xf32>
    %c6 = arith.constant 6 : index
    %c0_36 = arith.constant 0 : index
    %c0_37 = arith.constant 0 : index
    %42 = vector.load %arg2[%c6, %c0_36, %c0_37] : memref<9x4x128xf32, #tpu.memory_space<vmem>>, vector<1x4x128xf32>
    %43 = vector.shape_cast %42 : vector<1x4x128xf32> to vector<4x128xf32>
    %cst_38 = arith.constant dense<0.000000e+00> : vector<80x128xf32>
    %44 = tpu.matmul %41, %43, %cst_38 {dimension_numbers = #tpu.dot_dimension_numbers<[1], [0], [0], [1], [0, 0, 1, 1], [], []>} : vector<80x4xf32>, vector<4x128xf32>, vector<80x128xf32> -> vector<80x128xf32>
    %45 = arith.addf %39, %44 : vector<80x128xf32>
    %c0_39 = arith.constant 0 : index
    %c21 = arith.constant 21 : index
    %c0_40 = arith.constant 0 : index
    %46 = vector.load %arg1[%c0_39, %c21, %c0_40] : memref<1x110x4xf32, #tpu.memory_space<vmem>>, vector<1x80x4xf32>
    %47 = vector.shape_cast %46 : vector<1x80x4xf32> to vector<80x4xf32>
    %c7 = arith.constant 7 : index
    %c0_41 = arith.constant 0 : index
    %c0_42 = arith.constant 0 : index
    %48 = vector.load %arg2[%c7, %c0_41, %c0_42] : memref<9x4x128xf32, #tpu.memory_space<vmem>>, vector<1x4x128xf32>
    %49 = vector.shape_cast %48 : vector<1x4x128xf32> to vector<4x128xf32>
    %cst_43 = arith.constant dense<0.000000e+00> : vector<80x128xf32>
    %50 = tpu.matmul %47, %49, %cst_43 {dimension_numbers = #tpu.dot_dimension_numbers<[1], [0], [0], [1], [0, 0, 1, 1], [], []>} : vector<80x4xf32>, vector<4x128xf32>, vector<80x128xf32> -> vector<80x128xf32>
    %51 = arith.addf %45, %50 : vector<80x128xf32>
    %c0_44 = arith.constant 0 : index
    %c22 = arith.constant 22 : index
    %c0_45 = arith.constant 0 : index
    %52 = vector.load %arg1[%c0_44, %c22, %c0_45] : memref<1x110x4xf32, #tpu.memory_space<vmem>>, vector<1x80x4xf32>
    %53 = vector.shape_cast %52 : vector<1x80x4xf32> to vector<80x4xf32>
    %c8 = arith.constant 8 : index
    %c0_46 = arith.constant 0 : index
    %c0_47 = arith.constant 0 : index
    %54 = vector.load %arg2[%c8, %c0_46, %c0_47] : memref<9x4x128xf32, #tpu.memory_space<vmem>>, vector<1x4x128xf32>
    %55 = vector.shape_cast %54 : vector<1x4x128xf32> to vector<4x128xf32>
    %cst_48 = arith.constant dense<0.000000e+00> : vector<80x128xf32>
    %56 = tpu.matmul %53, %55, %cst_48 {dimension_numbers = #tpu.dot_dimension_numbers<[1], [0], [0], [1], [0, 0, 1, 1], [], []>} : vector<80x4xf32>, vector<4x128xf32>, vector<80x128xf32> -> vector<80x128xf32>
    %57 = arith.addf %51, %56 : vector<80x128xf32>
    %58 = tpu.iota {dimensions = array<i32: 0>} : vector<80x128xi32>
    %c10_i32 = arith.constant 10 : i32
    %c0_i32_49 = arith.constant 0 : i32
    %59 = arith.cmpi eq, %c10_i32, %c0_i32_49 : i32
    %c1_i32 = arith.constant 1 : i32
    %60 = arith.select %59, %c1_i32, %c10_i32 : i32
    %61 = vector.broadcast %60 : i32 to vector<80x128xi32>
    %62 = arith.remsi %58, %61 : vector<80x128xi32>
    %c0_i32_50 = arith.constant 0 : i32
    %63 = vector.broadcast %c0_i32_50 : i32 to vector<80x128xi32>
    %64 = arith.cmpi ne, %62, %63 : vector<80x128xi32>
    %c0_i32_51 = arith.constant 0 : i32
    %65 = vector.broadcast %c0_i32_51 : i32 to vector<80x128xi32>
    %66 = arith.cmpi slt, %62, %65 : vector<80x128xi32>
    %c0_i32_52 = arith.constant 0 : i32
    %67 = arith.cmpi slt, %60, %c0_i32_52 : i32
    %68 = vector.broadcast %67 : i1 to vector<80x128xi1>
    %69 = vector.broadcast %68 : vector<80x128xi1> to vector<80x128xi1>
    %70 = arith.xori %66, %69 : vector<80x128xi1>
    %71 = arith.andi %70, %64 : vector<80x128xi1>
    %72 = vector.broadcast %60 : i32 to vector<80x128xi32>
    %73 = arith.addi %62, %72 : vector<80x128xi32>
    %74 = arith.select %71, %73, %62 : vector<80x128xi1>, vector<80x128xi32>
    %c8_i32 = arith.constant 8 : i32
    %75 = vector.broadcast %c8_i32 : i32 to vector<80x128xi32>
    %76 = arith.cmpi slt, %74, %75 : vector<80x128xi32>
    %cst_53 = arith.constant 0.000000e+00 : f32
    %77 = vector.broadcast %cst_53 : f32 to vector<80x128xf32>
    %78 = arith.select %76, %57, %77 : vector<80x128xi1>, vector<80x128xf32>
    %cst_54 = arith.constant dense<0.000000e+00> : vector<128xf32>
    %79 = vector.multi_reduction <add>, %78, %cst_54 [0] : vector<80x128xf32> to vector<128xf32>
    %80 = vector.shape_cast %79 : vector<128xf32> to vector<1x128xf32>
    %81 = arith.mulf %78, %78 : vector<80x128xf32>
    %cst_55 = arith.constant dense<0.000000e+00> : vector<128xf32>
    %82 = vector.multi_reduction <add>, %81, %cst_55 [0] : vector<80x128xf32> to vector<128xf32>
    %83 = vector.shape_cast %82 : vector<128xf32> to vector<1x128xf32>
    %c0_56 = arith.constant 0 : index
    %c0_57 = arith.constant 0 : index
    %84 = vector.load %arg4[%c0_56, %c0_57] : memref<2x128xf32, #tpu.memory_space<vmem>>, vector<2x128xf32>
    %85 = tpu.concatenate %80, %83 in 0 : vector<1x128xf32>, vector<1x128xf32> -> vector<2x128xf32>
    %86 = arith.addf %84, %85 : vector<2x128xf32>
    %c0_58 = arith.constant 0 : index
    %c0_59 = arith.constant 0 : index
    %87 = vector.load %arg4[%c0_58, %c0_59] : memref<2x128xf32, #tpu.memory_space<vmem>>, vector<2x128xf32>
    tpu.vector_store %arg4[%c0_58, %c0_59], %86 {strides = array<i32>} : memref<2x128xf32, #tpu.memory_space<vmem>>, vector<2x128xf32>,
    %c0_60 = arith.constant 0 : index
    %c0_61 = arith.constant 0 : index
    %c0_62 = arith.constant 0 : index
    %88 = vector.load %arg3[%c0_60, %c0_61, %c0_62] : memref<1x80x128xf32, #tpu.memory_space<vmem>>, vector<1x80x128xf32>
    %89 = vector.shape_cast %88 : vector<1x80x128xf32> to vector<80x128xf32>
    %90 = vector.shape_cast %57 : vector<80x128xf32> to vector<1x80x128xf32>
    tpu.vector_store %arg3[%c0_60, %c0_61, %c0_62], %90 {strides = array<i32>} : memref<1x80x128xf32, #tpu.memory_space<vmem>>, vector<1x80x128xf32>,
    return
  }
  func.func @transform_0(%arg0: i32) -> (i32, i32, i32) {
    %c0_i32 = arith.constant 0 : i32
    %c0_i32_0 = arith.constant 0 : i32
    %c0_i32_1 = arith.constant 0 : i32
    return %arg0, %c0_i32, %c0_i32_0 : i32, i32, i32
  }
  func.func @transform_1(%arg0: i32) -> (i32, i32, i32) {
    %c0_i32 = arith.constant 0 : i32
    %c0_i32_0 = arith.constant 0 : i32
    %c0_i32_1 = arith.constant 0 : i32
    %c0_i32_2 = arith.constant 0 : i32
    return %c0_i32, %c0_i32_0, %c0_i32_1 : i32, i32, i32
  }
  func.func @transform_2(%arg0: i32) -> (i32, i32, i32) {
    %c0_i32 = arith.constant 0 : i32
    %c0_i32_0 = arith.constant 0 : i32
    %c0_i32_1 = arith.constant 0 : i32
    return %arg0, %c0_i32, %c0_i32_0 : i32, i32, i32
  }
  func.func @transform_3(%arg0: i32) -> (i32, i32) {
    %c0_i32 = arith.constant 0 : i32
    %c0_i32_0 = arith.constant 0 : i32
    %c0_i32_1 = arith.constant 0 : i32
    return %c0_i32, %c0_i32_0 : i32, i32
  }
}

module attributes {stable_mosaic.version = 11 : i64} {
  func.func @_bn_relu_frame_kernel(%arg0: i32, %arg1: memref<1x80x128xf32, #tpu.memory_space<vmem>>, %arg2: memref<1x128xf32, #tpu.memory_space<vmem>>, %arg3: memref<1x128xf32, #tpu.memory_space<vmem>>, %arg4: memref<1x110x128xf32, #tpu.memory_space<vmem>>) attributes {dimension_semantics = [#tpu.dimension_semantics<parallel>], iteration_bounds = array<i64: 2>, scalar_prefetch = 0 : i64, scratch_operands = 0 : i64, tpu.core_type = #tpu.core_type<tc>, window_params = [{transform_indices = @transform_0, window_bounds = array<i64: 1, 80, 128>}, {pipeline_mode = #tpu.pipeline_mode<synchronous>, transform_indices = @transform_1, window_bounds = array<i64: 1, 128>}, {pipeline_mode = #tpu.pipeline_mode<synchronous>, transform_indices = @transform_2, window_bounds = array<i64: 1, 128>}, {transform_indices = @transform_3, window_bounds = array<i64: 1, 110, 128>}]} {
    %c0 = arith.constant 0 : index
    %c0_0 = arith.constant 0 : index
    %c0_1 = arith.constant 0 : index
    %0 = vector.load %arg1[%c0, %c0_0, %c0_1] : memref<1x80x128xf32, #tpu.memory_space<vmem>>, vector<1x80x128xf32>
    %1 = vector.shape_cast %0 : vector<1x80x128xf32> to vector<80x128xf32>
    %c0_2 = arith.constant 0 : index
    %c0_3 = arith.constant 0 : index
    %2 = vector.load %arg2[%c0_2, %c0_3] : memref<1x128xf32, #tpu.memory_space<vmem>>, vector<1x128xf32>
    %3 = vector.broadcast %2 : vector<1x128xf32> to vector<80x128xf32>
    %4 = arith.mulf %1, %3 : vector<80x128xf32>
    %c0_4 = arith.constant 0 : index
    %c0_5 = arith.constant 0 : index
    %5 = vector.load %arg3[%c0_4, %c0_5] : memref<1x128xf32, #tpu.memory_space<vmem>>, vector<1x128xf32>
    %6 = vector.broadcast %5 : vector<1x128xf32> to vector<80x128xf32>
    %7 = arith.addf %4, %6 : vector<80x128xf32>
    %cst = arith.constant 0.000000e+00 : f32
    %8 = vector.broadcast %cst : f32 to vector<80x128xf32>
    %9 = arith.maximumf %7, %8 : vector<80x128xf32>
    %10 = tpu.iota {dimensions = array<i32: 0>} : vector<80x128xi32>
    %c10_i32 = arith.constant 10 : i32
    %c0_i32 = arith.constant 0 : i32
    %11 = arith.cmpi eq, %c10_i32, %c0_i32 : i32
    %c1_i32 = arith.constant 1 : i32
    %12 = arith.select %11, %c1_i32, %c10_i32 : i32
    %13 = vector.broadcast %12 : i32 to vector<80x128xi32>
    %14 = arith.remsi %10, %13 : vector<80x128xi32>
    %c0_i32_6 = arith.constant 0 : i32
    %15 = vector.broadcast %c0_i32_6 : i32 to vector<80x128xi32>
    %16 = arith.cmpi ne, %14, %15 : vector<80x128xi32>
    %c0_i32_7 = arith.constant 0 : i32
    %17 = vector.broadcast %c0_i32_7 : i32 to vector<80x128xi32>
    %18 = arith.cmpi slt, %14, %17 : vector<80x128xi32>
    %c0_i32_8 = arith.constant 0 : i32
    %19 = arith.cmpi slt, %12, %c0_i32_8 : i32
    %20 = vector.broadcast %19 : i1 to vector<80x128xi1>
    %21 = vector.broadcast %20 : vector<80x128xi1> to vector<80x128xi1>
    %22 = arith.xori %18, %21 : vector<80x128xi1>
    %23 = arith.andi %22, %16 : vector<80x128xi1>
    %24 = vector.broadcast %12 : i32 to vector<80x128xi32>
    %25 = arith.addi %14, %24 : vector<80x128xi32>
    %26 = arith.select %23, %25, %14 : vector<80x128xi1>, vector<80x128xi32>
    %c8_i32 = arith.constant 8 : i32
    %27 = vector.broadcast %c8_i32 : i32 to vector<80x128xi32>
    %28 = arith.cmpi slt, %26, %27 : vector<80x128xi32>
    %cst_9 = arith.constant 0.000000e+00 : f32
    %29 = vector.broadcast %cst_9 : f32 to vector<80x128xf32>
    %30 = arith.select %28, %9, %29 : vector<80x128xi1>, vector<80x128xf32>
    %cst_10 = arith.constant 0.000000e+00 : f32
    %31 = vector.broadcast %cst_10 : f32 to vector<11x128xf32>
    %c0_11 = arith.constant 0 : index
    %c0_12 = arith.constant 0 : index
    %c0_13 = arith.constant 0 : index
    %32 = vector.load %arg4[%c0_11, %c0_12, %c0_13] : memref<1x110x128xf32, #tpu.memory_space<vmem>>, vector<1x11x128xf32>
    %33 = vector.shape_cast %32 : vector<1x11x128xf32> to vector<11x128xf32>
    %34 = vector.shape_cast %31 : vector<11x128xf32> to vector<1x11x128xf32>
    tpu.vector_store %arg4[%c0_11, %c0_12, %c0_13], %34 {strides = array<i32>} : memref<1x110x128xf32, #tpu.memory_space<vmem>>, vector<1x11x128xf32>,
    %c0_14 = arith.constant 0 : index
    %c11 = arith.constant 11 : index
    %c0_15 = arith.constant 0 : index
    %35 = vector.load %arg4[%c0_14, %c11, %c0_15] : memref<1x110x128xf32, #tpu.memory_space<vmem>>, vector<1x80x128xf32>
    %36 = vector.shape_cast %35 : vector<1x80x128xf32> to vector<80x128xf32>
    %37 = vector.shape_cast %30 : vector<80x128xf32> to vector<1x80x128xf32>
    tpu.vector_store %arg4[%c0_14, %c11, %c0_15], %37 {strides = array<i32>} : memref<1x110x128xf32, #tpu.memory_space<vmem>>, vector<1x80x128xf32>,
    %cst_16 = arith.constant 0.000000e+00 : f32
    %38 = vector.broadcast %cst_16 : f32 to vector<19x128xf32>
    %c0_17 = arith.constant 0 : index
    %c91 = arith.constant 91 : index
    %c0_18 = arith.constant 0 : index
    %39 = vector.load %arg4[%c0_17, %c91, %c0_18] : memref<1x110x128xf32, #tpu.memory_space<vmem>>, vector<1x19x128xf32>
    %40 = vector.shape_cast %39 : vector<1x19x128xf32> to vector<19x128xf32>
    %41 = vector.shape_cast %38 : vector<19x128xf32> to vector<1x19x128xf32>
    tpu.vector_store %arg4[%c0_17, %c91, %c0_18], %41 {strides = array<i32>} : memref<1x110x128xf32, #tpu.memory_space<vmem>>, vector<1x19x128xf32>,
    return
  }
  func.func @transform_0(%arg0: i32) -> (i32, i32, i32) {
    %c0_i32 = arith.constant 0 : i32
    %c0_i32_0 = arith.constant 0 : i32
    %c0_i32_1 = arith.constant 0 : i32
    return %arg0, %c0_i32, %c0_i32_0 : i32, i32, i32
  }
  func.func @transform_1(%arg0: i32) -> (i32, i32) {
    %c0_i32 = arith.constant 0 : i32
    %c0_i32_0 = arith.constant 0 : i32
    %c0_i32_1 = arith.constant 0 : i32
    return %c0_i32, %c0_i32_0 : i32, i32
  }
  func.func @transform_2(%arg0: i32) -> (i32, i32) {
    %c0_i32 = arith.constant 0 : i32
    %c0_i32_0 = arith.constant 0 : i32
    %c0_i32_1 = arith.constant 0 : i32
    return %c0_i32, %c0_i32_0 : i32, i32
  }
  func.func @transform_3(%arg0: i32) -> (i32, i32, i32) {
    %c0_i32 = arith.constant 0 : i32
    %c0_i32_0 = arith.constant 0 : i32
    %c0_i32_1 = arith.constant 0 : i32
    return %arg0, %c0_i32, %c0_i32_0 : i32, i32, i32
  }
}

module attributes {stable_mosaic.version = 11 : i64} {
  func.func @_conv_stats_kernel(%arg0: i32, %arg1: memref<1x110x128xf32, #tpu.memory_space<vmem>>, %arg2: memref<3x384x128xf32, #tpu.memory_space<vmem>>, %arg3: memref<1x80x128xf32, #tpu.memory_space<vmem>>, %arg4: memref<2x128xf32, #tpu.memory_space<vmem>>, %arg5: memref<100x384xf32, #tpu.memory_space<vmem>>) attributes {dimension_semantics = [#tpu.dimension_semantics<arbitrary>], iteration_bounds = array<i64: 2>, scalar_prefetch = 0 : i64, scratch_operands = 1 : i64, tpu.core_type = #tpu.core_type<tc>, window_params = [{transform_indices = @transform_0, window_bounds = array<i64: 1, 110, 128>}, {pipeline_mode = #tpu.pipeline_mode<synchronous>, transform_indices = @transform_1, window_bounds = array<i64: 3, 384, 128>}, {transform_indices = @transform_2, window_bounds = array<i64: 1, 80, 128>}, {pipeline_mode = #tpu.pipeline_mode<synchronous>, transform_indices = @transform_3, window_bounds = array<i64: 2, 128>}]} {
    %c0_i32 = arith.constant 0 : i32
    %0 = arith.cmpi eq, %arg0, %c0_i32 : i32
    %1 = arith.extui %0 : i1 to i32
    %c0_i32_0 = arith.constant 0 : i32
    %2 = arith.cmpi ne, %1, %c0_i32_0 : i32
    scf.if %2 {
      %cst_41 = arith.constant 0.000000e+00 : f32
      %61 = vector.broadcast %cst_41 : f32 to vector<2x128xf32>
      %c0_42 = arith.constant 0 : index
      %c0_43 = arith.constant 0 : index
      %62 = vector.load %arg4[%c0_42, %c0_43] : memref<2x128xf32, #tpu.memory_space<vmem>>, vector<2x128xf32>
      tpu.vector_store %arg4[%c0_42, %c0_43], %61 {strides = array<i32>} : memref<2x128xf32, #tpu.memory_space<vmem>>, vector<2x128xf32>,
    } else {
    }
    %c0 = arith.constant 0 : index
    %c0_1 = arith.constant 0 : index
    %c0_2 = arith.constant 0 : index
    %3 = vector.load %arg1[%c0, %c0_1, %c0_2] : memref<1x110x128xf32, #tpu.memory_space<vmem>>, vector<1x100x128xf32>
    %4 = vector.shape_cast %3 : vector<1x100x128xf32> to vector<100x128xf32>
    %c0_3 = arith.constant 0 : index
    %c0_4 = arith.constant 0 : index
    %5 = vector.load %arg5[%c0_3, %c0_4] : memref<100x384xf32, #tpu.memory_space<vmem>>, vector<100x128xf32>
    tpu.vector_store %arg5[%c0_3, %c0_4], %4 {strides = array<i32>} : memref<100x384xf32, #tpu.memory_space<vmem>>, vector<100x128xf32>,
    %c0_5 = arith.constant 0 : index
    %c1 = arith.constant 1 : index
    %c0_6 = arith.constant 0 : index
    %6 = vector.load %arg1[%c0_5, %c1, %c0_6] : memref<1x110x128xf32, #tpu.memory_space<vmem>>, vector<1x100x128xf32>
    %7 = vector.shape_cast %6 : vector<1x100x128xf32> to vector<100x128xf32>
    %c0_7 = arith.constant 0 : index
    %c128 = arith.constant 128 : index
    %8 = vector.load %arg5[%c0_7, %c128] : memref<100x384xf32, #tpu.memory_space<vmem>>, vector<100x128xf32>
    tpu.vector_store %arg5[%c0_7, %c128], %7 {strides = array<i32>} : memref<100x384xf32, #tpu.memory_space<vmem>>, vector<100x128xf32>,
    %c0_8 = arith.constant 0 : index
    %c2 = arith.constant 2 : index
    %c0_9 = arith.constant 0 : index
    %9 = vector.load %arg1[%c0_8, %c2, %c0_9] : memref<1x110x128xf32, #tpu.memory_space<vmem>>, vector<1x100x128xf32>
    %10 = vector.shape_cast %9 : vector<1x100x128xf32> to vector<100x128xf32>
    %c0_10 = arith.constant 0 : index
    %c256 = arith.constant 256 : index
    %11 = vector.load %arg5[%c0_10, %c256] : memref<100x384xf32, #tpu.memory_space<vmem>>, vector<100x128xf32>
    tpu.vector_store %arg5[%c0_10, %c256], %10 {strides = array<i32>} : memref<100x384xf32, #tpu.memory_space<vmem>>, vector<100x128xf32>,
    %cst = arith.constant 0.000000e+00 : f32
    %12 = vector.broadcast %cst : f32 to vector<80x128xf32>
    %c0_11 = arith.constant 0 : index
    %c0_12 = arith.constant 0 : index
    %13 = vector.load %arg5[%c0_11, %c0_12] : memref<100x384xf32, #tpu.memory_space<vmem>>, vector<80x384xf32>
    %c0_13 = arith.constant 0 : index
    %c0_14 = arith.constant 0 : index
    %c0_15 = arith.constant 0 : index
    %14 = vector.load %arg2[%c0_13, %c0_14, %c0_15] : memref<3x384x128xf32, #tpu.memory_space<vmem>>, vector<1x384x128xf32>
    %15 = vector.shape_cast %14 : vector<1x384x128xf32> to vector<384x128xf32>
    %cst_16 = arith.constant dense<0.000000e+00> : vector<80x128xf32>
    %16 = tpu.matmul %13, %15, %cst_16 {dimension_numbers = #tpu.dot_dimension_numbers<[1], [0], [0], [1], [0, 0, 1, 1], [], []>} : vector<80x384xf32>, vector<384x128xf32>, vector<80x128xf32> -> vector<80x128xf32>
    %17 = arith.addf %12, %16 : vector<80x128xf32>
    %c10 = arith.constant 10 : index
    %c0_17 = arith.constant 0 : index
    %18 = vector.load %arg5[%c10, %c0_17] : memref<100x384xf32, #tpu.memory_space<vmem>>, vector<80x384xf32>
    %c1_18 = arith.constant 1 : index
    %c0_19 = arith.constant 0 : index
    %c0_20 = arith.constant 0 : index
    %19 = vector.load %arg2[%c1_18, %c0_19, %c0_20] : memref<3x384x128xf32, #tpu.memory_space<vmem>>, vector<1x384x128xf32>
    %20 = vector.shape_cast %19 : vector<1x384x128xf32> to vector<384x128xf32>
    %cst_21 = arith.constant dense<0.000000e+00> : vector<80x128xf32>
    %21 = tpu.matmul %18, %20, %cst_21 {dimension_numbers = #tpu.dot_dimension_numbers<[1], [0], [0], [1], [0, 0, 1, 1], [], []>} : vector<80x384xf32>, vector<384x128xf32>, vector<80x128xf32> -> vector<80x128xf32>
    %22 = arith.addf %17, %21 : vector<80x128xf32>
    %c20 = arith.constant 20 : index
    %c0_22 = arith.constant 0 : index
    %23 = vector.load %arg5[%c20, %c0_22] : memref<100x384xf32, #tpu.memory_space<vmem>>, vector<80x384xf32>
    %c2_23 = arith.constant 2 : index
    %c0_24 = arith.constant 0 : index
    %c0_25 = arith.constant 0 : index
    %24 = vector.load %arg2[%c2_23, %c0_24, %c0_25] : memref<3x384x128xf32, #tpu.memory_space<vmem>>, vector<1x384x128xf32>
    %25 = vector.shape_cast %24 : vector<1x384x128xf32> to vector<384x128xf32>
    %cst_26 = arith.constant dense<0.000000e+00> : vector<80x128xf32>
    %26 = tpu.matmul %23, %25, %cst_26 {dimension_numbers = #tpu.dot_dimension_numbers<[1], [0], [0], [1], [0, 0, 1, 1], [], []>} : vector<80x384xf32>, vector<384x128xf32>, vector<80x128xf32> -> vector<80x128xf32>
    %27 = arith.addf %22, %26 : vector<80x128xf32>
    %28 = tpu.iota {dimensions = array<i32: 0>} : vector<80x128xi32>
    %c10_i32 = arith.constant 10 : i32
    %c0_i32_27 = arith.constant 0 : i32
    %29 = arith.cmpi eq, %c10_i32, %c0_i32_27 : i32
    %c1_i32 = arith.constant 1 : i32
    %30 = arith.select %29, %c1_i32, %c10_i32 : i32
    %31 = vector.broadcast %30 : i32 to vector<80x128xi32>
    %32 = arith.remsi %28, %31 : vector<80x128xi32>
    %c0_i32_28 = arith.constant 0 : i32
    %33 = vector.broadcast %c0_i32_28 : i32 to vector<80x128xi32>
    %34 = arith.cmpi ne, %32, %33 : vector<80x128xi32>
    %c0_i32_29 = arith.constant 0 : i32
    %35 = vector.broadcast %c0_i32_29 : i32 to vector<80x128xi32>
    %36 = arith.cmpi slt, %32, %35 : vector<80x128xi32>
    %c0_i32_30 = arith.constant 0 : i32
    %37 = arith.cmpi slt, %30, %c0_i32_30 : i32
    %38 = vector.broadcast %37 : i1 to vector<80x128xi1>
    %39 = vector.broadcast %38 : vector<80x128xi1> to vector<80x128xi1>
    %40 = arith.xori %36, %39 : vector<80x128xi1>
    %41 = arith.andi %40, %34 : vector<80x128xi1>
    %42 = vector.broadcast %30 : i32 to vector<80x128xi32>
    %43 = arith.addi %32, %42 : vector<80x128xi32>
    %44 = arith.select %41, %43, %32 : vector<80x128xi1>, vector<80x128xi32>
    %c8_i32 = arith.constant 8 : i32
    %45 = vector.broadcast %c8_i32 : i32 to vector<80x128xi32>
    %46 = arith.cmpi slt, %44, %45 : vector<80x128xi32>
    %cst_31 = arith.constant 0.000000e+00 : f32
    %47 = vector.broadcast %cst_31 : f32 to vector<80x128xf32>
    %48 = arith.select %46, %27, %47 : vector<80x128xi1>, vector<80x128xf32>
    %cst_32 = arith.constant dense<0.000000e+00> : vector<128xf32>
    %49 = vector.multi_reduction <add>, %48, %cst_32 [0] : vector<80x128xf32> to vector<128xf32>
    %50 = vector.shape_cast %49 : vector<128xf32> to vector<1x128xf32>
    %51 = arith.mulf %48, %48 : vector<80x128xf32>
    %cst_33 = arith.constant dense<0.000000e+00> : vector<128xf32>
    %52 = vector.multi_reduction <add>, %51, %cst_33 [0] : vector<80x128xf32> to vector<128xf32>
    %53 = vector.shape_cast %52 : vector<128xf32> to vector<1x128xf32>
    %c0_34 = arith.constant 0 : index
    %c0_35 = arith.constant 0 : index
    %54 = vector.load %arg4[%c0_34, %c0_35] : memref<2x128xf32, #tpu.memory_space<vmem>>, vector<2x128xf32>
    %55 = tpu.concatenate %50, %53 in 0 : vector<1x128xf32>, vector<1x128xf32> -> vector<2x128xf32>
    %56 = arith.addf %54, %55 : vector<2x128xf32>
    %c0_36 = arith.constant 0 : index
    %c0_37 = arith.constant 0 : index
    %57 = vector.load %arg4[%c0_36, %c0_37] : memref<2x128xf32, #tpu.memory_space<vmem>>, vector<2x128xf32>
    tpu.vector_store %arg4[%c0_36, %c0_37], %56 {strides = array<i32>} : memref<2x128xf32, #tpu.memory_space<vmem>>, vector<2x128xf32>,
    %c0_38 = arith.constant 0 : index
    %c0_39 = arith.constant 0 : index
    %c0_40 = arith.constant 0 : index
    %58 = vector.load %arg3[%c0_38, %c0_39, %c0_40] : memref<1x80x128xf32, #tpu.memory_space<vmem>>, vector<1x80x128xf32>
    %59 = vector.shape_cast %58 : vector<1x80x128xf32> to vector<80x128xf32>
    %60 = vector.shape_cast %27 : vector<80x128xf32> to vector<1x80x128xf32>
    tpu.vector_store %arg3[%c0_38, %c0_39, %c0_40], %60 {strides = array<i32>} : memref<1x80x128xf32, #tpu.memory_space<vmem>>, vector<1x80x128xf32>,
    return
  }
  func.func @transform_0(%arg0: i32) -> (i32, i32, i32) {
    %c0_i32 = arith.constant 0 : i32
    %c0_i32_0 = arith.constant 0 : i32
    %c0_i32_1 = arith.constant 0 : i32
    return %arg0, %c0_i32, %c0_i32_0 : i32, i32, i32
  }
  func.func @transform_1(%arg0: i32) -> (i32, i32, i32) {
    %c0_i32 = arith.constant 0 : i32
    %c0_i32_0 = arith.constant 0 : i32
    %c0_i32_1 = arith.constant 0 : i32
    %c0_i32_2 = arith.constant 0 : i32
    return %c0_i32, %c0_i32_0, %c0_i32_1 : i32, i32, i32
  }
  func.func @transform_2(%arg0: i32) -> (i32, i32, i32) {
    %c0_i32 = arith.constant 0 : i32
    %c0_i32_0 = arith.constant 0 : i32
    %c0_i32_1 = arith.constant 0 : i32
    return %arg0, %c0_i32, %c0_i32_0 : i32, i32, i32
  }
  func.func @transform_3(%arg0: i32) -> (i32, i32) {
    %c0_i32 = arith.constant 0 : i32
    %c0_i32_0 = arith.constant 0 : i32
    %c0_i32_1 = arith.constant 0 : i32
    return %c0_i32, %c0_i32_0 : i32, i32
  }
}

</mosaic_0001>

<llo_original>
// kernel: down_forward.5
$region0: #{down_forward.5}
  #allocation0 [shape = 'u32[]', space=smem, size = 0x4, offset = 0x4, fixed_abs, tag = 'smem constant byte address 0x4 - core index']
  #allocation1 [shape = 'u32[144,128]{1,0:T(1,128)}', space=vmem, size = 0x12000, scoped, tag = 'internal scratch']
  %s0 = inlined_call_operand.vmem [shape: f32[2,16,8,8], index: 0, kind: input, shape index: {}]
  %s1 = inlined_call_operand.vmem [shape: f32[2,8,8,4], index: 1, kind: output, shape index: {}]
  %s2 = sld [smem:[#allocation0]]
  $region37: #{down_forward.5} parent=0
    _
  %s4 = ssub.s32 1, %s2
  %s5 = scalar_select 0, %s4, %s2
  loop: start=0, step=1, limit=4
  $region2: #{down_forward.5} parent=0 // loop_pre_header
    _
  $region3: #{down_forward.5} parent=0 // loop_header
    %s7 = sphi 0, %s11
    %p8 = scmp.ge.s32.totalorder %s7, 4
    %s14 = sphi 0, %s26
    %s15 = sphi 0, %s22
    %s16 = sphi 0, %s14
    %s17 = sphi 0, %s15
    %s18 = sphi 0, %s16
    %s19 = sphi 0, %s17
    %s31 = sphi 0, %s33
    %s34 = sphi 0, %s31
    %s35 = sphi 0, %s34
    %s51 = sphi 0, %s35
    %s59 = sphi 0, %s61
    %s62 = sphi 0, %s59
    %s63 = sphi 0, %s62
    %s79 = sphi 0, %s63
  $region4: #{down_forward.5} parent=0 // loop_header_branch
    %10 = sbr.rel (%p8) target = $region8
  $region5: #{down_forward.5} parent=0 // loop_body
    %s12 = ssub.s32 %s7, 1
    %s13 = ssub.s32 %s7, 2
    %s20 = sadd.s32 1, %s15
    %p21 = scmp.ge.s32.totalorder %s20, 1
    %s22 = scalar_select %p21, 0, %s20
    %s23 = sadd.s32 1, %s14
    %s24 = scalar_select %p21, %s23, %s14
    %p25 = scmp.ge.s32.totalorder %s24, 2
    %s26 = scalar_select %p25, 0, %s24
    %s27 = ssub.s32 %s14, %s26
    %s28 = ssub.s32 %s15, %s22
    %s29 = sor.u32 %s27, %s28
    %p30 = scmp.eq.s32.totalorder %s29, 0
    %s32 = sadd.s32 %s31, 1
    %s33 = scalar_select %p30, %s31, %s32
    %p36 = pneg %p30
    %p37 = scmp.eq.s32.totalorder %s7, 1
    %p38 = por %p36, %p37
    %p39 = scmp.ne.s32.totalorder %s31, %s34
    %p40 = scmp.eq.s32.totalorder %s7, 0
    %p41 = por %p39, %p40
    %p42 = scmp.ne.s32.totalorder %s31, %s34
    %p43 = scmp.eq.s32.totalorder %s12, 1
    %p44 = por %p42, %p43
    %p45 = scmp.ne.s32.totalorder %s34, %s35
    %p46 = scmp.eq.s32.totalorder %s12, 0
    %p47 = por %p45, %p46
    %p48 = scmp.ne.s32.totalorder %s34, %s35
    %p49 = scmp.eq.s32.totalorder %s13, 1
    %p50 = por %p48, %p49
    %p52 = scmp.ne.s32.totalorder %s35, %s51
    %p53 = scmp.eq.s32.totalorder %s13, 0
    %p54 = por %p52, %p53
    %s55 = ssub.s32 %s14, %s26
    %s56 = ssub.s32 %s15, %s22
    %s57 = sor.u32 %s55, %s56
    %p58 = scmp.eq.s32.totalorder %s57, 0
    %s60 = sadd.s32 %s59, 1
    %s61 = scalar_select %p58, %s59, %s60
    %p64 = pneg %p58
    %p65 = scmp.eq.s32.totalorder %s7, 1
    %p66 = por %p64, %p65
    %p67 = scmp.ne.s32.totalorder %s59, %s62
    %p68 = scmp.eq.s32.totalorder %s7, 0
    %p69 = por %p67, %p68
    %p70 = scmp.ne.s32.totalorder %s59, %s62
    %p71 = scmp.eq.s32.totalorder %s12, 1
    %p72 = por %p70, %p71
    %p73 = scmp.ne.s32.totalorder %s62, %s63
    %p74 = scmp.eq.s32.totalorder %s12, 0
    %p75 = por %p73, %p74
    %p76 = scmp.ne.s32.totalorder %s62, %s63
    %p77 = scmp.eq.s32.totalorder %s13, 1
    %p78 = por %p76, %p77
    %p80 = scmp.ne.s32.totalorder %s63, %s79
    %p81 = scmp.eq.s32.totalorder %s13, 0
    %p82 = por %p80, %p81
    %p83 = scmp.le.s32.totalorder 1, %s7
    %p84 = scmp.lt.s32.totalorder %s7, 3
    %p85 = pnand %p83, %p84
    %p86 = pneg %p85
    // Predicated region
    $region9: #{down_forward.5} parent=5 // pred_check
      _
    $region10: #{down_forward.5} parent=5 // pred_check_branch
      %88 = sbr.rel (%p85) target = $region12
    $region11: #{down_forward.5} parent=5 // pred_region
      %s89 = ssub.s32 %s7, 1
    $region12: #{down_forward.5} parent=5 // pred_fallthru
      _
    %p90 = scmp.lt.s32.totalorder %s7, 2
    // Predicated region
    $region13: #{down_forward.5} parent=5 // pred_check
      %p91 = pneg %p90
    $region14: #{down_forward.5} parent=5 // pred_check_branch
      %93 = sbr.rel (%p91) target = $region16
    $region15: #{down_forward.5} parent=5 // pred_region
      // Predicated region
      $region17: #{down_forward.5} parent=15 // pred_check
        %p94 = pneg %p41
      $region18: #{down_forward.5} parent=15 // pred_check_branch
        %96 = sbr.rel (%p94) target = $region20
      $region19: #{down_forward.5} parent=15 // pred_region
        %s97 = smul.u32 16, %s15
        %p98 = scmp.lt.s32.totalorder %s14, 1
        %s99 = scalar_select %p98, %s14, 1
        %p100 = scmp.lt.s32.totalorder %s97, 15
        %s101 = scalar_select %p100, %s97, 15
        %s102 = smul.addr %s99, 16
        %s103 = sadd.s32 %s101, %s102
        %s104 = smul.addr %s103, 8
        %s105 = scalar_lea.vmem %s0, %s104
        %s106 = smul.u32 16, %s15
      $region20: #{down_forward.5} parent=15 // pred_fallthru
        _
    $region16: #{down_forward.5} parent=5 // pred_fallthru
      _
    %p107 = scmp.le.s32.totalorder 1, %s7
    %p108 = scmp.lt.s32.totalorder %s7, 3
    %p109 = pnand %p107, %p108
    %p110 = pneg %p109
    // Predicated region
    $region21: #{down_forward.5} parent=5 // pred_check
      _
    $region22: #{down_forward.5} parent=5 // pred_check_branch
      %112 = sbr.rel (%p109) target = $region24
    $region23: #{down_forward.5} parent=5 // pred_region
      %s113 = ssub.s32 %s7, 1
      %s114 = smul.u32 16, %s17
      %p115 = scmp.lt.s32.totalorder %s16, 1
      %s116 = scalar_select %p115, %s16, 1
      %p117 = scmp.lt.s32.totalorder %s114, 15
      %s118 = scalar_select %p117, %s114, 15
      %s119 = smul.addr %s116, 16
      %s120 = sadd.s32 %s118, %s119
      %s121 = smul.addr %s120, 8
      %s122 = scalar_lea.vmem %s0, %s121
      %p123 = pneg %p47
      %p124 = pneg %p44
      %p125 = pneg %p75
      %p126 = pneg %p72
      %s127 = smul.u32 8, %s17
      %p128 = scmp.lt.s32.totalorder %s16, 1
      %s129 = scalar_select %p128, %s16, 1
      %p130 = scmp.lt.s32.totalorder %s127, 7
      %s131 = scalar_select %p130, %s127, 7
      %s132 = smul.addr %s129, 8
      %s133 = sadd.s32 %s131, %s132
      %s134 = smul.addr %s133, 8
      %s135 = scalar_lea.vmem %s1, %s134
      %s136 = smul.u32 16, %s17
      %p137 = scmp.lt.s32.totalorder %s16, 1
      %s138 = scalar_select %p137, %s16, 1
      %p139 = scmp.lt.s32.totalorder %s136, 15
      %s140 = scalar_select %p139, %s136, 15
      %s141 = smul.addr %s138, 16
      %s142 = sadd.s32 %s140, %s141
      %s143 = smul.addr %s142, 8
      %s144 = scalar_lea.vmem %s0, %s143
      %s145 = smul.u32 16, %s17
      %s146 = smul.u32 8, %s17
      %p147 = scmp.lt.s32.totalorder %s16, 1
      %s148 = scalar_select %p147, %s16, 1
      %p149 = scmp.lt.s32.totalorder %s146, 7
      %s150 = scalar_select %p149, %s146, 7
      %s151 = smul.addr %s148, 8
      %s152 = sadd.s32 %s150, %s151
      %s153 = smul.addr %s152, 8
      %s154 = scalar_lea.vmem %s1, %s153
      %s155 = smul.u32 8, %s17
      %v156 = vld [vmem:[%s144] sm:$0xff]
      %v157 = vld [vmem:[%s144 + $0x8] sm:$0xff]
      %v158 = vld [vmem:[%s144 + $0x10] sm:$0xff]
      %v159 = vld [vmem:[%s144 + $0x18] sm:$0xff]
      %v160 = vld [vmem:[%s144 + $0x20] sm:$0xff]
      %v161 = vld [vmem:[%s144 + $0x28] sm:$0xff]
      %v162 = vld [vmem:[%s144 + $0x30] sm:$0xff]
      %v163 = vld [vmem:[%s144 + $0x38] sm:$0xff]
      %v164 = vld [vmem:[%s144 + $0x40] sm:$0xff]
      %v165 = vld [vmem:[%s144 + $0x48] sm:$0xff]
      %v166 = vld [vmem:[%s144 + $0x50] sm:$0xff]
      %v167 = vld [vmem:[%s144 + $0x58] sm:$0xff]
      %v168 = vld [vmem:[%s144 + $0x60] sm:$0xff]
      %v169 = vld [vmem:[%s144 + $0x68] sm:$0xff]
      %v170 = vld [vmem:[%s144 + $0x70] sm:$0xff]
      %v171 = vld [vmem:[%s144 + $0x78] sm:$0xff]
      %v172 = vmax.f32 %v156, %v157
      %v173 = vmax.f32 %v158, %v159
      %v174 = vmax.f32 %v160, %v161
      %v175 = vmax.f32 %v162, %v163
      %v176 = vmax.f32 %v164, %v165
      %v177 = vmax.f32 %v166, %v167
      %v178 = vmax.f32 %v168, %v169
      %v179 = vmax.f32 %v170, %v171
      %188 = vrot.lane.b32.xlu0 %v172, 124
      %v189 = vpop.permute.xlu0 %188
      %190 = vrot.lane.b32.xlu0 %v173, 124
      %v191 = vpop.permute.xlu0 %190
      %192 = vrot.lane.b32.xlu0 %v174, 124
      %v193 = vpop.permute.xlu0 %192
      %194 = vrot.lane.b32.xlu0 %v175, 124
      %v195 = vpop.permute.xlu0 %194
      %196 = vrot.lane.b32.xlu0 %v176, 124
      %v197 = vpop.permute.xlu0 %196
      %198 = vrot.lane.b32.xlu0 %v177, 124
      %v199 = vpop.permute.xlu0 %198
      %200 = vrot.lane.b32.xlu0 %v178, 124
      %v201 = vpop.permute.xlu0 %200
      %202 = vrot.lane.b32.xlu0 %v179, 124
      %v203 = vpop.permute.xlu0 %202
      %v212 = vmax.f32 %v172, %v189
      %v213 = vmax.f32 %v173, %v191
      %v214 = vmax.f32 %v174, %v193
      %v215 = vmax.f32 %v175, %v195
      %v216 = vmax.f32 %v176, %v197
      %v217 = vmax.f32 %v177, %v199
      %v218 = vmax.f32 %v178, %v201
      %v219 = vmax.f32 %v179, %v203
      %vm220 = vcmask 31744
      %221 = vst.msk [vmem:[%s154] sm:$0xff] %vm220, %v212
      %222 = vst.msk [vmem:[%s154 + $0x8] sm:$0xff] %vm220, %v213
      %223 = vst.msk [vmem:[%s154 + $0x10] sm:$0xff] %vm220, %v214
      %224 = vst.msk [vmem:[%s154 + $0x18] sm:$0xff] %vm220, %v215
      %225 = vst.msk [vmem:[%s154 + $0x20] sm:$0xff] %vm220, %v216
      %226 = vst.msk [vmem:[%s154 + $0x28] sm:$0xff] %vm220, %v217
      %227 = vst.msk [vmem:[%s154 + $0x30] sm:$0xff] %vm220, %v218
      %228 = vst.msk [vmem:[%s154 + $0x38] sm:$0xff] %vm220, %v219
      %s229 = smul.u32 8, %s17
      %p230 = scmp.lt.s32.totalorder %s16, 1
      %s231 = scalar_select %p230, %s16, 1
      %p232 = scmp.lt.s32.totalorder %s229, 7
      %s233 = scalar_select %p232, %s229, 7
      %s234 = smul.addr %s231, 8
      %s235 = sadd.s32 %s233, %s234
      %s236 = smul.addr %s235, 8
      %s237 = scalar_lea.vmem %s1, %s236
      // Predicated region
      $region25: #{down_forward.5} parent=23 // pred_check
        %p238 = pneg %p72
      $region26: #{down_forward.5} parent=23 // pred_check_branch
        %240 = sbr.rel (%p238) target = $region28
      $region27: #{down_forward.5} parent=23 // pred_region
        %s241 = smul.u32 8, %s17
      $region28: #{down_forward.5} parent=23 // pred_fallthru
        _
    $region24: #{down_forward.5} parent=5 // pred_fallthru
      _
    %p242 = scmp.le.s32.totalorder 2, %s7
    // Predicated region
    $region29: #{down_forward.5} parent=5 // pred_check
      %p243 = pneg %p242
    $region30: #{down_forward.5} parent=5 // pred_check_branch
      %245 = sbr.rel (%p243) target = $region32
    $region31: #{down_forward.5} parent=5 // pred_region
      %s246 = ssub.s32 %s7, 2
      // Predicated region
      $region33: #{down_forward.5} parent=31 // pred_check
        %p247 = pneg %p78
      $region34: #{down_forward.5} parent=31 // pred_check_branch
        %249 = sbr.rel (%p247) target = $region36
      $region35: #{down_forward.5} parent=31 // pred_region
        %s250 = smul.u32 8, %s19
        %p251 = scmp.lt.s32.totalorder %s18, 1
        %s252 = scalar_select %p251, %s18, 1
        %p253 = scmp.lt.s32.totalorder %s250, 7
        %s254 = scalar_select %p253, %s250, 7
        %s255 = smul.addr %s252, 8
        %s256 = sadd.s32 %s254, %s255
        %s257 = smul.addr %s256, 8
        %s258 = scalar_lea.vmem %s1, %s257
      $region36: #{down_forward.5} parent=31 // pred_fallthru
        _
    $region32: #{down_forward.5} parent=5 // pred_fallthru
      _
  $region6: #{down_forward.5} parent=0 // loop_footer
    %s11 = sadd.s32 1, %s7
  $region7: #{down_forward.5} parent=0 // loop_footer_branch
    %6 = sbr.rel target = $region3
  $region8: #{down_forward.5} parent=0 // loop_exit
    _

// kernel: down_forward.7
$region0: #{down_forward.7}
  #allocation0 [shape = 'u32[]', space=smem, size = 0x4, offset = 0x4, fixed_abs, tag = 'smem constant byte address 0x4 - core index']
  #allocation1 [shape = 'u32[144,128]{1,0:T(1,128)}', space=vmem, size = 0x12000, scoped, tag = 'internal scratch']
  %s0 = inlined_call_operand.vmem [shape: f32[2,80,128], index: 0, kind: input, shape index: {}]
  %s1 = inlined_call_operand.vmem [shape: f32[1,128], index: 1, kind: input, shape index: {}]
  %s2 = inlined_call_operand.vmem [shape: f32[1,128], index: 2, kind: input, shape index: {}]
  %s3 = inlined_call_operand.vmem [shape: f32[2,110,128], index: 3, kind: output, shape index: {}]
  %s4 = sld [smem:[#allocation0]]
  $region45: #{down_forward.7} parent=0
    _
  %s6 = ssub.s32 1, %s4
  %s7 = scalar_select 0, %s6, %s4
  loop: start=0, step=1, limit=4
  $region2: #{down_forward.7} parent=0 // loop_pre_header
    _
  $region3: #{down_forward.7} parent=0 // loop_header
    %s9 = sphi 0, %s13
    %p10 = scmp.ge.s32.totalorder %s9, 4
    %s19 = sphi 0, %s21
    %s22 = sphi 0, %s19
    %s23 = sphi 0, %s22
    %s39 = sphi 0, %s23
    %s43 = sphi 0, %s43
    %s45 = sphi 0, %s43
    %s46 = sphi 0, %s45
    %s60 = sphi 0, %s46
    %s64 = sphi 0, %s64
    %s66 = sphi 0, %s64
    %s67 = sphi 0, %s66
    %s81 = sphi 0, %s67
    %s87 = sphi 0, %s89
    %s90 = sphi 0, %s87
    %s91 = sphi 0, %s90
    %s107 = sphi 0, %s91
  $region4: #{down_forward.7} parent=0 // loop_header_branch
    %12 = sbr.rel (%p10) target = $region8
  $region5: #{down_forward.7} parent=0 // loop_body
    %s14 = ssub.s32 %s9, 1
    %s15 = ssub.s32 %s9, 2
    %s16 = sadd.s32 %s9, 1
    %s17 = ssub.s32 %s9, %s16
    %p18 = scmp.eq.s32.totalorder %s17, 0
    %s20 = sadd.s32 %s19, 1
    %s21 = scalar_select %p18, %s19, %s20
    %p24 = pneg %p18
    %p25 = scmp.eq.s32.totalorder %s9, 1
    %p26 = por %p24, %p25
    %p27 = scmp.ne.s32.totalorder %s19, %s22
    %p28 = scmp.eq.s32.totalorder %s9, 0
    %p29 = por %p27, %p28
    %p30 = scmp.ne.s32.totalorder %s19, %s22
    %p31 = scmp.eq.s32.totalorder %s14, 1
    %p32 = por %p30, %p31
    %p33 = scmp.ne.s32.totalorder %s22, %s23
    %p34 = scmp.eq.s32.totalorder %s14, 0
    %p35 = por %p33, %p34
    %p36 = scmp.ne.s32.totalorder %s22, %s23
    %p37 = scmp.eq.s32.totalorder %s15, 1
    %p38 = por %p36, %p37
    %p40 = scmp.ne.s32.totalorder %s23, %s39
    %p41 = scmp.eq.s32.totalorder %s15, 0
    %p42 = por %p40, %p41
    %s44 = sadd.s32 %s43, 1
    %p47 = scmp.eq.s32.totalorder %s9, 1
    %p48 = scmp.ne.s32.totalorder %s43, %s45
    %p49 = scmp.eq.s32.totalorder %s9, 0
    %p50 = por %p48, %p49
    %p51 = scmp.ne.s32.totalorder %s43, %s45
    %p52 = scmp.eq.s32.totalorder %s14, 1
    %p53 = por %p51, %p52
    %p54 = scmp.ne.s32.totalorder %s45, %s46
    %p55 = scmp.eq.s32.totalorder %s14, 0
    %p56 = por %p54, %p55
    %p57 = scmp.ne.s32.totalorder %s45, %s46
    %p58 = scmp.eq.s32.totalorder %s15, 1
    %p59 = por %p57, %p58
    %p61 = scmp.ne.s32.totalorder %s46, %s60
    %p62 = scmp.eq.s32.totalorder %s15, 0
    %p63 = por %p61, %p62
    %s65 = sadd.s32 %s64, 1
    %p68 = scmp.eq.s32.totalorder %s9, 1
    %p69 = scmp.ne.s32.totalorder %s64, %s66
    %p70 = scmp.eq.s32.totalorder %s9, 0
    %p71 = por %p69, %p70
    %p72 = scmp.ne.s32.totalorder %s64, %s66
    %p73 = scmp.eq.s32.totalorder %s14, 1
    %p74 = por %p72, %p73
    %p75 = scmp.ne.s32.totalorder %s66, %s67
    %p76 = scmp.eq.s32.totalorder %s14, 0
    %p77 = por %p75, %p76
    %p78 = scmp.ne.s32.totalorder %s66, %s67
    %p79 = scmp.eq.s32.totalorder %s15, 1
    %p80 = por %p78, %p79
    %p82 = scmp.ne.s32.totalorder %s67, %s81
    %p83 = scmp.eq.s32.totalorder %s15, 0
    %p84 = por %p82, %p83
    %s85 = ssub.s32 %s9, %s16
    %p86 = scmp.eq.s32.totalorder %s85, 0
    %s88 = sadd.s32 %s87, 1
    %s89 = scalar_select %p86, %s87, %s88
    %p92 = pneg %p86
    %p93 = scmp.eq.s32.totalorder %s9, 1
    %p94 = por %p92, %p93
    %p95 = scmp.ne.s32.totalorder %s87, %s90
    %p96 = scmp.eq.s32.totalorder %s9, 0
    %p97 = por %p95, %p96
    %p98 = scmp.ne.s32.totalorder %s87, %s90
    %p99 = scmp.eq.s32.totalorder %s14, 1
    %p100 = por %p98, %p99
    %p101 = scmp.ne.s32.totalorder %s90, %s91
    %p102 = scmp.eq.s32.totalorder %s14, 0
    %p103 = por %p101, %p102
    %p104 = scmp.ne.s32.totalorder %s90, %s91
    %p105 = scmp.eq.s32.totalorder %s15, 1
    %p106 = por %p104, %p105
    %p108 = scmp.ne.s32.totalorder %s91, %s107
    %p109 = scmp.eq.s32.totalorder %s15, 0
    %p110 = por %p108, %p109
    %p111 = scmp.le.s32.totalorder 1, %s9
    %p112 = scmp.lt.s32.totalorder %s9, 3
    %p113 = pnand %p111, %p112
    %p114 = pneg %p113
    // Predicated region
    $region9: #{down_forward.7} parent=5 // pred_check
      _
    $region10: #{down_forward.7} parent=5 // pred_check_branch
      %116 = sbr.rel (%p113) target = $region12
    $region11: #{down_forward.7} parent=5 // pred_region
      %s117 = ssub.s32 %s9, 1
      // Predicated region
      $region13: #{down_forward.7} parent=11 // pred_check
        %p118 = pneg %p56
      $region14: #{down_forward.7} parent=11 // pred_check_branch
        %120 = sbr.rel (%p118) target = $region16
      $region15: #{down_forward.7} parent=11 // pred_region
        _
      $region16: #{down_forward.7} parent=11 // pred_fallthru
        _
      // Predicated region
      $region17: #{down_forward.7} parent=11 // pred_check
        %p121 = pneg %p77
      $region18: #{down_forward.7} parent=11 // pred_check_branch
        %123 = sbr.rel (%p121) target = $region20
      $region19: #{down_forward.7} parent=11 // pred_region
        _
      $region20: #{down_forward.7} parent=11 // pred_fallthru
        _
    $region12: #{down_forward.7} parent=5 // pred_fallthru
      _
    %p124 = scmp.lt.s32.totalorder %s9, 2
    // Predicated region
    $region21: #{down_forward.7} parent=5 // pred_check
      %p125 = pneg %p124
    $region22: #{down_forward.7} parent=5 // pred_check_branch
      %127 = sbr.rel (%p125) target = $region24
    $region23: #{down_forward.7} parent=5 // pred_region
      // Predicated region
      $region25: #{down_forward.7} parent=23 // pred_check
        %p128 = pneg %p29
      $region26: #{down_forward.7} parent=23 // pred_check_branch
        %130 = sbr.rel (%p128) target = $region28
      $region27: #{down_forward.7} parent=23 // pred_region
        %p131 = scmp.lt.s32.totalorder %s9, 1
        %s132 = scalar_select %p131, %s9, 1
        %s133 = smul.addr %s132, 10
        %s134 = smul.addr %s133, 8
        %s135 = scalar_lea.vmem %s0, %s134
      $region28: #{down_forward.7} parent=23 // pred_fallthru
        _
    $region24: #{down_forward.7} parent=5 // pred_fallthru
      _
    %p136 = scmp.le.s32.totalorder 1, %s9
    %p137 = scmp.lt.s32.totalorder %s9, 3
    %p138 = pnand %p136, %p137
    %p139 = pneg %p138
    // Predicated region
    $region29: #{down_forward.7} parent=5 // pred_check
      _
    $region30: #{down_forward.7} parent=5 // pred_check_branch
      %141 = sbr.rel (%p138) target = $region32
    $region31: #{down_forward.7} parent=5 // pred_region
      %s142 = ssub.s32 %s9, 1
      %p143 = scmp.lt.s32.totalorder %s14, 1
      %s144 = scalar_select %p143, %s14, 1
      %s145 = smul.addr %s144, 10
      %s146 = smul.addr %s145, 8
      %s147 = scalar_lea.vmem %s0, %s146
      %p148 = pneg %p35
      %p149 = pneg %p32
      %p150 = pneg %p56
      %p151 = pneg %p53
      %p152 = pneg %p77
      %p153 = pneg %p74
      %p154 = pneg %p103
      %p155 = pneg %p100
      %p156 = scmp.lt.s32.totalorder %s14, 1
      %s157 = scalar_select %p156, %s14, 1
      %s158 = smul.addr %s157, 14
      %s159 = smul.addr %s158, 8
      %s160 = scalar_lea.vmem %s3, %s159
      %p161 = scmp.lt.s32.totalorder %s14, 1
      %s162 = scalar_select %p161, %s14, 1
      %s163 = smul.addr %s162, 10
      %s164 = smul.addr %s163, 8
      %s165 = scalar_lea.vmem %s0, %s164
      %p166 = scmp.lt.s32.totalorder %s14, 1
      %s167 = scalar_select %p166, %s14, 1
      %s168 = smul.addr %s167, 14
      %s169 = smul.addr %s168, 8
      %s170 = scalar_lea.vmem %s3, %s169
      %v171 = vld [vmem:[%s165] sm:$0xff]
      %v172 = vld [vmem:[%s165 + $0x8] sm:$0xff]
      %v173 = vld [vmem:[%s165 + $0x10] sm:$0xff]
      %v174 = vld [vmem:[%s165 + $0x18] sm:$0xff]
      %v175 = vld [vmem:[%s165 + $0x20] sm:$0xff]
      %v176 = vld [vmem:[%s165 + $0x28] sm:$0xff]
      %v177 = vld [vmem:[%s165 + $0x30] sm:$0xff]
      %v178 = vld [vmem:[%s165 + $0x38] sm:$0xff]
      %v179 = vld [vmem:[%s165 + $0x40] sm:$0xff]
      %v180 = vld [vmem:[%s165 + $0x48] sm:$0xff]
      %v181 = vld [vmem:[%s1] sm:$0x1]
      %v183 = vlaneseq
      %v184 = vshrl.u32 %v183, 7
      %v185 = vsub.s32 0, %v184
      %v186 = vrot.slane %v181, %v185
      %v188 = vmul.f32 %v171, %v186
      %v189 = vmul.f32 %v172, %v186
      %v190 = vmul.f32 %v173, %v186
      %v191 = vmul.f32 %v174, %v186
      %v192 = vmul.f32 %v175, %v186
      %v193 = vmul.f32 %v176, %v186
      %v194 = vmul.f32 %v177, %v186
      %v195 = vmul.f32 %v178, %v186
      %v196 = vmul.f32 %v179, %v186
      %v197 = vmul.f32 %v180, %v186
      %v198 = vld [vmem:[%s2] sm:$0x1]
      %v200 = vlaneseq
      %v201 = vshrl.u32 %v200, 7
      %v202 = vsub.s32 0, %v201
      %v203 = vrot.slane %v198, %v202
      %v205 = vadd.f32 %v188, %v203
      %v206 = vadd.f32 %v189, %v203
      %v207 = vadd.f32 %v190, %v203
      %v208 = vadd.f32 %v191, %v203
      %v209 = vadd.f32 %v192, %v203
      %v210 = vadd.f32 %v193, %v203
      %v211 = vadd.f32 %v194, %v203
      %v212 = vadd.f32 %v195, %v203
      %v213 = vadd.f32 %v196, %v203
      %v214 = vadd.f32 %v197, %v203
      %v215 = vmax.f32 %v205, 0.0
      %v216 = vmax.f32 %v206, 0.0
      %v217 = vmax.f32 %v207, 0.0
      %v218 = vmax.f32 %v208, 0.0
      %v219 = vmax.f32 %v209, 0.0
      %v220 = vmax.f32 %v210, 0.0
      %v221 = vmax.f32 %v211, 0.0
      %v222 = vmax.f32 %v212, 0.0
      %v223 = vmax.f32 %v213, 0.0
      %v224 = vmax.f32 %v214, 0.0
      %v225 = vlaneseq
      %v226 = vshrl.u32 %v225, 7
      %v227 = vadd.s32 %v226, 8
      %v228 = vadd.s32 %v226, 16
      %v229 = vadd.s32 %v226, 24
      %v230 = vadd.s32 %v226, 32
      %v231 = vadd.s32 %v226, 40
      %v232 = vadd.s32 %v226, 48
      %v233 = vadd.s32 %v226, 56
      %v234 = vadd.s32 %v226, 64
      %v235 = vadd.s32 %v226, 72
      %vm236 = vcmp.lt.s32.totalorder %v226, 0
      %v237 = vsub.s32 0, %v226
      %v238 = vsel %vm236, %v237, %v226
      %v239 = vmul.u32.u64.compose %v238, 3435973837
      %v240 = vextract.low.u32 %v239
      %v241 = vextract.high.u32 %v239
      %v242 = vshrl.u32 %v241, 3
      %v243 = vmul.u32 %v242, 10
      %v244 = vsub.s32 %v238, %v243
      %v245 = vsub.s32 0, %v244
      %v246 = vsel %vm236, %v245, %v244
      %vm247 = vcmp.lt.s32.totalorder %v227, 0
      %v248 = vsub.s32 0, %v227
      %v249 = vsel %vm247, %v248, %v227
      %v250 = vmul.u32.u64.compose %v249, 3435973837
      %v251 = vextract.low.u32 %v250
      %v252 = vextract.high.u32 %v250
      %v253 = vshrl.u32 %v252, 3
      %v254 = vmul.u32 %v253, 10
      %v255 = vsub.s32 %v249, %v254
      %v256 = vsub.s32 0, %v255
      %v257 = vsel %vm247, %v256, %v255
      %vm258 = vcmp.lt.s32.totalorder %v228, 0
      %v259 = vsub.s32 0, %v228
      %v260 = vsel %vm258, %v259, %v228
      %v261 = vmul.u32.u64.compose %v260, 3435973837
      %v262 = vextract.low.u32 %v261
      %v263 = vextract.high.u32 %v261
      %v264 = vshrl.u32 %v263, 3
      %v265 = vmul.u32 %v264, 10
      %v266 = vsub.s32 %v260, %v265
      %v267 = vsub.s32 0, %v266
      %v268 = vsel %vm258, %v267, %v266
      %vm269 = vcmp.lt.s32.totalorder %v229, 0
      %v270 = vsub.s32 0, %v229
      %v271 = vsel %vm269, %v270, %v229
      %v272 = vmul.u32.u64.compose %v271, 3435973837
      %v273 = vextract.low.u32 %v272
      %v274 = vextract.high.u32 %v272
      %v275 = vshrl.u32 %v274, 3
      %v276 = vmul.u32 %v275, 10
      %v277 = vsub.s32 %v271, %v276
      %v278 = vsub.s32 0, %v277
      %v279 = vsel %vm269, %v278, %v277
      %vm280 = vcmp.lt.s32.totalorder %v230, 0
      %v281 = vsub.s32 0, %v230
      %v282 = vsel %vm280, %v281, %v230
      %v283 = vmul.u32.u64.compose %v282, 3435973837
      %v284 = vextract.low.u32 %v283
      %v285 = vextract.high.u32 %v283
      %v286 = vshrl.u32 %v285, 3
      %v287 = vmul.u32 %v286, 10
      %v288 = vsub.s32 %v282, %v287
      %v289 = vsub.s32 0, %v288
      %v290 = vsel %vm280, %v289, %v288
      %vm291 = vcmp.lt.s32.totalorder %v231, 0
      %v292 = vsub.s32 0, %v231
      %v293 = vsel %vm291, %v292, %v231
      %v294 = vmul.u32.u64.compose %v293, 3435973837
      %v295 = vextract.low.u32 %v294
      %v296 = vextract.high.u32 %v294
      %v297 = vshrl.u32 %v296, 3
      %v298 = vmul.u32 %v297, 10
      %v299 = vsub.s32 %v293, %v298
      %v300 = vsub.s32 0, %v299
      %v301 = vsel %vm291, %v300, %v299
      %vm302 = vcmp.lt.s32.totalorder %v232, 0
      %v303 = vsub.s32 0, %v232
      %v304 = vsel %vm302, %v303, %v232
      %v305 = vmul.u32.u64.compose %v304, 3435973837
      %v306 = vextract.low.u32 %v305
      %v307 = vextract.high.u32 %v305
      %v308 = vshrl.u32 %v307, 3
      %v309 = vmul.u32 %v308, 10
      %v310 = vsub.s32 %v304, %v309
      %v311 = vsub.s32 0, %v310
      %v312 = vsel %vm302, %v311, %v310
      %vm313 = vcmp.lt.s32.totalorder %v233, 0
      %v314 = vsub.s32 0, %v233
      %v315 = vsel %vm313, %v314, %v233
      %v316 = vmul.u32.u64.compose %v315, 3435973837
      %v317 = vextract.low.u32 %v316
      %v318 = vextract.high.u32 %v316
      %v319 = vshrl.u32 %v318, 3
      %v320 = vmul.u32 %v319, 10
      %v321 = vsub.s32 %v315, %v320
      %v322 = vsub.s32 0, %v321
      %v323 = vsel %vm313, %v322, %v321
      %vm324 = vcmp.lt.s32.totalorder %v234, 0
      %v325 = vsub.s32 0, %v234
      %v326 = vsel %vm324, %v325, %v234
      %v327 = vmul.u32.u64.compose %v326, 3435973837
      %v328 = vextract.low.u32 %v327
      %v329 = vextract.high.u32 %v327
      %v330 = vshrl.u32 %v329, 3
      %v331 = vmul.u32 %v330, 10
      %v332 = vsub.s32 %v326, %v331
      %v333 = vsub.s32 0, %v332
      %v334 = vsel %vm324, %v333, %v332
      %vm335 = vcmp.lt.s32.totalorder %v235, 0
      %v336 = vsub.s32 0, %v235
      %v337 = vsel %vm335, %v336, %v235
      %v338 = vmul.u32.u64.compose %v337, 3435973837
      %v339 = vextract.low.u32 %v338
      %v340 = vextract.high.u32 %v338
      %v341 = vshrl.u32 %v340, 3
      %v342 = vmul.u32 %v341, 10
      %v343 = vsub.s32 %v337, %v342
      %v344 = vsub.s32 0, %v343
      %v345 = vsel %vm335, %v344, %v343
      %vm346 = vcmp.ne.s32.totalorder %v246, 0
      %vm347 = vcmp.ne.s32.totalorder %v257, 0
      %vm348 = vcmp.ne.s32.totalorder %v268, 0
      %vm349 = vcmp.ne.s32.totalorder %v279, 0
      %vm350 = vcmp.ne.s32.totalorder %v290, 0
      %vm351 = vcmp.ne.s32.totalorder %v301, 0
      %vm352 = vcmp.ne.s32.totalorder %v312, 0
      %vm353 = vcmp.ne.s32.totalorder %v323, 0
      %vm354 = vcmp.ne.s32.totalorder %v334, 0
      %vm355 = vcmp.ne.s32.totalorder %v345, 0
      %vm356 = vcmp.lt.s32.totalorder %v246, 0
      %vm357 = vcmp.lt.s32.totalorder %v257, 0
      %vm358 = vcmp.lt.s32.totalorder %v268, 0
      %vm359 = vcmp.lt.s32.totalorder %v279, 0
      %vm360 = vcmp.lt.s32.totalorder %v290, 0
      %vm361 = vcmp.lt.s32.totalorder %v301, 0
      %vm362 = vcmp.lt.s32.totalorder %v312, 0
      %vm363 = vcmp.lt.s32.totalorder %v323, 0
      %vm364 = vcmp.lt.s32.totalorder %v334, 0
      %vm365 = vcmp.lt.s32.totalorder %v345, 0
      %vm366 = vmand %vm356, %vm346
      %vm367 = vmand %vm357, %vm347
      %vm368 = vmand %vm358, %vm348
      %vm369 = vmand %vm359, %vm349
      %vm370 = vmand %vm360, %vm350
      %vm371 = vmand %vm361, %vm351
      %vm372 = vmand %vm362, %vm352
      %vm373 = vmand %vm363, %vm353
      %vm374 = vmand %vm364, %vm354
      %vm375 = vmand %vm365, %vm355
      %v376 = vadd.s32 %v246, 10
      %v377 = vadd.s32 %v257, 10
      %v378 = vadd.s32 %v268, 10
      %v379 = vadd.s32 %v279, 10
      %v380 = vadd.s32 %v290, 10
      %v381 = vadd.s32 %v301, 10
      %v382 = vadd.s32 %v312, 10
      %v383 = vadd.s32 %v323, 10
      %v384 = vadd.s32 %v334, 10
      %v385 = vadd.s32 %v345, 10
      %v386 = vsel %vm366, %v376, %v246
      %v387 = vsel %vm367, %v377, %v257
      %v388 = vsel %vm368, %v378, %v268
      %v389 = vsel %vm369, %v379, %v279
      %v390 = vsel %vm370, %v380, %v290
      %v391 = vsel %vm371, %v381, %v301
      %v392 = vsel %vm372, %v382, %v312
      %v393 = vsel %vm373, %v383, %v323
      %v394 = vsel %vm374, %v384, %v334
      %v395 = vsel %vm375, %v385, %v345
      %vm396 = vcmp.lt.s32.totalorder %v386, 8
      %vm397 = vcmp.lt.s32.totalorder %v387, 8
      %vm398 = vcmp.lt.s32.totalorder %v388, 8
      %vm399 = vcmp.lt.s32.totalorder %v389, 8
      %vm400 = vcmp.lt.s32.totalorder %v390, 8
      %vm401 = vcmp.lt.s32.totalorder %v391, 8
      %vm402 = vcmp.lt.s32.totalorder %v392, 8
      %vm403 = vcmp.lt.s32.totalorder %v393, 8
      %vm404 = vcmp.lt.s32.totalorder %v394, 8
      %vm405 = vcmp.lt.s32.totalorder %v395, 8
      %v406 = vsel %vm396, %v215, 0.0
      %v407 = vsel %vm397, %v216, 0.0
      %v408 = vsel %vm398, %v217, 0.0
      %v409 = vsel %vm399, %v218, 0.0
      %v410 = vsel %vm400, %v219, 0.0
      %v411 = vsel %vm401, %v220, 0.0
      %v412 = vsel %vm402, %v221, 0.0
      %v413 = vsel %vm403, %v222, 0.0
      %v414 = vsel %vm404, %v223, 0.0
      %v415 = vsel %vm405, %v224, 0.0
      %416 = vst [vmem:[%s170] sm:$0xff] 0.0
      %417 = vst [vmem:[%s170 + $0x8] sm:$0x7] 0.0
      %418 = vst [vmem:[%s170 + $0xb] sm:$0xff] %v406
      %419 = vst [vmem:[%s170 + $0x13] sm:$0xff] %v407
      %420 = vst [vmem:[%s170 + $0x1b] sm:$0xff] %v408
      %421 = vst [vmem:[%s170 + $0x23] sm:$0xff] %v409
      %422 = vst [vmem:[%s170 + $0x2b] sm:$0xff] %v410
      %423 = vst [vmem:[%s170 + $0x33] sm:$0xff] %v411
      %424 = vst [vmem:[%s170 + $0x3b] sm:$0xff] %v412
      %425 = vst [vmem:[%s170 + $0x43] sm:$0xff] %v413
      %426 = vst [vmem:[%s170 + $0x4b] sm:$0xff] %v414
      %427 = vst [vmem:[%s170 + $0x53] sm:$0xff] %v415
      %428 = vst [vmem:[%s170 + $0x5b] sm:$0xff] 0.0
      %429 = vst [vmem:[%s170 + $0x63] sm:$0xff] 0.0
      %430 = vst [vmem:[%s170 + $0x6b] sm:$0x7] 0.0
      %p431 = scmp.lt.s32.totalorder %s14, 1
      %s432 = scalar_select %p431, %s14, 1
      %s433 = smul.addr %s432, 14
      %s434 = smul.addr %s433, 8
      %s435 = scalar_lea.vmem %s3, %s434
      // Predicated region
      $region33: #{down_forward.7} parent=31 // pred_check
        %p436 = pneg %p100
      $region34: #{down_forward.7} parent=31 // pred_check_branch
        %438 = sbr.rel (%p436) target = $region36
      $region35: #{down_forward.7} parent=31 // pred_region
        _
      $region36: #{down_forward.7} parent=31 // pred_fallthru
        _
    $region32: #{down_forward.7} parent=5 // pred_fallthru
      _
    %p439 = scmp.le.s32.totalorder 2, %s9
    // Predicated region
    $region37: #{down_forward.7} parent=5 // pred_check
      %p440 = pneg %p439
    $region38: #{down_forward.7} parent=5 // pred_check_branch
      %442 = sbr.rel (%p440) target = $region40
    $region39: #{down_forward.7} parent=5 // pred_region
      %s443 = ssub.s32 %s9, 2
      // Predicated region
      $region41: #{down_forward.7} parent=39 // pred_check
        %p444 = pneg %p106
      $region42: #{down_forward.7} parent=39 // pred_check_branch
        %446 = sbr.rel (%p444) target = $region44
      $region43: #{down_forward.7} parent=39 // pred_region
        %p447 = scmp.lt.s32.totalorder %s15, 1
        %s448 = scalar_select %p447, %s15, 1
        %s449 = smul.addr %s448, 14
        %s450 = smul.addr %s449, 8
        %s451 = scalar_lea.vmem %s3, %s450
      $region44: #{down_forward.7} parent=39 // pred_fallthru
        _
    $region40: #{down_forward.7} parent=5 // pred_fallthru
      _
  $region6: #{down_forward.7} parent=0 // loop_footer
    %s13 = sadd.s32 1, %s9
  $region7: #{down_forward.7} parent=0 // loop_footer_branch
    %8 = sbr.rel target = $region3
  $region8: #{down_forward.7} parent=0 // loop_exit
    _

// kernel: down_forward.6
$region0: #{down_forward.6}
  #allocation0 [shape = 'u32[]', space=smem, size = 0x4, offset = 0x4, fixed_abs, tag = 'smem constant byte address 0x4 - core index']
  #allocation1 [shape = 'u32[144,128]{1,0:T(1,128)}', space=vmem, size = 0x12000, scoped, tag = 'internal scratch']
  %s0 = inlined_call_operand.vmem [shape: f32[2,110,4], index: 0, kind: input, shape index: {}]
  %s1 = inlined_call_operand.vmem [shape: f32[9,4,128], index: 1, kind: input, shape index: {}]
  %s2 = inlined_call_operand.vmem [shape: f32[2,80,128], index: 2, kind: output, shape index: {0}]
  %s3 = inlined_call_operand.vmem [shape: f32[2,128], index: 3, kind: output, shape index: {1}]
  %4 = xla_tuple %s2, %s3
  %s5 = sld [smem:[#allocation0]]
  $region53: #{down_forward.6} parent=0
    _
  %s7 = ssub.s32 1, %s5
  %s8 = scalar_select 0, %s7, %s5
  loop: start=0, step=1, limit=4
  $region2: #{down_forward.6} parent=0 // loop_pre_header
    _
  $region3: #{down_forward.6} parent=0 // loop_header
    %s10 = sphi 0, %s14
    %p11 = scmp.ge.s32.totalorder %s10, 4
    %s20 = sphi 0, %s22
    %s23 = sphi 0, %s20
    %s24 = sphi 0, %s23
    %s40 = sphi 0, %s24
    %s44 = sphi 0, %s44
    %s46 = sphi 0, %s44
    %s47 = sphi 0, %s46
    %s61 = sphi 0, %s47
    %s67 = sphi 0, %s69
    %s70 = sphi 0, %s67
    %s71 = sphi 0, %s70
    %s87 = sphi 0, %s71
    %s91 = sphi 0, %s91
    %s93 = sphi 0, %s91
    %s94 = sphi 0, %s93
    %s108 = sphi 0, %s94
  $region4: #{down_forward.6} parent=0 // loop_header_branch
    %13 = sbr.rel (%p11) target = $region8
  $region5: #{down_forward.6} parent=0 // loop_body
    %s15 = ssub.s32 %s10, 1
    %s16 = ssub.s32 %s10, 2
    %s17 = sadd.s32 %s10, 1
    %s18 = ssub.s32 %s10, %s17
    %p19 = scmp.eq.s32.totalorder %s18, 0
    %s21 = sadd.s32 %s20, 1
    %s22 = scalar_select %p19, %s20, %s21
    %p25 = pneg %p19
    %p26 = scmp.eq.s32.totalorder %s10, 1
    %p27 = por %p25, %p26
    %p28 = scmp.ne.s32.totalorder %s20, %s23
    %p29 = scmp.eq.s32.totalorder %s10, 0
    %p30 = por %p28, %p29
    %p31 = scmp.ne.s32.totalorder %s20, %s23
    %p32 = scmp.eq.s32.totalorder %s15, 1
    %p33 = por %p31, %p32
    %p34 = scmp.ne.s32.totalorder %s23, %s24
    %p35 = scmp.eq.s32.totalorder %s15, 0
    %p36 = por %p34, %p35
    %p37 = scmp.ne.s32.totalorder %s23, %s24
    %p38 = scmp.eq.s32.totalorder %s16, 1
    %p39 = por %p37, %p38
    %p41 = scmp.ne.s32.totalorder %s24, %s40
    %p42 = scmp.eq.s32.totalorder %s16, 0
    %p43 = por %p41, %p42
    %s45 = sadd.s32 %s44, 1
    %p48 = scmp.eq.s32.totalorder %s10, 1
    %p49 = scmp.ne.s32.totalorder %s44, %s46
    %p50 = scmp.eq.s32.totalorder %s10, 0
    %p51 = por %p49, %p50
    %p52 = scmp.ne.s32.totalorder %s44, %s46
    %p53 = scmp.eq.s32.totalorder %s15, 1
    %p54 = por %p52, %p53
    %p55 = scmp.ne.s32.totalorder %s46, %s47
    %p56 = scmp.eq.s32.totalorder %s15, 0
    %p57 = por %p55, %p56
    %p58 = scmp.ne.s32.totalorder %s46, %s47
    %p59 = scmp.eq.s32.totalorder %s16, 1
    %p60 = por %p58, %p59
    %p62 = scmp.ne.s32.totalorder %s47, %s61
    %p63 = scmp.eq.s32.totalorder %s16, 0
    %p64 = por %p62, %p63
    %s65 = ssub.s32 %s10, %s17
    %p66 = scmp.eq.s32.totalorder %s65, 0
    %s68 = sadd.s32 %s67, 1
    %s69 = scalar_select %p66, %s67, %s68
    %p72 = pneg %p66
    %p73 = scmp.eq.s32.totalorder %s10, 1
    %p74 = por %p72, %p73
    %p75 = scmp.ne.s32.totalorder %s67, %s70
    %p76 = scmp.eq.s32.totalorder %s10, 0
    %p77 = por %p75, %p76
    %p78 = scmp.ne.s32.totalorder %s67, %s70
    %p79 = scmp.eq.s32.totalorder %s15, 1
    %p80 = por %p78, %p79
    %p81 = scmp.ne.s32.totalorder %s70, %s71
    %p82 = scmp.eq.s32.totalorder %s15, 0
    %p83 = por %p81, %p82
    %p84 = scmp.ne.s32.totalorder %s70, %s71
    %p85 = scmp.eq.s32.totalorder %s16, 1
    %p86 = por %p84, %p85
    %p88 = scmp.ne.s32.totalorder %s71, %s87
    %p89 = scmp.eq.s32.totalorder %s16, 0
    %p90 = por %p88, %p89
    %s92 = sadd.s32 %s91, 1
    %p95 = scmp.eq.s32.totalorder %s10, 1
    %p96 = scmp.ne.s32.totalorder %s91, %s93
    %p97 = scmp.eq.s32.totalorder %s10, 0
    %p98 = por %p96, %p97
    %p99 = scmp.ne.s32.totalorder %s91, %s93
    %p100 = scmp.eq.s32.totalorder %s15, 1
    %p101 = por %p99, %p100
    %p102 = scmp.ne.s32.totalorder %s93, %s94
    %p103 = scmp.eq.s32.totalorder %s15, 0
    %p104 = por %p102, %p103
    %p105 = scmp.ne.s32.totalorder %s93, %s94
    %p106 = scmp.eq.s32.totalorder %s16, 1
    %p107 = por %p105, %p106
    %p109 = scmp.ne.s32.totalorder %s94, %s108
    %p110 = scmp.eq.s32.totalorder %s16, 0
    %p111 = por %p109, %p110
    %p112 = scmp.le.s32.totalorder 1, %s10
    %p113 = scmp.lt.s32.totalorder %s10, 3
    %p114 = pnand %p112, %p113
    %p115 = pneg %p114
    // Predicated region
    $region9: #{down_forward.6} parent=5 // pred_check
      _
    $region10: #{down_forward.6} parent=5 // pred_check_branch
      %117 = sbr.rel (%p114) target = $region12
    $region11: #{down_forward.6} parent=5 // pred_region
      %s118 = ssub.s32 %s10, 1
      // Predicated region
      $region13: #{down_forward.6} parent=11 // pred_check
        %p119 = pneg %p57
      $region14: #{down_forward.6} parent=11 // pred_check_branch
        %121 = sbr.rel (%p119) target = $region16
      $region15: #{down_forward.6} parent=11 // pred_region
        _
      $region16: #{down_forward.6} parent=11 // pred_fallthru
        _
    $region12: #{down_forward.6} parent=5 // pred_fallthru
      _
    %p122 = scmp.lt.s32.totalorder %s10, 2
    // Predicated region
    $region17: #{down_forward.6} parent=5 // pred_check
      %p123 = pneg %p122
    $region18: #{down_forward.6} parent=5 // pred_check_branch
      %125 = sbr.rel (%p123) target = $region20
    $region19: #{down_forward.6} parent=5 // pred_region
      // Predicated region
      $region21: #{down_forward.6} parent=19 // pred_check
        %p126 = pneg %p30
      $region22: #{down_forward.6} parent=19 // pred_check_branch
        %128 = sbr.rel (%p126) target = $region24
      $region23: #{down_forward.6} parent=19 // pred_region
        %p129 = scmp.lt.s32.totalorder %s10, 1
        %s130 = scalar_select %p129, %s10, 1
        %s131 = smul.addr %s130, 14
        %s132 = smul.addr %s131, 8
        %s133 = scalar_lea.vmem %s0, %s132
      $region24: #{down_forward.6} parent=19 // pred_fallthru
        _
    $region20: #{down_forward.6} parent=5 // pred_fallthru
      _
    %p134 = scmp.le.s32.totalorder 1, %s10
    %p135 = scmp.lt.s32.totalorder %s10, 3
    %p136 = pnand %p134, %p135
    %p137 = pneg %p136
    // Predicated region
    $region25: #{down_forward.6} parent=5 // pred_check
      _
    $region26: #{down_forward.6} parent=5 // pred_check_branch
      %139 = sbr.rel (%p136) target = $region28
    $region27: #{down_forward.6} parent=5 // pred_region
      %s140 = ssub.s32 %s10, 1
      %p141 = scmp.lt.s32.totalorder %s15, 1
      %s142 = scalar_select %p141, %s15, 1
      %s143 = smul.addr %s142, 14
      %s144 = smul.addr %s143, 8
      %s145 = scalar_lea.vmem %s0, %s144
      %p146 = pneg %p36
      %p147 = pneg %p33
      %p148 = pneg %p57
      %p149 = pneg %p54
      %p150 = pneg %p83
      %p151 = pneg %p80
      %p152 = scmp.lt.s32.totalorder %s15, 1
      %s153 = scalar_select %p152, %s15, 1
      %s154 = smul.addr %s153, 10
      %s155 = smul.addr %s154, 8
      %s156 = scalar_lea.vmem %s2, %s155
      %p157 = pneg %p104
      %p158 = pneg %p101
      %p159 = scmp.lt.s32.totalorder %s15, 1
      %s160 = scalar_select %p159, %s15, 1
      %s161 = smul.addr %s160, 14
      %s162 = smul.addr %s161, 8
      %s163 = scalar_lea.vmem %s0, %s162
      %p164 = scmp.lt.s32.totalorder %s15, 1
      %s165 = scalar_select %p164, %s15, 1
      %s166 = smul.addr %s165, 10
      %s167 = smul.addr %s166, 8
      %s168 = scalar_lea.vmem %s2, %s167
      %p169 = scmp.eq.s32.totalorder %s15, 0
      // Predicated region
      $region29: #{down_forward.6} parent=27 // pred_check
        %p170 = pneg %p169
      $region30: #{down_forward.6} parent=27 // pred_check_branch
        %172 = sbr.rel (%p170) target = $region32
      $region31: #{down_forward.6} parent=27 // pred_region
        %173 = vst [vmem:[%s3] sm:$0x3] 0.0
      $region32: #{down_forward.6} parent=27 // pred_fallthru
        _
      %v174 = vld [vmem:[%s163] sm:$0xff]
      %v175 = vld [vmem:[%s163 + $0x8] sm:$0xff]
      %v176 = vld [vmem:[%s163 + $0x10] sm:$0xff]
      %v177 = vld [vmem:[%s163 + $0x18] sm:$0xff]
      %v178 = vld [vmem:[%s163 + $0x20] sm:$0xff]
      %v179 = vld [vmem:[%s163 + $0x28] sm:$0xff]
      %v180 = vld [vmem:[%s163 + $0x30] sm:$0xff]
      %v181 = vld [vmem:[%s163 + $0x38] sm:$0xff]
      %v182 = vld [vmem:[%s163 + $0x40] sm:$0xff]
      %v183 = vld [vmem:[%s163 + $0x48] sm:$0xff]
      %v184 = vld [vmem:[%s1] sm:$0xf]
      %v185 = vld [vmem:[%s163 + $0x1] sm:$0xff]
      %v186 = vld [vmem:[%s163 + $0x9] sm:$0xff]
      %v187 = vld [vmem:[%s163 + $0x11] sm:$0xff]
      %v188 = vld [vmem:[%s163 + $0x19] sm:$0xff]
      %v189 = vld [vmem:[%s163 + $0x21] sm:$0xff]
      %v190 = vld [vmem:[%s163 + $0x29] sm:$0xff]
      %v191 = vld [vmem:[%s163 + $0x31] sm:$0xff]
      %v192 = vld [vmem:[%s163 + $0x39] sm:$0xff]
      %v193 = vld [vmem:[%s163 + $0x41] sm:$0xff]
      %v194 = vld [vmem:[%s163 + $0x49] sm:$0xff]
      %s195 = scalar_lea.vmem %s1, 4
      %v196 = vld [vmem:[%s195] sm:$0xf]
      %vm197 = vcmask 31744
      %v199 = vsel %vm197, %v185, 0
      %v202 = vsel %vm197, %v186, 0
      %v205 = vsel %vm197, %v187, 0
      %v208 = vsel %vm197, %v188, 0
      %v211 = vsel %vm197, %v189, 0
      %v214 = vsel %vm197, %v190, 0
      %v217 = vsel %vm197, %v191, 0
      %v220 = vsel %vm197, %v192, 0
      %v223 = vsel %vm197, %v193, 0
      %v226 = vsel %vm197, %v194, 0
      %vm228 = vcmask 1043456
      %v230 = vsel %vm228, %v196, 0
      %232 = vmatprep.subr.mxu0 0.0
      %233 = vmatpush1.msra.mxu0 %v230
      %234 = vmatprep.subr.mxu0 0.0
      %235 = vmatpush1.msra.mxu0 0.0
      %236 = vmatprep.subr.mxu0 0.0
      %237 = vmatpush1.msra.mxu0 0.0
      %238 = vmatprep.subr.mxu0 0.0
      %239 = vmatpush1.msra.mxu0 0.0
      %240 = vmatprep.subr.mxu0 0.0
      %241 = vmatpush1.msra.mxu0 0.0
      %242 = vmatprep.subr.mxu0 0.0
      %243 = vmatpush1.msra.mxu0 0.0
      %244 = vmatprep.subr.mxu0 0.0
      %245 = vmatpush1.msra.mxu0 0.0
      %246 = vmatprep.subr.mxu0 0.0
      %247 = vmatpush1.msra.mxu0 0.0
      %248 = vmatprep.subr.mxu0 0.0
      %249 = vmatpush1.msra.mxu0 0.0
      %250 = vmatprep.subr.mxu0 0.0
      %251 = vmatpush1.msra.mxu0 0.0
      %252 = vmatprep.subr.mxu0 0.0
      %253 = vmatpush1.msra.mxu0 0.0
      %254 = vmatprep.subr.mxu0 0.0
      %255 = vmatpush1.msra.mxu0 0.0
      %256 = vmatprep.subr.mxu0 0.0
      %257 = vmatpush1.msra.mxu0 0.0
      %258 = vmatprep.subr.mxu0 0.0
      %259 = vmatpush1.msra.mxu0 0.0
      %260 = vmatprep.subr.mxu0 0.0
      %261 = vmatpush1.msra.mxu0 0.0
      %262 = vmatprep.subr.mxu0 0.0
      %263 = vmatpush1.msra.mxu0 0.0
      %264 = vmatprep.subr.mxu0 0.0
      %265 = vmatpush1.msra.mxu0 0.0
      %266 = vmatprep.subr.mxu0 0.0
      %267 = vmatpush1.msra.mxu0 0.0
      %268 = vmatprep.subr.mxu0 0.0
      %269 = vmatpush1.msra.mxu0 0.0
      %270 = vmatprep.subr.mxu0 0.0
      %271 = vmatpush1.msra.mxu0 0.0
      %272 = vmatprep.subr.mxu0 0.0
      %273 = vmatpush1.msra.mxu0 0.0
      %274 = vmatprep.subr.mxu0 0.0
      %275 = vmatpush1.msra.mxu0 0.0
      %276 = vmatprep.subr.mxu0 0.0
      %277 = vmatpush1.msra.mxu0 0.0
      %278 = vmatprep.subr.mxu0 0.0
      %279 = vmatpush1.msra.mxu0 0.0
      %280 = vmatprep.subr.mxu0 0.0
      %281 = vmatpush1.msra.mxu0 0.0
      %282 = vmatprep.subr.mxu0 0.0
      %283 = vmatpush1.msra.mxu0 0.0
      %284 = vmatprep.subr.mxu0 0.0
      %285 = vmatpush1.msra.mxu0 0.0
      %286 = vmatprep.subr.mxu0 0.0
      %287 = vmatpush1.msra.mxu0 0.0
      %288 = vmatprep.subr.mxu0 0.0
      %289 = vmatpush1.msra.mxu0 0.0
      %290 = vmatprep.subr.mxu0 0.0
      %291 = vmatpush1.msra.mxu0 0.0
      %292 = vmatprep.subr.mxu0 0.0
      %293 = vmatpush1.msra.mxu0 0.0
      %294 = vmatprep.subr.mxu0 0.0
      %295 = vmatpush1.msra.mxu0 0.0
      %296 = vmatprep.mubr.f32.mxu0 0.0
      %297 = vmatmul.mubr.f32.gmra.mrb[0].mxu0 %v199
      %v298 = vpop.f32.mrb[0].mxu0
      %v299 = vadd.f32 0.0, %v298
      %v300 = vpop.f32.mrb[0].mxu0
      %301 = vmatprep.mubr.f32.mxu0 0.0
      %302 = vmatmul.mubr.f32.gmra.mrb[0].mxu0 %v202
      %v303 = vpop.f32.mrb[0].mxu0
      %v304 = vadd.f32 0.0, %v303
      %v305 = vpop.f32.mrb[0].mxu0
      %306 = vmatprep.mubr.f32.mxu0 0.0
      %307 = vmatmul.mubr.f32.gmra.mrb[0].mxu0 %v205
      %v308 = vpop.f32.mrb[0].mxu0
      %v309 = vadd.f32 0.0, %v308
      %v310 = vpop.f32.mrb[0].mxu0
      %311 = vmatprep.mubr.f32.mxu0 0.0
      %312 = vmatmul.mubr.f32.gmra.mrb[0].mxu0 %v208
      %v313 = vpop.f32.mrb[0].mxu0
      %v314 = vadd.f32 0.0, %v313
      %v315 = vpop.f32.mrb[0].mxu0
      %316 = vmatprep.mubr.f32.mxu0 0.0
      %317 = vmatmul.mubr.f32.gmra.mrb[0].mxu0 %v211
      %v318 = vpop.f32.mrb[0].mxu0
      %v319 = vadd.f32 0.0, %v318
      %v320 = vpop.f32.mrb[0].mxu0
      %321 = vmatprep.mubr.f32.mxu0 0.0
      %322 = vmatmul.mubr.f32.gmra.mrb[0].mxu0 %v214
      %v323 = vpop.f32.mrb[0].mxu0
      %v324 = vadd.f32 0.0, %v323
      %v325 = vpop.f32.mrb[0].mxu0
      %326 = vmatprep.mubr.f32.mxu0 0.0
      %327 = vmatmul.mubr.f32.gmra.mrb[0].mxu0 %v217
      %v328 = vpop.f32.mrb[0].mxu0
      %v329 = vadd.f32 0.0, %v328
      %v330 = vpop.f32.mrb[0].mxu0
      %331 = vmatprep.mubr.f32.mxu0 0.0
      %332 = vmatmul.mubr.f32.gmra.mrb[0].mxu0 %v220
      %v333 = vpop.f32.mrb[0].mxu0
      %v334 = vadd.f32 0.0, %v333
      %v335 = vpop.f32.mrb[0].mxu0
      %336 = vmatprep.mubr.f32.mxu0 0.0
      %337 = vmatmul.mubr.f32.gmra.mrb[0].mxu0 %v223
      %v338 = vpop.f32.mrb[0].mxu0
      %v339 = vadd.f32 0.0, %v338
      %v340 = vpop.f32.mrb[0].mxu0
      %341 = vmatprep.mubr.f32.mxu0 0.0
      %342 = vmatmul.mubr.f32.gmra.mrb[0].mxu0 %v226
      %v343 = vpop.f32.mrb[0].mxu0
      %v344 = vadd.f32 0.0, %v343
      %v345 = vpop.f32.mrb[0].mxu0
      %346 = vdwg.mxu0
      %v348 = vsel %vm197, %v174, 0
      %v351 = vsel %vm197, %v175, 0
      %v354 = vsel %vm197, %v176, 0
      %v357 = vsel %vm197, %v177, 0
      %v360 = vsel %vm197, %v178, 0
      %v363 = vsel %vm197, %v179, 0
      %v366 = vsel %vm197, %v180, 0
      %v369 = vsel %vm197, %v181, 0
      %v372 = vsel %vm197, %v182, 0
      %v375 = vsel %vm197, %v183, 0
      %v378 = vsel %vm228, %v184, 0
      %380 = vmatprep.subr.mxu0 0.0
      %381 = vmatpush1.msra.mxu0 %v378
      %382 = vmatprep.subr.mxu0 0.0
      %383 = vmatpush1.msra.mxu0 0.0
      %384 = vmatprep.subr.mxu0 0.0
      %385 = vmatpush1.msra.mxu0 0.0
      %386 = vmatprep.subr.mxu0 0.0
      %387 = vmatpush1.msra.mxu0 0.0
      %388 = vmatprep.subr.mxu0 0.0
      %389 = vmatpush1.msra.mxu0 0.0
      %390 = vmatprep.subr.mxu0 0.0
      %391 = vmatpush1.msra.mxu0 0.0
      %392 = vmatprep.subr.mxu0 0.0
      %393 = vmatpush1.msra.mxu0 0.0
      %394 = vmatprep.subr.mxu0 0.0
      %395 = vmatpush1.msra.mxu0 0.0
      %396 = vmatprep.subr.mxu0 0.0
      %397 = vmatpush1.msra.mxu0 0.0
      %398 = vmatprep.subr.mxu0 0.0
      %399 = vmatpush1.msra.mxu0 0.0
      %400 = vmatprep.subr.mxu0 0.0
      %401 = vmatpush1.msra.mxu0 0.0
      %402 = vmatprep.subr.mxu0 0.0
      %403 = vmatpush1.msra.mxu0 0.0
      %404 = vmatprep.subr.mxu0 0.0
      %405 = vmatpush1.msra.mxu0 0.0
      %406 = vmatprep.subr.mxu0 0.0
      %407 = vmatpush1.msra.mxu0 0.0
      %408 = vmatprep.subr.mxu0 0.0
      %409 = vmatpush1.msra.mxu0 0.0
      %410 = vmatprep.subr.mxu0 0.0
      %411 = vmatpush1.msra.mxu0 0.0
      %412 = vmatprep.subr.mxu0 0.0
      %413 = vmatpush1.msra.mxu0 0.0
      %414 = vmatprep.subr.mxu0 0.0
      %415 = vmatpush1.msra.mxu0 0.0
      %416 = vmatprep.subr.mxu0 0.0
      %417 = vmatpush1.msra.mxu0 0.0
      %418 = vmatprep.subr.mxu0 0.0
      %419 = vmatpush1.msra.mxu0 0.0
      %420 = vmatprep.subr.mxu0 0.0
      %421 = vmatpush1.msra.mxu0 0.0
      %422 = vmatprep.subr.mxu0 0.0
      %423 = vmatpush1.msra.mxu0 0.0
      %424 = vmatprep.subr.mxu0 0.0
      %425 = vmatpush1.msra.mxu0 0.0
      %426 = vmatprep.subr.mxu0 0.0
      %427 = vmatpush1.msra.mxu0 0.0
      %428 = vmatprep.subr.mxu0 0.0
      %429 = vmatpush1.msra.mxu0 0.0
      %430 = vmatprep.subr.mxu0 0.0
      %431 = vmatpush1.msra.mxu0 0.0
      %432 = vmatprep.subr.mxu0 0.0
      %433 = vmatpush1.msra.mxu0 0.0
      %434 = vmatprep.subr.mxu0 0.0
      %435 = vmatpush1.msra.mxu0 0.0
      %436 = vmatprep.subr.mxu0 0.0
      %437 = vmatpush1.msra.mxu0 0.0
      %438 = vmatprep.subr.mxu0 0.0
      %439 = vmatpush1.msra.mxu0 0.0
      %440 = vmatprep.subr.mxu0 0.0
      %441 = vmatpush1.msra.mxu0 0.0
      %442 = vmatprep.subr.mxu0 0.0
      %443 = vmatpush1.msra.mxu0 0.0
      %444 = vmatprep.mubr.f32.mxu0 0.0
      %445 = vmatmul.mubr.f32.gmra.mrb[0].mxu0 %v348
      %v446 = vpop.f32.mrb[0].mxu0
      %v447 = vadd.f32 %v299, %v446
      %v448 = vpop.f32.mrb[0].mxu0
      %449 = vmatprep.mubr.f32.mxu0 0.0
      %450 = vmatmul.mubr.f32.gmra.mrb[0].mxu0 %v351
      %v451 = vpop.f32.mrb[0].mxu0
      %v452 = vadd.f32 %v304, %v451
      %v453 = vpop.f32.mrb[0].mxu0
      %454 = vmatprep.mubr.f32.mxu0 0.0
      %455 = vmatmul.mubr.f32.gmra.mrb[0].mxu0 %v354
      %v456 = vpop.f32.mrb[0].mxu0
      %v457 = vadd.f32 %v309, %v456
      %v458 = vpop.f32.mrb[0].mxu0
      %459 = vmatprep.mubr.f32.mxu0 0.0
      %460 = vmatmul.mubr.f32.gmra.mrb[0].mxu0 %v357
      %v461 = vpop.f32.mrb[0].mxu0
      %v462 = vadd.f32 %v314, %v461
      %v463 = vpop.f32.mrb[0].mxu0
      %464 = vmatprep.mubr.f32.mxu0 0.0
      %465 = vmatmul.mubr.f32.gmra.mrb[0].mxu0 %v360
      %v466 = vpop.f32.mrb[0].mxu0
      %v467 = vadd.f32 %v319, %v466
      %v468 = vpop.f32.mrb[0].mxu0
      %469 = vmatprep.mubr.f32.mxu0 0.0
      %470 = vmatmul.mubr.f32.gmra.mrb[0].mxu0 %v363
      %v471 = vpop.f32.mrb[0].mxu0
      %v472 = vadd.f32 %v324, %v471
      %v473 = vpop.f32.mrb[0].mxu0
      %474 = vmatprep.mubr.f32.mxu0 0.0
      %475 = vmatmul.mubr.f32.gmra.mrb[0].mxu0 %v366
      %v476 = vpop.f32.mrb[0].mxu0
      %v477 = vadd.f32 %v329, %v476
      %v478 = vpop.f32.mrb[0].mxu0
      %479 = vmatprep.mubr.f32.mxu0 0.0
      %480 = vmatmul.mubr.f32.gmra.mrb[0].mxu0 %v369
      %v481 = vpop.f32.mrb[0].mxu0
      %v482 = vadd.f32 %v334, %v481
      %v483 = vpop.f32.mrb[0].mxu0
      %484 = vmatprep.mubr.f32.mxu0 0.0
      %485 = vmatmul.mubr.f32.gmra.mrb[0].mxu0 %v372
      %v486 = vpop.f32.mrb[0].mxu0
      %v487 = vadd.f32 %v339, %v486
      %v488 = vpop.f32.mrb[0].mxu0
      %489 = vmatprep.mubr.f32.mxu0 0.0
      %490 = vmatmul.mubr.f32.gmra.mrb[0].mxu0 %v375
      %v491 = vpop.f32.mrb[0].mxu0
      %v492 = vadd.f32 %v344, %v491
      %v493 = vpop.f32.mrb[0].mxu0
      %494 = vdwg.mxu0
      %v495 = vld [vmem:[%s163 + $0x2] sm:$0xff]
      %v496 = vld [vmem:[%s163 + $0xa] sm:$0xff]
      %v497 = vld [vmem:[%s163 + $0x12] sm:$0xff]
      %v498 = vld [vmem:[%s163 + $0x1a] sm:$0xff]
      %v499 = vld [vmem:[%s163 + $0x22] sm:$0xff]
      %v500 = vld [vmem:[%s163 + $0x2a] sm:$0xff]
      %v501 = vld [vmem:[%s163 + $0x32] sm:$0xff]
      %v502 = vld [vmem:[%s163 + $0x3a] sm:$0xff]
      %v503 = vld [vmem:[%s163 + $0x42] sm:$0xff]
      %v504 = vld [vmem:[%s163 + $0x4a] sm:$0xff]
      %s505 = scalar_lea.vmem %s1, 8
      %v506 = vld [vmem:[%s505] sm:$0xf]
      %v508 = vsel %vm197, %v495, 0
      %v511 = vsel %vm197, %v496, 0
      %v514 = vsel %vm197, %v497, 0
      %v517 = vsel %vm197, %v498, 0
      %v520 = vsel %vm197, %v499, 0
      %v523 = vsel %vm197, %v500, 0
      %v526 = vsel %vm197, %v501, 0
      %v529 = vsel %vm197, %v502, 0
      %v532 = vsel %vm197, %v503, 0
      %v535 = vsel %vm197, %v504, 0
      %v538 = vsel %vm228, %v506, 0
      %540 = vmatprep.subr.mxu0 0.0
      %541 = vmatpush1.msra.mxu0 %v538
      %542 = vmatprep.subr.mxu0 0.0
      %543 = vmatpush1.msra.mxu0 0.0
      %544 = vmatprep.subr.mxu0 0.0
      %545 = vmatpush1.msra.mxu0 0.0
      %546 = vmatprep.subr.mxu0 0.0
      %547 = vmatpush1.msra.mxu0 0.0
      %548 = vmatprep.subr.mxu0 0.0
      %549 = vmatpush1.msra.mxu0 0.0
      %550 = vmatprep.subr.mxu0 0.0
      %551 = vmatpush1.msra.mxu0 0.0
      %552 = vmatprep.subr.mxu0 0.0
      %553 = vmatpush1.msra.mxu0 0.0
      %554 = vmatprep.subr.mxu0 0.0
      %555 = vmatpush1.msra.mxu0 0.0
      %556 = vmatprep.subr.mxu0 0.0
      %557 = vmatpush1.msra.mxu0 0.0
      %558 = vmatprep.subr.mxu0 0.0
      %559 = vmatpush1.msra.mxu0 0.0
      %560 = vmatprep.subr.mxu0 0.0
      %561 = vmatpush1.msra.mxu0 0.0
      %562 = vmatprep.subr.mxu0 0.0
      %563 = vmatpush1.msra.mxu0 0.0
      %564 = vmatprep.subr.mxu0 0.0
      %565 = vmatpush1.msra.mxu0 0.0
      %566 = vmatprep.subr.mxu0 0.0
      %567 = vmatpush1.msra.mxu0 0.0
      %568 = vmatprep.subr.mxu0 0.0
      %569 = vmatpush1.msra.mxu0 0.0
      %570 = vmatprep.subr.mxu0 0.0
      %571 = vmatpush1.msra.mxu0 0.0
      %572 = vmatprep.subr.mxu0 0.0
      %573 = vmatpush1.msra.mxu0 0.0
      %574 = vmatprep.subr.mxu0 0.0
      %575 = vmatpush1.msra.mxu0 0.0
      %576 = vmatprep.subr.mxu0 0.0
      %577 = vmatpush1.msra.mxu0 0.0
      %578 = vmatprep.subr.mxu0 0.0
      %579 = vmatpush1.msra.mxu0 0.0
      %580 = vmatprep.subr.mxu0 0.0
      %581 = vmatpush1.msra.mxu0 0.0
      %582 = vmatprep.subr.mxu0 0.0
      %583 = vmatpush1.msra.mxu0 0.0
      %584 = vmatprep.subr.mxu0 0.0
      %585 = vmatpush1.msra.mxu0 0.0
      %586 = vmatprep.subr.mxu0 0.0
      %587 = vmatpush1.msra.mxu0 0.0
      %588 = vmatprep.subr.mxu0 0.0
      %589 = vmatpush1.msra.mxu0 0.0
      %590 = vmatprep.subr.mxu0 0.0
      %591 = vmatpush1.msra.mxu0 0.0
      %592 = vmatprep.subr.mxu0 0.0
      %593 = vmatpush1.msra.mxu0 0.0
      %594 = vmatprep.subr.mxu0 0.0
      %595 = vmatpush1.msra.mxu0 0.0
      %596 = vmatprep.subr.mxu0 0.0
      %597 = vmatpush1.msra.mxu0 0.0
      %598 = vmatprep.subr.mxu0 0.0
      %599 = vmatpush1.msra.mxu0 0.0
      %600 = vmatprep.subr.mxu0 0.0
      %601 = vmatpush1.msra.mxu0 0.0
      %602 = vmatprep.subr.mxu0 0.0
      %603 = vmatpush1.msra.mxu0 0.0
      %604 = vmatprep.mubr.f32.mxu0 0.0
      %605 = vmatmul.mubr.f32.gmra.mrb[0].mxu0 %v508
      %v606 = vpop.f32.mrb[0].mxu0
      %v607 = vadd.f32 0.0, %v606
      %v608 = vpop.f32.mrb[0].mxu0
      %609 = vmatprep.mubr.f32.mxu0 0.0
      %610 = vmatmul.mubr.f32.gmra.mrb[0].mxu0 %v511
      %v611 = vpop.f32.mrb[0].mxu0
      %v612 = vadd.f32 0.0, %v611
      %v613 = vpop.f32.mrb[0].mxu0
      %614 = vmatprep.mubr.f32.mxu0 0.0
      %615 = vmatmul.mubr.f32.gmra.mrb[0].mxu0 %v514
      %v616 = vpop.f32.mrb[0].mxu0
      %v617 = vadd.f32 0.0, %v616
      %v618 = vpop.f32.mrb[0].mxu0
      %619 = vmatprep.mubr.f32.mxu0 0.0
      %620 = vmatmul.mubr.f32.gmra.mrb[0].mxu0 %v517
      %v621 = vpop.f32.mrb[0].mxu0
      %v622 = vadd.f32 0.0, %v621
      %v623 = vpop.f32.mrb[0].mxu0
      %624 = vmatprep.mubr.f32.mxu0 0.0
      %625 = vmatmul.mubr.f32.gmra.mrb[0].mxu0 %v520
      %v626 = vpop.f32.mrb[0].mxu0
      %v627 = vadd.f32 0.0, %v626
      %v628 = vpop.f32.mrb[0].mxu0
      %629 = vmatprep.mubr.f32.mxu0 0.0
      %630 = vmatmul.mubr.f32.gmra.mrb[0].mxu0 %v523
      %v631 = vpop.f32.mrb[0].mxu0
      %v632 = vadd.f32 0.0, %v631
      %v633 = vpop.f32.mrb[0].mxu0
      %634 = vmatprep.mubr.f32.mxu0 0.0
      %635 = vmatmul.mubr.f32.gmra.mrb[0].mxu0 %v526
      %v636 = vpop.f32.mrb[0].mxu0
      %v637 = vadd.f32 0.0, %v636
      %v638 = vpop.f32.mrb[0].mxu0
      %639 = vmatprep.mubr.f32.mxu0 0.0
      %640 = vmatmul.mubr.f32.gmra.mrb[0].mxu0 %v529
      %v641 = vpop.f32.mrb[0].mxu0
      %v642 = vadd.f32 0.0, %v641
      %v643 = vpop.f32.mrb[0].mxu0
      %644 = vmatprep.mubr.f32.mxu0 0.0
      %645 = vmatmul.mubr.f32.gmra.mrb[0].mxu0 %v532
      %v646 = vpop.f32.mrb[0].mxu0
      %v647 = vadd.f32 0.0, %v646
      %v648 = vpop.f32.mrb[0].mxu0
      %649 = vmatprep.mubr.f32.mxu0 0.0
      %650 = vmatmul.mubr.f32.gmra.mrb[0].mxu0 %v535
      %v651 = vpop.f32.mrb[0].mxu0
      %v652 = vadd.f32 0.0, %v651
      %v653 = vpop.f32.mrb[0].mxu0
      %654 = vdwg.mxu0
      %v655 = vadd.f32 %v447, %v607
      %v656 = vadd.f32 %v452, %v612
      %v657 = vadd.f32 %v457, %v617
      %v658 = vadd.f32 %v462, %v622
      %v659 = vadd.f32 %v467, %v627
      %v660 = vadd.f32 %v472, %v632
      %v661 = vadd.f32 %v477, %v637
      %v662 = vadd.f32 %v482, %v642
      %v663 = vadd.f32 %v487, %v647
      %v664 = vadd.f32 %v492, %v652
      %v665 = vld [vmem:[%s163 + $0xa] sm:$0xff]
      %v666 = vld [vmem:[%s163 + $0x12] sm:$0xff]
      %v667 = vld [vmem:[%s163 + $0x1a] sm:$0xff]
      %v668 = vld [vmem:[%s163 + $0x22] sm:$0xff]
      %v669 = vld [vmem:[%s163 + $0x2a] sm:$0xff]
      %v670 = vld [vmem:[%s163 + $0x32] sm:$0xff]
      %v671 = vld [vmem:[%s163 + $0x3a] sm:$0xff]
      %v672 = vld [vmem:[%s163 + $0x42] sm:$0xff]
      %v673 = vld [vmem:[%s163 + $0x4a] sm:$0xff]
      %v674 = vld [vmem:[%s163 + $0x52] sm:$0xff]
      %s675 = scalar_lea.vmem %s1, 12
      %v676 = vld [vmem:[%s675] sm:$0xf]
      %v678 = vsel %vm197, %v665, 0
      %v681 = vsel %vm197, %v666, 0
      %v684 = vsel %vm197, %v667, 0
      %v687 = vsel %vm197, %v668, 0
      %v690 = vsel %vm197, %v669, 0
      %v693 = vsel %vm197, %v670, 0
      %v696 = vsel %vm197, %v671, 0
      %v699 = vsel %vm197, %v672, 0
      %v702 = vsel %vm197, %v673, 0
      %v705 = vsel %vm197, %v674, 0
      %v708 = vsel %vm228, %v676, 0
      %710 = vmatprep.subr.mxu0 0.0
      %711 = vmatpush1.msra.mxu0 %v708
      %712 = vmatprep.subr.mxu0 0.0
      %713 = vmatpush1.msra.mxu0 0.0
      %714 = vmatprep.subr.mxu0 0.0
      %715 = vmatpush1.msra.mxu0 0.0
      %716 = vmatprep.subr.mxu0 0.0
      %717 = vmatpush1.msra.mxu0 0.0
      %718 = vmatprep.subr.mxu0 0.0
      %719 = vmatpush1.msra.mxu0 0.0
      %720 = vmatprep.subr.mxu0 0.0
      %721 = vmatpush1.msra.mxu0 0.0
      %722 = vmatprep.subr.mxu0 0.0
      %723 = vmatpush1.msra.mxu0 0.0
      %724 = vmatprep.subr.mxu0 0.0
      %725 = vmatpush1.msra.mxu0 0.0
      %726 = vmatprep.subr.mxu0 0.0
      %727 = vmatpush1.msra.mxu0 0.0
      %728 = vmatprep.subr.mxu0 0.0
      %729 = vmatpush1.msra.mxu0 0.0
      %730 = vmatprep.subr.mxu0 0.0
      %731 = vmatpush1.msra.mxu0 0.0
      %732 = vmatprep.subr.mxu0 0.0
      %733 = vmatpush1.msra.mxu0 0.0
      %734 = vmatprep.subr.mxu0 0.0
      %735 = vmatpush1.msra.mxu0 0.0
      %736 = vmatprep.subr.mxu0 0.0
      %737 = vmatpush1.msra.mxu0 0.0
      %738 = vmatprep.subr.mxu0 0.0
      %739 = vmatpush1.msra.mxu0 0.0
      %740 = vmatprep.subr.mxu0 0.0
      %741 = vmatpush1.msra.mxu0 0.0
      %742 = vmatprep.subr.mxu0 0.0
      %743 = vmatpush1.msra.mxu0 0.0
      %744 = vmatprep.subr.mxu0 0.0
      %745 = vmatpush1.msra.mxu0 0.0
      %746 = vmatprep.subr.mxu0 0.0
      %747 = vmatpush1.msra.mxu0 0.0
      %748 = vmatprep.subr.mxu0 0.0
      %749 = vmatpush1.msra.mxu0 0.0
      %750 = vmatprep.subr.mxu0 0.0
      %751 = vmatpush1.msra.mxu0 0.0
      %752 = vmatprep.subr.mxu0 0.0
      %753 = vmatpush1.msra.mxu0 0.0
      %754 = vmatprep.subr.mxu0 0.0
      %755 = vmatpush1.msra.mxu0 0.0
      %756 = vmatprep.subr.mxu0 0.0
      %757 = vmatpush1.msra.mxu0 0.0
      %758 = vmatprep.subr.mxu0 0.0
      %759 = vmatpush1.msra.mxu0 0.0
      %760 = vmatprep.subr.mxu0 0.0
      %761 = vmatpush1.msra.mxu0 0.0
      %762 = vmatprep.subr.mxu0 0.0
      %763 = vmatpush1.msra.mxu0 0.0
      %764 = vmatprep.subr.mxu0 0.0
      %765 = vmatpush1.msra.mxu0 0.0
      %766 = vmatprep.subr.mxu0 0.0
      %767 = vmatpush1.msra.mxu0 0.0
      %768 = vmatprep.subr.mxu0 0.0
      %769 = vmatpush1.msra.mxu0 0.0
      %770 = vmatprep.subr.mxu0 0.0
      %771 = vmatpush1.msra.mxu0 0.0
      %772 = vmatprep.subr.mxu0 0.0
      %773 = vmatpush1.msra.mxu0 0.0
      %774 = vmatprep.mubr.f32.mxu0 0.0
      %775 = vmatmul.mubr.f32.gmra.mrb[0].mxu0 %v678
      %v776 = vpop.f32.mrb[0].mxu0
      %v777 = vadd.f32 0.0, %v776
      %v778 = vpop.f32.mrb[0].mxu0
      %779 = vmatprep.mubr.f32.mxu0 0.0
      %780 = vmatmul.mubr.f32.gmra.mrb[0].mxu0 %v681
      %v781 = vpop.f32.mrb[0].mxu0
      %v782 = vadd.f32 0.0, %v781
      %v783 = vpop.f32.mrb[0].mxu0
      %784 = vmatprep.mubr.f32.mxu0 0.0
      %785 = vmatmul.mubr.f32.gmra.mrb[0].mxu0 %v684
      %v786 = vpop.f32.mrb[0].mxu0
      %v787 = vadd.f32 0.0, %v786
      %v788 = vpop.f32.mrb[0].mxu0
      %789 = vmatprep.mubr.f32.mxu0 0.0
      %790 = vmatmul.mubr.f32.gmra.mrb[0].mxu0 %v687
      %v791 = vpop.f32.mrb[0].mxu0
      %v792 = vadd.f32 0.0, %v791
      %v793 = vpop.f32.mrb[0].mxu0
      %794 = vmatprep.mubr.f32.mxu0 0.0
      %795 = vmatmul.mubr.f32.gmra.mrb[0].mxu0 %v690
      %v796 = vpop.f32.mrb[0].mxu0
      %v797 = vadd.f32 0.0, %v796
      %v798 = vpop.f32.mrb[0].mxu0
      %799 = vmatprep.mubr.f32.mxu0 0.0
      %800 = vmatmul.mubr.f32.gmra.mrb[0].mxu0 %v693
      %v801 = vpop.f32.mrb[0].mxu0
      %v802 = vadd.f32 0.0, %v801
      %v803 = vpop.f32.mrb[0].mxu0
      %804 = vmatprep.mubr.f32.mxu0 0.0
      %805 = vmatmul.mubr.f32.gmra.mrb[0].mxu0 %v696
      %v806 = vpop.f32.mrb[0].mxu0
      %v807 = vadd.f32 0.0, %v806
      %v808 = vpop.f32.mrb[0].mxu0
      %809 = vmatprep.mubr.f32.mxu0 0.0
      %810 = vmatmul.mubr.f32.gmra.mrb[0].mxu0 %v699
      %v811 = vpop.f32.mrb[0].mxu0
      %v812 = vadd.f32 0.0, %v811
      %v813 = vpop.f32.mrb[0].mxu0
      %814 = vmatprep.mubr.f32.mxu0 0.0
      %815 = vmatmul.mubr.f32.gmra.mrb[0].mxu0 %v702
      %v816 = vpop.f32.mrb[0].mxu0
      %v817 = vadd.f32 0.0, %v816
      %v818 = vpop.f32.mrb[0].mxu0
      %819 = vmatprep.mubr.f32.mxu0 0.0
      %820 = vmatmul.mubr.f32.gmra.mrb[0].mxu0 %v705
      %v821 = vpop.f32.mrb[0].mxu0
      %v822 = vadd.f32 0.0, %v821
      %v823 = vpop.f32.mrb[0].mxu0
      %824 = vdwg.mxu0
      %v825 = vadd.f32 %v655, %v777
      %v826 = vadd.f32 %v656, %v782
      %v827 = vadd.f32 %v657, %v787
      %v828 = vadd.f32 %v658, %v792
      %v829 = vadd.f32 %v659, %v797
      %v830 = vadd.f32 %v660, %v802
      %v831 = vadd.f32 %v661, %v807
      %v832 = vadd.f32 %v662, %v812
      %v833 = vadd.f32 %v663, %v817
      %v834 = vadd.f32 %v664, %v822
      %v835 = vld [vmem:[%s163 + $0xb] sm:$0xff]
      %v836 = vld [vmem:[%s163 + $0x13] sm:$0xff]
      %v837 = vld [vmem:[%s163 + $0x1b] sm:$0xff]
      %v838 = vld [vmem:[%s163 + $0x23] sm:$0xff]
      %v839 = vld [vmem:[%s163 + $0x2b] sm:$0xff]
      %v840 = vld [vmem:[%s163 + $0x33] sm:$0xff]
      %v841 = vld [vmem:[%s163 + $0x3b] sm:$0xff]
      %v842 = vld [vmem:[%s163 + $0x43] sm:$0xff]
      %v843 = vld [vmem:[%s163 + $0x4b] sm:$0xff]
      %v844 = vld [vmem:[%s163 + $0x53] sm:$0xff]
      %s845 = scalar_lea.vmem %s1, 16
      %v846 = vld [vmem:[%s845] sm:$0xf]
      %v848 = vsel %vm197, %v835, 0
      %v851 = vsel %vm197, %v836, 0
      %v854 = vsel %vm197, %v837, 0
      %v857 = vsel %vm197, %v838, 0
      %v860 = vsel %vm197, %v839, 0
      %v863 = vsel %vm197, %v840, 0
      %v866 = vsel %vm197, %v841, 0
      %v869 = vsel %vm197, %v842, 0
      %v872 = vsel %vm197, %v843, 0
      %v875 = vsel %vm197, %v844, 0
      %v878 = vsel %vm228, %v846, 0
      %880 = vmatprep.subr.mxu0 0.0
      %881 = vmatpush1.msra.mxu0 %v878
      %882 = vmatprep.subr.mxu0 0.0
      %883 = vmatpush1.msra.mxu0 0.0
      %884 = vmatprep.subr.mxu0 0.0
      %885 = vmatpush1.msra.mxu0 0.0
      %886 = vmatprep.subr.mxu0 0.0
      %887 = vmatpush1.msra.mxu0 0.0
      %888 = vmatprep.subr.mxu0 0.0
      %889 = vmatpush1.msra.mxu0 0.0
      %890 = vmatprep.subr.mxu0 0.0
      %891 = vmatpush1.msra.mxu0 0.0
      %892 = vmatprep.subr.mxu0 0.0
      %893 = vmatpush1.msra.mxu0 0.0
      %894 = vmatprep.subr.mxu0 0.0
      %895 = vmatpush1.msra.mxu0 0.0
      %896 = vmatprep.subr.mxu0 0.0
      %897 = vmatpush1.msra.mxu0 0.0
      %898 = vmatprep.subr.mxu0 0.0
      %899 = vmatpush1.msra.mxu0 0.0
      %900 = vmatprep.subr.mxu0 0.0
      %901 = vmatpush1.msra.mxu0 0.0
      %902 = vmatprep.subr.mxu0 0.0
      %903 = vmatpush1.msra.mxu0 0.0
      %904 = vmatprep.subr.mxu0 0.0
      %905 = vmatpush1.msra.mxu0 0.0
      %906 = vmatprep.subr.mxu0 0.0
      %907 = vmatpush1.msra.mxu0 0.0
      %908 = vmatprep.subr.mxu0 0.0
      %909 = vmatpush1.msra.mxu0 0.0
      %910 = vmatprep.subr.mxu0 0.0
      %911 = vmatpush1.msra.mxu0 0.0
      %912 = vmatprep.subr.mxu0 0.0
      %913 = vmatpush1.msra.mxu0 0.0
      %914 = vmatprep.subr.mxu0 0.0
      %915 = vmatpush1.msra.mxu0 0.0
      %916 = vmatprep.subr.mxu0 0.0
      %917 = vmatpush1.msra.mxu0 0.0
      %918 = vmatprep.subr.mxu0 0.0
      %919 = vmatpush1.msra.mxu0 0.0
      %920 = vmatprep.subr.mxu0 0.0
      %921 = vmatpush1.msra.mxu0 0.0
      %922 = vmatprep.subr.mxu0 0.0
      %923 = vmatpush1.msra.mxu0 0.0
      %924 = vmatprep.subr.mxu0 0.0
      %925 = vmatpush1.msra.mxu0 0.0
      %926 = vmatprep.subr.mxu0 0.0
      %927 = vmatpush1.msra.mxu0 0.0
      %928 = vmatprep.subr.mxu0 0.0
      %929 = vmatpush1.msra.mxu0 0.0
      %930 = vmatprep.subr.mxu0 0.0
      %931 = vmatpush1.msra.mxu0 0.0
      %932 = vmatprep.subr.mxu0 0.0
      %933 = vmatpush1.msra.mxu0 0.0
      %934 = vmatprep.subr.mxu0 0.0
      %935 = vmatpush1.msra.mxu0 0.0
      %936 = vmatprep.subr.mxu0 0.0
      %937 = vmatpush1.msra.mxu0 0.0
      %938 = vmatprep.subr.mxu0 0.0
      %939 = vmatpush1.msra.mxu0 0.0
      %940 = vmatprep.subr.mxu0 0.0
      %941 = vmatpush1.msra.mxu0 0.0
      %942 = vmatprep.subr.mxu0 0.0
      %943 = vmatpush1.msra.mxu0 0.0
      %944 = vmatprep.mubr.f32.mxu0 0.0
      %945 = vmatmul.mubr.f32.gmra.mrb[0].mxu0 %v848
      %v946 = vpop.f32.mrb[0].mxu0
      %v947 = vadd.f32 0.0, %v946
      %v948 = vpop.f32.mrb[0].mxu0
      %949 = vmatprep.mubr.f32.mxu0 0.0
      %950 = vmatmul.mubr.f32.gmra.mrb[0].mxu0 %v851
      %v951 = vpop.f32.mrb[0].mxu0
      %v952 = vadd.f32 0.0, %v951
      %v953 = vpop.f32.mrb[0].mxu0
      %954 = vmatprep.mubr.f32.mxu0 0.0
      %955 = vmatmul.mubr.f32.gmra.mrb[0].mxu0 %v854
      %v956 = vpop.f32.mrb[0].mxu0
      %v957 = vadd.f32 0.0, %v956
      %v958 = vpop.f32.mrb[0].mxu0
      %959 = vmatprep.mubr.f32.mxu0 0.0
      %960 = vmatmul.mubr.f32.gmra.mrb[0].mxu0 %v857
      %v961 = vpop.f32.mrb[0].mxu0
      %v962 = vadd.f32 0.0, %v961
      %v963 = vpop.f32.mrb[0].mxu0
      %964 = vmatprep.mubr.f32.mxu0 0.0
      %965 = vmatmul.mubr.f32.gmra.mrb[0].mxu0 %v860
      %v966 = vpop.f32.mrb[0].mxu0
      %v967 = vadd.f32 0.0, %v966
      %v968 = vpop.f32.mrb[0].mxu0
      %969 = vmatprep.mubr.f32.mxu0 0.0
      %970 = vmatmul.mubr.f32.gmra.mrb[0].mxu0 %v863
      %v971 = vpop.f32.mrb[0].mxu0
      %v972 = vadd.f32 0.0, %v971
      %v973 = vpop.f32.mrb[0].mxu0
      %974 = vmatprep.mubr.f32.mxu0 0.0
      %975 = vmatmul.mubr.f32.gmra.mrb[0].mxu0 %v866
      %v976 = vpop.f32.mrb[0].mxu0
      %v977 = vadd.f32 0.0, %v976
      %v978 = vpop.f32.mrb[0].mxu0
      %979 = vmatprep.mubr.f32.mxu0 0.0
      %980 = vmatmul.mubr.f32.gmra.mrb[0].mxu0 %v869
      %v981 = vpop.f32.mrb[0].mxu0
      %v982 = vadd.f32 0.0, %v981
      %v983 = vpop.f32.mrb[0].mxu0
      %984 = vmatprep.mubr.f32.mxu0 0.0
      %985 = vmatmul.mubr.f32.gmra.mrb[0].mxu0 %v872
      %v986 = vpop.f32.mrb[0].mxu0
      %v987 = vadd.f32 0.0, %v986
      %v988 = vpop.f32.mrb[0].mxu0
      %989 = vmatprep.mubr.f32.mxu0 0.0
      %990 = vmatmul.mubr.f32.gmra.mrb[0].mxu0 %v875
      %v991 = vpop.f32.mrb[0].mxu0
      %v992 = vadd.f32 0.0, %v991
      %v993 = vpop.f32.mrb[0].mxu0
      %994 = vdwg.mxu0
      %v995 = vadd.f32 %v825, %v947
      %v996 = vadd.f32 %v826, %v952
      %v997 = vadd.f32 %v827, %v957
      %v998 = vadd.f32 %v828, %v962
      %v999 = vadd.f32 %v829, %v967
      %v1000 = vadd.f32 %v830, %v972
      %v1001 = vadd.f32 %v831, %v977
      %v1002 = vadd.f32 %v832, %v982
      %v1003 = vadd.f32 %v833, %v987
      %v1004 = vadd.f32 %v834, %v992
      %v1005 = vld [vmem:[%s163 + $0xc] sm:$0xff]
      %v1006 = vld [vmem:[%s163 + $0x14] sm:$0xff]
      %v1007 = vld [vmem:[%s163 + $0x1c] sm:$0xff]
      %v1008 = vld [vmem:[%s163 + $0x24] sm:$0xff]
      %v1009 = vld [vmem:[%s163 + $0x2c] sm:$0xff]
      %v1010 = vld [vmem:[%s163 + $0x34] sm:$0xff]
      %v1011 = vld [vmem:[%s163 + $0x3c] sm:$0xff]
      %v1012 = vld [vmem:[%s163 + $0x44] sm:$0xff]
      %v1013 = vld [vmem:[%s163 + $0x4c] sm:$0xff]
      %v1014 = vld [vmem:[%s163 + $0x54] sm:$0xff]
      %s1015 = scalar_lea.vmem %s1, 20
      %v1016 = vld [vmem:[%s1015] sm:$0xf]
      %v1018 = vsel %vm197, %v1005, 0
      %v1021 = vsel %vm197, %v1006, 0
      %v1024 = vsel %vm197, %v1007, 0
      %v1027 = vsel %vm197, %v1008, 0
      %v1030 = vsel %vm197, %v1009, 0
      %v1033 = vsel %vm197, %v1010, 0
      %v1036 = vsel %vm197, %v1011, 0
      %v1039 = vsel %vm197, %v1012, 0
      %v1042 = vsel %vm197, %v1013, 0
      %v1045 = vsel %vm197, %v1014, 0
      %v1048 = vsel %vm228, %v1016, 0
      %1050 = vmatprep.subr.mxu0 0.0
      %1051 = vmatpush1.msra.mxu0 %v1048
      %1052 = vmatprep.subr.mxu0 0.0
      %1053 = vmatpush1.msra.mxu0 0.0
      %1054 = vmatprep.subr.mxu0 0.0
      %1055 = vmatpush1.msra.mxu0 0.0
      %1056 = vmatprep.subr.mxu0 0.0
      %1057 = vmatpush1.msra.mxu0 0.0
      %1058 = vmatprep.subr.mxu0 0.0
      %1059 = vmatpush1.msra.mxu0 0.0
      %1060 = vmatprep.subr.mxu0 0.0
      %1061 = vmatpush1.msra.mxu0 0.0
      %1062 = vmatprep.subr.mxu0 0.0
      %1063 = vmatpush1.msra.mxu0 0.0
      %1064 = vmatprep.subr.mxu0 0.0
      %1065 = vmatpush1.msra.mxu0 0.0
      %1066 = vmatprep.subr.mxu0 0.0
      %1067 = vmatpush1.msra.mxu0 0.0
      %1068 = vmatprep.subr.mxu0 0.0
      %1069 = vmatpush1.msra.mxu0 0.0
      %1070 = vmatprep.subr.mxu0 0.0
      %1071 = vmatpush1.msra.mxu0 0.0
      %1072 = vmatprep.subr.mxu0 0.0
      %1073 = vmatpush1.msra.mxu0 0.0
      %1074 = vmatprep.subr.mxu0 0.0
      %1075 = vmatpush1.msra.mxu0 0.0
      %1076 = vmatprep.subr.mxu0 0.0
      %1077 = vmatpush1.msra.mxu0 0.0
      %1078 = vmatprep.subr.mxu0 0.0
      %1079 = vmatpush1.msra.mxu0 0.0
      %1080 = vmatprep.subr.mxu0 0.0
      %1081 = vmatpush1.msra.mxu0 0.0
      %1082 = vmatprep.subr.mxu0 0.0
      %1083 = vmatpush1.msra.mxu0 0.0
      %1084 = vmatprep.subr.mxu0 0.0
      %1085 = vmatpush1.msra.mxu0 0.0
      %1086 = vmatprep.subr.mxu0 0.0
      %1087 = vmatpush1.msra.mxu0 0.0
      %1088 = vmatprep.subr.mxu0 0.0
      %1089 = vmatpush1.msra.mxu0 0.0
      %1090 = vmatprep.subr.mxu0 0.0
      %1091 = vmatpush1.msra.mxu0 0.0
      %1092 = vmatprep.subr.mxu0 0.0
      %1093 = vmatpush1.msra.mxu0 0.0
      %1094 = vmatprep.subr.mxu0 0.0
      %1095 = vmatpush1.msra.mxu0 0.0
      %1096 = vmatprep.subr.mxu0 0.0
      %1097 = vmatpush1.msra.mxu0 0.0
      %1098 = vmatprep.subr.mxu0 0.0
      %1099 = vmatpush1.msra.mxu0 0.0
      %1100 = vmatprep.subr.mxu0 0.0
      %1101 = vmatpush1.msra.mxu0 0.0
      %1102 = vmatprep.subr.mxu0 0.0
      %1103 = vmatpush1.msra.mxu0 0.0
      %1104 = vmatprep.subr.mxu0 0.0
      %1105 = vmatpush1.msra.mxu0 0.0
      %1106 = vmatprep.subr.mxu0 0.0
      %1107 = vmatpush1.msra.mxu0 0.0
      %1108 = vmatprep.subr.mxu0 0.0
      %1109 = vmatpush1.msra.mxu0 0.0
      %1110 = vmatprep.subr.mxu0 0.0
      %1111 = vmatpush1.msra.mxu0 0.0
      %1112 = vmatprep.subr.mxu0 0.0
      %1113 = vmatpush1.msra.mxu0 0.0
      %1114 = vmatprep.mubr.f32.mxu0 0.0
      %1115 = vmatmul.mubr.f32.gmra.mrb[0].mxu0 %v1018
      %v1116 = vpop.f32.mrb[0].mxu0
      %v1117 = vadd.f32 0.0, %v1116
      %v1118 = vpop.f32.mrb[0].mxu0
      %1119 = vmatprep.mubr.f32.mxu0 0.0
      %1120 = vmatmul.mubr.f32.gmra.mrb[0].mxu0 %v1021
      %v1121 = vpop.f32.mrb[0].mxu0
      %v1122 = vadd.f32 0.0, %v1121
      %v1123 = vpop.f32.mrb[0].mxu0
      %1124 = vmatprep.mubr.f32.mxu0 0.0
      %1125 = vmatmul.mubr.f32.gmra.mrb[0].mxu0 %v1024
      %v1126 = vpop.f32.mrb[0].mxu0
      %v1127 = vadd.f32 0.0, %v1126
      %v1128 = vpop.f32.mrb[0].mxu0
      %1129 = vmatprep.mubr.f32.mxu0 0.0
      %1130 = vmatmul.mubr.f32.gmra.mrb[0].mxu0 %v1027
      %v1131 = vpop.f32.mrb[0].mxu0
      %v1132 = vadd.f32 0.0, %v1131
      %v1133 = vpop.f32.mrb[0].mxu0
      %1134 = vmatprep.mubr.f32.mxu0 0.0
      %1135 = vmatmul.mubr.f32.gmra.mrb[0].mxu0 %v1030
      %v1136 = vpop.f32.mrb[0].mxu0
      %v1137 = vadd.f32 0.0, %v1136
      %v1138 = vpop.f32.mrb[0].mxu0
      %1139 = vmatprep.mubr.f32.mxu0 0.0
      %1140 = vmatmul.mubr.f32.gmra.mrb[0].mxu0 %v1033
      %v1141 = vpop.f32.mrb[0].mxu0
      %v1142 = vadd.f32 0.0, %v1141
      %v1143 = vpop.f32.mrb[0].mxu0
      %1144 = vmatprep.mubr.f32.mxu0 0.0
      %1145 = vmatmul.mubr.f32.gmra.mrb[0].mxu0 %v1036
      %v1146 = vpop.f32.mrb[0].mxu0
      %v1147 = vadd.f32 0.0, %v1146
      %v1148 = vpop.f32.mrb[0].mxu0
      %1149 = vmatprep.mubr.f32.mxu0 0.0
      %1150 = vmatmul.mubr.f32.gmra.mrb[0].mxu0 %v1039
      %v1151 = vpop.f32.mrb[0].mxu0
      %v1152 = vadd.f32 0.0, %v1151
      %v1153 = vpop.f32.mrb[0].mxu0
      %1154 = vmatprep.mubr.f32.mxu0 0.0
      %1155 = vmatmul.mubr.f32.gmra.mrb[0].mxu0 %v1042
      %v1156 = vpop.f32.mrb[0].mxu0
      %v1157 = vadd.f32 0.0, %v1156
      %v1158 = vpop.f32.mrb[0].mxu0
      %1159 = vmatprep.mubr.f32.mxu0 0.0
      %1160 = vmatmul.mubr.f32.gmra.mrb[0].mxu0 %v1045
      %v1161 = vpop.f32.mrb[0].mxu0
      %v1162 = vadd.f32 0.0, %v1161
      %v1163 = vpop.f32.mrb[0].mxu0
      %1164 = vdwg.mxu0
      %v1165 = vadd.f32 %v995, %v1117
      %v1166 = vadd.f32 %v996, %v1122
      %v1167 = vadd.f32 %v997, %v1127
      %v1168 = vadd.f32 %v998, %v1132
      %v1169 = vadd.f32 %v999, %v1137
      %v1170 = vadd.f32 %v1000, %v1142
      %v1171 = vadd.f32 %v1001, %v1147
      %v1172 = vadd.f32 %v1002, %v1152
      %v1173 = vadd.f32 %v1003, %v1157
      %v1174 = vadd.f32 %v1004, %v1162
      %v1175 = vld [vmem:[%s163 + $0x14] sm:$0xff]
      %v1176 = vld [vmem:[%s163 + $0x1c] sm:$0xff]
      %v1177 = vld [vmem:[%s163 + $0x24] sm:$0xff]
      %v1178 = vld [vmem:[%s163 + $0x2c] sm:$0xff]
      %v1179 = vld [vmem:[%s163 + $0x34] sm:$0xff]
      %v1180 = vld [vmem:[%s163 + $0x3c] sm:$0xff]
      %v1181 = vld [vmem:[%s163 + $0x44] sm:$0xff]
      %v1182 = vld [vmem:[%s163 + $0x4c] sm:$0xff]
      %v1183 = vld [vmem:[%s163 + $0x54] sm:$0xff]
      %v1184 = vld [vmem:[%s163 + $0x5c] sm:$0xff]
      %s1185 = scalar_lea.vmem %s1, 24
      %v1186 = vld [vmem:[%s1185] sm:$0xf]
      %v1188 = vsel %vm197, %v1175, 0
      %v1191 = vsel %vm197, %v1176, 0
      %v1194 = vsel %vm197, %v1177, 0
      %v1197 = vsel %vm197, %v1178, 0
      %v1200 = vsel %vm197, %v1179, 0
      %v1203 = vsel %vm197, %v1180, 0
      %v1206 = vsel %vm197, %v1181, 0
      %v1209 = vsel %vm197, %v1182, 0
      %v1212 = vsel %vm197, %v1183, 0
      %v1215 = vsel %vm197, %v1184, 0
      %v1218 = vsel %vm228, %v1186, 0
      %1220 = vmatprep.subr.mxu0 0.0
      %1221 = vmatpush1.msra.mxu0 %v1218
      %1222 = vmatprep.subr.mxu0 0.0
      %1223 = vmatpush1.msra.mxu0 0.0
      %1224 = vmatprep.subr.mxu0 0.0
      %1225 = vmatpush1.msra.mxu0 0.0
      %1226 = vmatprep.subr.mxu0 0.0
      %1227 = vmatpush1.msra.mxu0 0.0
      %1228 = vmatprep.subr.mxu0 0.0
      %1229 = vmatpush1.msra.mxu0 0.0
      %1230 = vmatprep.subr.mxu0 0.0
      %1231 = vmatpush1.msra.mxu0 0.0
      %1232 = vmatprep.subr.mxu0 0.0
      %1233 = vmatpush1.msra.mxu0 0.0
      %1234 = vmatprep.subr.mxu0 0.0
      %1235 = vmatpush1.msra.mxu0 0.0
      %1236 = vmatprep.subr.mxu0 0.0
      %1237 = vmatpush1.msra.mxu0 0.0
      %1238 = vmatprep.subr.mxu0 0.0
      %1239 = vmatpush1.msra.mxu0 0.0
      %1240 = vmatprep.subr.mxu0 0.0
      %1241 = vmatpush1.msra.mxu0 0.0
      %1242 = vmatprep.subr.mxu0 0.0
      %1243 = vmatpush1.msra.mxu0 0.0
      %1244 = vmatprep.subr.mxu0 0.0
      %1245 = vmatpush1.msra.mxu0 0.0
      %1246 = vmatprep.subr.mxu0 0.0
      %1247 = vmatpush1.msra.mxu0 0.0
      %1248 = vmatprep.subr.mxu0 0.0
      %1249 = vmatpush1.msra.mxu0 0.0
      %1250 = vmatprep.subr.mxu0 0.0
      %1251 = vmatpush1.msra.mxu0 0.0
      %1252 = vmatprep.subr.mxu0 0.0
      %1253 = vmatpush1.msra.mxu0 0.0
      %1254 = vmatprep.subr.mxu0 0.0
      %1255 = vmatpush1.msra.mxu0 0.0
      %1256 = vmatprep.subr.mxu0 0.0
      %1257 = vmatpush1.msra.mxu0 0.0
      %1258 = vmatprep.subr.mxu0 0.0
      %1259 = vmatpush1.msra.mxu0 0.0
      %1260 = vmatprep.subr.mxu0 0.0
      %1261 = vmatpush1.msra.mxu0 0.0
      %1262 = vmatprep.subr.mxu0 0.0
      %1263 = vmatpush1.msra.mxu0 0.0
      %1264 = vmatprep.subr.mxu0 0.0
      %1265 = vmatpush1.msra.mxu0 0.0
      %1266 = vmatprep.subr.mxu0 0.0
      %1267 = vmatpush1.msra.mxu0 0.0
      %1268 = vmatprep.subr.mxu0 0.0
      %1269 = vmatpush1.msra.mxu0 0.0
      %1270 = vmatprep.subr.mxu0 0.0
      %1271 = vmatpush1.msra.mxu0 0.0
      %1272 = vmatprep.subr.mxu0 0.0
      %1273 = vmatpush1.msra.mxu0 0.0
      %1274 = vmatprep.subr.mxu0 0.0
      %1275 = vmatpush1.msra.mxu0 0.0
      %1276 = vmatprep.subr.mxu0 0.0
      %1277 = vmatpush1.msra.mxu0 0.0
      %1278 = vmatprep.subr.mxu0 0.0
      %1279 = vmatpush1.msra.mxu0 0.0
      %1280 = vmatprep.subr.mxu0 0.0
      %1281 = vmatpush1.msra.mxu0 0.0
      %1282 = vmatprep.subr.mxu0 0.0
      %1283 = vmatpush1.msra.mxu0 0.0
      %1284 = vmatprep.mubr.f32.mxu0 0.0
      %1285 = vmatmul.mubr.f32.gmra.mrb[0].mxu0 %v1188
      %v1286 = vpop.f32.mrb[0].mxu0
      %v1287 = vadd.f32 0.0, %v1286
      %v1288 = vpop.f32.mrb[0].mxu0
      %1289 = vmatprep.mubr.f32.mxu0 0.0
      %1290 = vmatmul.mubr.f32.gmra.mrb[0].mxu0 %v1191
      %v1291 = vpop.f32.mrb[0].mxu0
      %v1292 = vadd.f32 0.0, %v1291
      %v1293 = vpop.f32.mrb[0].mxu0
      %1294 = vmatprep.mubr.f32.mxu0 0.0
      %1295 = vmatmul.mubr.f32.gmra.mrb[0].mxu0 %v1194
      %v1296 = vpop.f32.mrb[0].mxu0
      %v1297 = vadd.f32 0.0, %v1296
      %v1298 = vpop.f32.mrb[0].mxu0
      %1299 = vmatprep.mubr.f32.mxu0 0.0
      %1300 = vmatmul.mubr.f32.gmra.mrb[0].mxu0 %v1197
      %v1301 = vpop.f32.mrb[0].mxu0
      %v1302 = vadd.f32 0.0, %v1301
      %v1303 = vpop.f32.mrb[0].mxu0
      %1304 = vmatprep.mubr.f32.mxu0 0.0
      %1305 = vmatmul.mubr.f32.gmra.mrb[0].mxu0 %v1200
      %v1306 = vpop.f32.mrb[0].mxu0
      %v1307 = vadd.f32 0.0, %v1306
      %v1308 = vpop.f32.mrb[0].mxu0
      %1309 = vmatprep.mubr.f32.mxu0 0.0
      %1310 = vmatmul.mubr.f32.gmra.mrb[0].mxu0 %v1203
      %v1311 = vpop.f32.mrb[0].mxu0
      %v1312 = vadd.f32 0.0, %v1311
      %v1313 = vpop.f32.mrb[0].mxu0
      %1314 = vmatprep.mubr.f32.mxu0 0.0
      %1315 = vmatmul.mubr.f32.gmra.mrb[0].mxu0 %v1206
      %v1316 = vpop.f32.mrb[0].mxu0
      %v1317 = vadd.f32 0.0, %v1316
      %v1318 = vpop.f32.mrb[0].mxu0
      %1319 = vmatprep.mubr.f32.mxu0 0.0
      %1320 = vmatmul.mubr.f32.gmra.mrb[0].mxu0 %v1209
      %v1321 = vpop.f32.mrb[0].mxu0
      %v1322 = vadd.f32 0.0, %v1321
      %v1323 = vpop.f32.mrb[0].mxu0
      %1324 = vmatprep.mubr.f32.mxu0 0.0
      %1325 = vmatmul.mubr.f32.gmra.mrb[0].mxu0 %v1212
      %v1326 = vpop.f32.mrb[0].mxu0
      %v1327 = vadd.f32 0.0, %v1326
      %v1328 = vpop.f32.mrb[0].mxu0
      %1329 = vmatprep.mubr.f32.mxu0 0.0
      %1330 = vmatmul.mubr.f32.gmra.mrb[0].mxu0 %v1215
      %v1331 = vpop.f32.mrb[0].mxu0
      %v1332 = vadd.f32 0.0, %v1331
      %v1333 = vpop.f32.mrb[0].mxu0
      %1334 = vdwg.mxu0
      %v1335 = vadd.f32 %v1165, %v1287
      %v1336 = vadd.f32 %v1166, %v1292
      %v1337 = vadd.f32 %v1167, %v1297
      %v1338 = vadd.f32 %v1168, %v1302
      %v1339 = vadd.f32 %v1169, %v1307
      %v1340 = vadd.f32 %v1170, %v1312
      %v1341 = vadd.f32 %v1171, %v1317
      %v1342 = vadd.f32 %v1172, %v1322
      %v1343 = vadd.f32 %v1173, %v1327
      %v1344 = vadd.f32 %v1174, %v1332
      %v1345 = vld [vmem:[%s163 + $0x15] sm:$0xff]
      %v1346 = vld [vmem:[%s163 + $0x1d] sm:$0xff]
      %v1347 = vld [vmem:[%s163 + $0x25] sm:$0xff]
      %v1348 = vld [vmem:[%s163 + $0x2d] sm:$0xff]
      %v1349 = vld [vmem:[%s163 + $0x35] sm:$0xff]
      %v1350 = vld [vmem:[%s163 + $0x3d] sm:$0xff]
      %v1351 = vld [vmem:[%s163 + $0x45] sm:$0xff]
      %v1352 = vld [vmem:[%s163 + $0x4d] sm:$0xff]
      %v1353 = vld [vmem:[%s163 + $0x55] sm:$0xff]
      %v1354 = vld [vmem:[%s163 + $0x5d] sm:$0xff]
      %s1355 = scalar_lea.vmem %s1, 28
      %v1356 = vld [vmem:[%s1355] sm:$0xf]
      %v1358 = vsel %vm197, %v1345, 0
      %v1361 = vsel %vm197, %v1346, 0
      %v1364 = vsel %vm197, %v1347, 0
      %v1367 = vsel %vm197, %v1348, 0
      %v1370 = vsel %vm197, %v1349, 0
      %v1373 = vsel %vm197, %v1350, 0
      %v1376 = vsel %vm197, %v1351, 0
      %v1379 = vsel %vm197, %v1352, 0
      %v1382 = vsel %vm197, %v1353, 0
      %v1385 = vsel %vm197, %v1354, 0
      %v1388 = vsel %vm228, %v1356, 0
      %1390 = vmatprep.subr.mxu0 0.0
      %1391 = vmatpush1.msra.mxu0 %v1388
      %1392 = vmatprep.subr.mxu0 0.0
      %1393 = vmatpush1.msra.mxu0 0.0
      %1394 = vmatprep.subr.mxu0 0.0
      %1395 = vmatpush1.msra.mxu0 0.0
      %1396 = vmatprep.subr.mxu0 0.0
      %1397 = vmatpush1.msra.mxu0 0.0
      %1398 = vmatprep.subr.mxu0 0.0
      %1399 = vmatpush1.msra.mxu0 0.0
      %1400 = vmatprep.subr.mxu0 0.0
      %1401 = vmatpush1.msra.mxu0 0.0
      %1402 = vmatprep.subr.mxu0 0.0
      %1403 = vmatpush1.msra.mxu0 0.0
      %1404 = vmatprep.subr.mxu0 0.0
      %1405 = vmatpush1.msra.mxu0 0.0
      %1406 = vmatprep.subr.mxu0 0.0
      %1407 = vmatpush1.msra.mxu0 0.0
      %1408 = vmatprep.subr.mxu0 0.0
      %1409 = vmatpush1.msra.mxu0 0.0
      %1410 = vmatprep.subr.mxu0 0.0
      %1411 = vmatpush1.msra.mxu0 0.0
      %1412 = vmatprep.subr.mxu0 0.0
      %1413 = vmatpush1.msra.mxu0 0.0
      %1414 = vmatprep.subr.mxu0 0.0
      %1415 = vmatpush1.msra.mxu0 0.0
      %1416 = vmatprep.subr.mxu0 0.0
      %1417 = vmatpush1.msra.mxu0 0.0
      %1418 = vmatprep.subr.mxu0 0.0
      %1419 = vmatpush1.msra.mxu0 0.0
      %1420 = vmatprep.subr.mxu0 0.0
      %1421 = vmatpush1.msra.mxu0 0.0
      %1422 = vmatprep.subr.mxu0 0.0
      %1423 = vmatpush1.msra.mxu0 0.0
      %1424 = vmatprep.subr.mxu0 0.0
      %1425 = vmatpush1.msra.mxu0 0.0
      %1426 = vmatprep.subr.mxu0 0.0
      %1427 = vmatpush1.msra.mxu0 0.0
      %1428 = vmatprep.subr.mxu0 0.0
      %1429 = vmatpush1.msra.mxu0 0.0
      %1430 = vmatprep.subr.mxu0 0.0
      %1431 = vmatpush1.msra.mxu0 0.0
      %1432 = vmatprep.subr.mxu0 0.0
      %1433 = vmatpush1.msra.mxu0 0.0
      %1434 = vmatprep.subr.mxu0 0.0
      %1435 = vmatpush1.msra.mxu0 0.0
      %1436 = vmatprep.subr.mxu0 0.0
      %1437 = vmatpush1.msra.mxu0 0.0
      %1438 = vmatprep.subr.mxu0 0.0
      %1439 = vmatpush1.msra.mxu0 0.0
      %1440 = vmatprep.subr.mxu0 0.0
      %1441 = vmatpush1.msra.mxu0 0.0
      %1442 = vmatprep.subr.mxu0 0.0
      %1443 = vmatpush1.msra.mxu0 0.0
      %1444 = vmatprep.subr.mxu0 0.0
      %1445 = vmatpush1.msra.mxu0 0.0
      %1446 = vmatprep.subr.mxu0 0.0
      %1447 = vmatpush1.msra.mxu0 0.0
      %1448 = vmatprep.subr.mxu0 0.0
      %1449 = vmatpush1.msra.mxu0 0.0
      %1450 = vmatprep.subr.mxu0 0.0
      %1451 = vmatpush1.msra.mxu0 0.0
      %1452 = vmatprep.subr.mxu0 0.0
      %1453 = vmatpush1.msra.mxu0 0.0
      %1454 = vmatprep.mubr.f32.mxu0 0.0
      %1455 = vmatmul.mubr.f32.gmra.mrb[0].mxu0 %v1358
      %v1456 = vpop.f32.mrb[0].mxu0
      %v1457 = vadd.f32 0.0, %v1456
      %v1458 = vpop.f32.mrb[0].mxu0
      %1459 = vmatprep.mubr.f32.mxu0 0.0
      %1460 = vmatmul.mubr.f32.gmra.mrb[0].mxu0 %v1361
      %v1461 = vpop.f32.mrb[0].mxu0
      %v1462 = vadd.f32 0.0, %v1461
      %v1463 = vpop.f32.mrb[0].mxu0
      %1464 = vmatprep.mubr.f32.mxu0 0.0
      %1465 = vmatmul.mubr.f32.gmra.mrb[0].mxu0 %v1364
      %v1466 = vpop.f32.mrb[0].mxu0
      %v1467 = vadd.f32 0.0, %v1466
      %v1468 = vpop.f32.mrb[0].mxu0
      %1469 = vmatprep.mubr.f32.mxu0 0.0
      %1470 = vmatmul.mubr.f32.gmra.mrb[0].mxu0 %v1367
      %v1471 = vpop.f32.mrb[0].mxu0
      %v1472 = vadd.f32 0.0, %v1471
      %v1473 = vpop.f32.mrb[0].mxu0
      %1474 = vmatprep.mubr.f32.mxu0 0.0
      %1475 = vmatmul.mubr.f32.gmra.mrb[0].mxu0 %v1370
      %v1476 = vpop.f32.mrb[0].mxu0
      %v1477 = vadd.f32 0.0, %v1476
      %v1478 = vpop.f32.mrb[0].mxu0
      %1479 = vmatprep.mubr.f32.mxu0 0.0
      %1480 = vmatmul.mubr.f32.gmra.mrb[0].mxu0 %v1373
      %v1481 = vpop.f32.mrb[0].mxu0
      %v1482 = vadd.f32 0.0, %v1481
      %v1483 = vpop.f32.mrb[0].mxu0
      %1484 = vmatprep.mubr.f32.mxu0 0.0
      %1485 = vmatmul.mubr.f32.gmra.mrb[0].mxu0 %v1376
      %v1486 = vpop.f32.mrb[0].mxu0
      %v1487 = vadd.f32 0.0, %v1486
      %v1488 = vpop.f32.mrb[0].mxu0
      %1489 = vmatprep.mubr.f32.mxu0 0.0
      %1490 = vmatmul.mubr.f32.gmra.mrb[0].mxu0 %v1379
      %v1491 = vpop.f32.mrb[0].mxu0
      %v1492 = vadd.f32 0.0, %v1491
      %v1493 = vpop.f32.mrb[0].mxu0
      %1494 = vmatprep.mubr.f32.mxu0 0.0
      %1495 = vmatmul.mubr.f32.gmra.mrb[0].mxu0 %v1382
      %v1496 = vpop.f32.mrb[0].mxu0
      %v1497 = vadd.f32 0.0, %v1496
      %v1498 = vpop.f32.mrb[0].mxu0
      %1499 = vmatprep.mubr.f32.mxu0 0.0
      %1500 = vmatmul.mubr.f32.gmra.mrb[0].mxu0 %v1385
      %v1501 = vpop.f32.mrb[0].mxu0
      %v1502 = vadd.f32 0.0, %v1501
      %v1503 = vpop.f32.mrb[0].mxu0
      %1504 = vdwg.mxu0
      %v1505 = vadd.f32 %v1335, %v1457
      %v1506 = vadd.f32 %v1336, %v1462
      %v1507 = vadd.f32 %v1337, %v1467
      %v1508 = vadd.f32 %v1338, %v1472
      %v1509 = vadd.f32 %v1339, %v1477
      %v1510 = vadd.f32 %v1340, %v1482
      %v1511 = vadd.f32 %v1341, %v1487
      %v1512 = vadd.f32 %v1342, %v1492
      %v1513 = vadd.f32 %v1343, %v1497
      %v1514 = vadd.f32 %v1344, %v1502
      %v1515 = vld [vmem:[%s163 + $0x16] sm:$0xff]
      %v1516 = vld [vmem:[%s163 + $0x1e] sm:$0xff]
      %v1517 = vld [vmem:[%s163 + $0x26] sm:$0xff]
      %v1518 = vld [vmem:[%s163 + $0x2e] sm:$0xff]
      %v1519 = vld [vmem:[%s163 + $0x36] sm:$0xff]
      %v1520 = vld [vmem:[%s163 + $0x3e] sm:$0xff]
      %v1521 = vld [vmem:[%s163 + $0x46] sm:$0xff]
      %v1522 = vld [vmem:[%s163 + $0x4e] sm:$0xff]
      %v1523 = vld [vmem:[%s163 + $0x56] sm:$0xff]
      %v1524 = vld [vmem:[%s163 + $0x5e] sm:$0xff]
      %s1525 = scalar_lea.vmem %s1, 32
      %v1526 = vld [vmem:[%s1525] sm:$0xf]
      %v1528 = vsel %vm197, %v1515, 0
      %v1531 = vsel %vm197, %v1516, 0
      %v1534 = vsel %vm197, %v1517, 0
      %v1537 = vsel %vm197, %v1518, 0
      %v1540 = vsel %vm197, %v1519, 0
      %v1543 = vsel %vm197, %v1520, 0
      %v1546 = vsel %vm197, %v1521, 0
      %v1549 = vsel %vm197, %v1522, 0
      %v1552 = vsel %vm197, %v1523, 0
      %v1555 = vsel %vm197, %v1524, 0
      %v1558 = vsel %vm228, %v1526, 0
      %1560 = vmatprep.subr.mxu0 0.0
      %1561 = vmatpush1.msra.mxu0 %v1558
      %1562 = vmatprep.subr.mxu0 0.0
      %1563 = vmatpush1.msra.mxu0 0.0
      %1564 = vmatprep.subr.mxu0 0.0
      %1565 = vmatpush1.msra.mxu0 0.0
      %1566 = vmatprep.subr.mxu0 0.0
      %1567 = vmatpush1.msra.mxu0 0.0
      %1568 = vmatprep.subr.mxu0 0.0
      %1569 = vmatpush1.msra.mxu0 0.0
      %1570 = vmatprep.subr.mxu0 0.0
      %1571 = vmatpush1.msra.mxu0 0.0
      %1572 = vmatprep.subr.mxu0 0.0
      %1573 = vmatpush1.msra.mxu0 0.0
      %1574 = vmatprep.subr.mxu0 0.0
      %1575 = vmatpush1.msra.mxu0 0.0
      %1576 = vmatprep.subr.mxu0 0.0
      %1577 = vmatpush1.msra.mxu0 0.0
      %1578 = vmatprep.subr.mxu0 0.0
      %1579 = vmatpush1.msra.mxu0 0.0
      %1580 = vmatprep.subr.mxu0 0.0
      %1581 = vmatpush1.msra.mxu0 0.0
      %1582 = vmatprep.subr.mxu0 0.0
      %1583 = vmatpush1.msra.mxu0 0.0
      %1584 = vmatprep.subr.mxu0 0.0
      %1585 = vmatpush1.msra.mxu0 0.0
      %1586 = vmatprep.subr.mxu0 0.0
      %1587 = vmatpush1.msra.mxu0 0.0
      %1588 = vmatprep.subr.mxu0 0.0
      %1589 = vmatpush1.msra.mxu0 0.0
      %1590 = vmatprep.subr.mxu0 0.0
      %1591 = vmatpush1.msra.mxu0 0.0
      %1592 = vmatprep.subr.mxu0 0.0
      %1593 = vmatpush1.msra.mxu0 0.0
      %1594 = vmatprep.subr.mxu0 0.0
      %1595 = vmatpush1.msra.mxu0 0.0
      %1596 = vmatprep.subr.mxu0 0.0
      %1597 = vmatpush1.msra.mxu0 0.0
      %1598 = vmatprep.subr.mxu0 0.0
      %1599 = vmatpush1.msra.mxu0 0.0
      %1600 = vmatprep.subr.mxu0 0.0
      %1601 = vmatpush1.msra.mxu0 0.0
      %1602 = vmatprep.subr.mxu0 0.0
      %1603 = vmatpush1.msra.mxu0 0.0
      %1604 = vmatprep.subr.mxu0 0.0
      %1605 = vmatpush1.msra.mxu0 0.0
      %1606 = vmatprep.subr.mxu0 0.0
      %1607 = vmatpush1.msra.mxu0 0.0
      %1608 = vmatprep.subr.mxu0 0.0
      %1609 = vmatpush1.msra.mxu0 0.0
      %1610 = vmatprep.subr.mxu0 0.0
      %1611 = vmatpush1.msra.mxu0 0.0
      %1612 = vmatprep.subr.mxu0 0.0
      %1613 = vmatpush1.msra.mxu0 0.0
      %1614 = vmatprep.subr.mxu0 0.0
      %1615 = vmatpush1.msra.mxu0 0.0
      %1616 = vmatprep.subr.mxu0 0.0
      %1617 = vmatpush1.msra.mxu0 0.0
      %1618 = vmatprep.subr.mxu0 0.0
      %1619 = vmatpush1.msra.mxu0 0.0
      %1620 = vmatprep.subr.mxu0 0.0
      %1621 = vmatpush1.msra.mxu0 0.0
      %1622 = vmatprep.subr.mxu0 0.0
      %1623 = vmatpush1.msra.mxu0 0.0
      %1624 = vmatprep.mubr.f32.mxu0 0.0
      %1625 = vmatmul.mubr.f32.gmra.mrb[0].mxu0 %v1528
      %v1626 = vpop.f32.mrb[0].mxu0
      %v1627 = vadd.f32 0.0, %v1626
      %v1628 = vpop.f32.mrb[0].mxu0
      %1629 = vmatprep.mubr.f32.mxu0 0.0
      %1630 = vmatmul.mubr.f32.gmra.mrb[0].mxu0 %v1531
      %v1631 = vpop.f32.mrb[0].mxu0
      %v1632 = vadd.f32 0.0, %v1631
      %v1633 = vpop.f32.mrb[0].mxu0
      %1634 = vmatprep.mubr.f32.mxu0 0.0
      %1635 = vmatmul.mubr.f32.gmra.mrb[0].mxu0 %v1534
      %v1636 = vpop.f32.mrb[0].mxu0
      %v1637 = vadd.f32 0.0, %v1636
      %v1638 = vpop.f32.mrb[0].mxu0
      %1639 = vmatprep.mubr.f32.mxu0 0.0
      %1640 = vmatmul.mubr.f32.gmra.mrb[0].mxu0 %v1537
      %v1641 = vpop.f32.mrb[0].mxu0
      %v1642 = vadd.f32 0.0, %v1641
      %v1643 = vpop.f32.mrb[0].mxu0
      %1644 = vmatprep.mubr.f32.mxu0 0.0
      %1645 = vmatmul.mubr.f32.gmra.mrb[0].mxu0 %v1540
      %v1646 = vpop.f32.mrb[0].mxu0
      %v1647 = vadd.f32 0.0, %v1646
      %v1648 = vpop.f32.mrb[0].mxu0
      %1649 = vmatprep.mubr.f32.mxu0 0.0
      %1650 = vmatmul.mubr.f32.gmra.mrb[0].mxu0 %v1543
      %v1651 = vpop.f32.mrb[0].mxu0
      %v1652 = vadd.f32 0.0, %v1651
      %v1653 = vpop.f32.mrb[0].mxu0
      %1654 = vmatprep.mubr.f32.mxu0 0.0
      %1655 = vmatmul.mubr.f32.gmra.mrb[0].mxu0 %v1546
      %v1656 = vpop.f32.mrb[0].mxu0
      %v1657 = vadd.f32 0.0, %v1656
      %v1658 = vpop.f32.mrb[0].mxu0
      %1659 = vmatprep.mubr.f32.mxu0 0.0
      %1660 = vmatmul.mubr.f32.gmra.mrb[0].mxu0 %v1549
      %v1661 = vpop.f32.mrb[0].mxu0
      %v1662 = vadd.f32 0.0, %v1661
      %v1663 = vpop.f32.mrb[0].mxu0
      %1664 = vmatprep.mubr.f32.mxu0 0.0
      %1665 = vmatmul.mubr.f32.gmra.mrb[0].mxu0 %v1552
      %v1666 = vpop.f32.mrb[0].mxu0
      %v1667 = vadd.f32 0.0, %v1666
      %v1668 = vpop.f32.mrb[0].mxu0
      %1669 = vmatprep.mubr.f32.mxu0 0.0
      %1670 = vmatmul.mubr.f32.gmra.mrb[0].mxu0 %v1555
      %v1671 = vpop.f32.mrb[0].mxu0
      %v1672 = vadd.f32 0.0, %v1671
      %v1673 = vpop.f32.mrb[0].mxu0
      %1674 = vdwg.mxu0
      %v1675 = vadd.f32 %v1505, %v1627
      %v1676 = vadd.f32 %v1506, %v1632
      %v1677 = vadd.f32 %v1507, %v1637
      %v1678 = vadd.f32 %v1508, %v1642
      %v1679 = vadd.f32 %v1509, %v1647
      %v1680 = vadd.f32 %v1510, %v1652
      %v1681 = vadd.f32 %v1511, %v1657
      %v1682 = vadd.f32 %v1512, %v1662
      %v1683 = vadd.f32 %v1513, %v1667
      %v1684 = vadd.f32 %v1514, %v1672
      %v1685 = vlaneseq
      %v1686 = vshrl.u32 %v1685, 7
      %v1687 = vadd.s32 %v1686, 8
      %v1688 = vadd.s32 %v1686, 16
      %v1689 = vadd.s32 %v1686, 24
      %v1690 = vadd.s32 %v1686, 32
      %v1691 = vadd.s32 %v1686, 40
      %v1692 = vadd.s32 %v1686, 48
      %v1693 = vadd.s32 %v1686, 56
      %v1694 = vadd.s32 %v1686, 64
      %v1695 = vadd.s32 %v1686, 72
      %vm1696 = vcmp.lt.s32.totalorder %v1686, 0
      %v1697 = vsub.s32 0, %v1686
      %v1698 = vsel %vm1696, %v1697, %v1686
      %v1699 = vmul.u32.u64.compose %v1698, 3435973837
      %v1700 = vextract.low.u32 %v1699
      %v1701 = vextract.high.u32 %v1699
      %v1702 = vshrl.u32 %v1701, 3
      %v1703 = vmul.u32 %v1702, 10
      %v1704 = vsub.s32 %v1698, %v1703
      %v1705 = vsub.s32 0, %v1704
      %v1706 = vsel %vm1696, %v1705, %v1704
      %vm1707 = vcmp.lt.s32.totalorder %v1687, 0
      %v1708 = vsub.s32 0, %v1687
      %v1709 = vsel %vm1707, %v1708, %v1687
      %v1710 = vmul.u32.u64.compose %v1709, 3435973837
      %v1711 = vextract.low.u32 %v1710
      %v1712 = vextract.high.u32 %v1710
      %v1713 = vshrl.u32 %v1712, 3
      %v1714 = vmul.u32 %v1713, 10
      %v1715 = vsub.s32 %v1709, %v1714
      %v1716 = vsub.s32 0, %v1715
      %v1717 = vsel %vm1707, %v1716, %v1715
      %vm1718 = vcmp.lt.s32.totalorder %v1688, 0
      %v1719 = vsub.s32 0, %v1688
      %v1720 = vsel %vm1718, %v1719, %v1688
      %v1721 = vmul.u32.u64.compose %v1720, 3435973837
      %v1722 = vextract.low.u32 %v1721
      %v1723 = vextract.high.u32 %v1721
      %v1724 = vshrl.u32 %v1723, 3
      %v1725 = vmul.u32 %v1724, 10
      %v1726 = vsub.s32 %v1720, %v1725
      %v1727 = vsub.s32 0, %v1726
      %v1728 = vsel %vm1718, %v1727, %v1726
      %vm1729 = vcmp.lt.s32.totalorder %v1689, 0
      %v1730 = vsub.s32 0, %v1689
      %v1731 = vsel %vm1729, %v1730, %v1689
      %v1732 = vmul.u32.u64.compose %v1731, 3435973837
      %v1733 = vextract.low.u32 %v1732
      %v1734 = vextract.high.u32 %v1732
      %v1735 = vshrl.u32 %v1734, 3
      %v1736 = vmul.u32 %v1735, 10
      %v1737 = vsub.s32 %v1731, %v1736
      %v1738 = vsub.s32 0, %v1737
      %v1739 = vsel %vm1729, %v1738, %v1737
      %vm1740 = vcmp.lt.s32.totalorder %v1690, 0
      %v1741 = vsub.s32 0, %v1690
      %v1742 = vsel %vm1740, %v1741, %v1690
      %v1743 = vmul.u32.u64.compose %v1742, 3435973837
      %v1744 = vextract.low.u32 %v1743
      %v1745 = vextract.high.u32 %v1743
      %v1746 = vshrl.u32 %v1745, 3
      %v1747 = vmul.u32 %v1746, 10
      %v1748 = vsub.s32 %v1742, %v1747
      %v1749 = vsub.s32 0, %v1748
      %v1750 = vsel %vm1740, %v1749, %v1748
      %vm1751 = vcmp.lt.s32.totalorder %v1691, 0
      %v1752 = vsub.s32 0, %v1691
      %v1753 = vsel %vm1751, %v1752, %v1691
      %v1754 = vmul.u32.u64.compose %v1753, 3435973837
      %v1755 = vextract.low.u32 %v1754
      %v1756 = vextract.high.u32 %v1754
      %v1757 = vshrl.u32 %v1756, 3
      %v1758 = vmul.u32 %v1757, 10
      %v1759 = vsub.s32 %v1753, %v1758
      %v1760 = vsub.s32 0, %v1759
      %v1761 = vsel %vm1751, %v1760, %v1759
      %vm1762 = vcmp.lt.s32.totalorder %v1692, 0
      %v1763 = vsub.s32 0, %v1692
      %v1764 = vsel %vm1762, %v1763, %v1692
      %v1765 = vmul.u32.u64.compose %v1764, 3435973837
      %v1766 = vextract.low.u32 %v1765
      %v1767 = vextract.high.u32 %v1765
      %v1768 = vshrl.u32 %v1767, 3
      %v1769 = vmul.u32 %v1768, 10
      %v1770 = vsub.s32 %v1764, %v1769
      %v1771 = vsub.s32 0, %v1770
      %v1772 = vsel %vm1762, %v1771, %v1770
      %vm1773 = vcmp.lt.s32.totalorder %v1693, 0
      %v1774 = vsub.s32 0, %v1693
      %v1775 = vsel %vm1773, %v1774, %v1693
      %v1776 = vmul.u32.u64.compose %v1775, 3435973837
      %v1777 = vextract.low.u32 %v1776
      %v1778 = vextract.high.u32 %v1776
      %v1779 = vshrl.u32 %v1778, 3
      %v1780 = vmul.u32 %v1779, 10
      %v1781 = vsub.s32 %v1775, %v1780
      %v1782 = vsub.s32 0, %v1781
      %v1783 = vsel %vm1773, %v1782, %v1781
      %vm1784 = vcmp.lt.s32.totalorder %v1694, 0
      %v1785 = vsub.s32 0, %v1694
      %v1786 = vsel %vm1784, %v1785, %v1694
      %v1787 = vmul.u32.u64.compose %v1786, 3435973837
      %v1788 = vextract.low.u32 %v1787
      %v1789 = vextract.high.u32 %v1787
      %v1790 = vshrl.u32 %v1789, 3
      %v1791 = vmul.u32 %v1790, 10
      %v1792 = vsub.s32 %v1786, %v1791
      %v1793 = vsub.s32 0, %v1792
      %v1794 = vsel %vm1784, %v1793, %v1792
      %vm1795 = vcmp.lt.s32.totalorder %v1695, 0
      %v1796 = vsub.s32 0, %v1695
      %v1797 = vsel %vm1795, %v1796, %v1695
      %v1798 = vmul.u32.u64.compose %v1797, 3435973837
      %v1799 = vextract.low.u32 %v1798
      %v1800 = vextract.high.u32 %v1798
      %v1801 = vshrl.u32 %v1800, 3
      %v1802 = vmul.u32 %v1801, 10
      %v1803 = vsub.s32 %v1797, %v1802
      %v1804 = vsub.s32 0, %v1803
      %v1805 = vsel %vm1795, %v1804, %v1803
      %vm1806 = vcmp.ne.s32.totalorder %v1706, 0
      %vm1807 = vcmp.ne.s32.totalorder %v1717, 0
      %vm1808 = vcmp.ne.s32.totalorder %v1728, 0
      %vm1809 = vcmp.ne.s32.totalorder %v1739, 0
      %vm1810 = vcmp.ne.s32.totalorder %v1750, 0
      %vm1811 = vcmp.ne.s32.totalorder %v1761, 0
      %vm1812 = vcmp.ne.s32.totalorder %v1772, 0
      %vm1813 = vcmp.ne.s32.totalorder %v1783, 0
      %vm1814 = vcmp.ne.s32.totalorder %v1794, 0
      %vm1815 = vcmp.ne.s32.totalorder %v1805, 0
      %vm1816 = vcmp.lt.s32.totalorder %v1706, 0
      %vm1817 = vcmp.lt.s32.totalorder %v1717, 0
      %vm1818 = vcmp.lt.s32.totalorder %v1728, 0
      %vm1819 = vcmp.lt.s32.totalorder %v1739, 0
      %vm1820 = vcmp.lt.s32.totalorder %v1750, 0
      %vm1821 = vcmp.lt.s32.totalorder %v1761, 0
      %vm1822 = vcmp.lt.s32.totalorder %v1772, 0
      %vm1823 = vcmp.lt.s32.totalorder %v1783, 0
      %vm1824 = vcmp.lt.s32.totalorder %v1794, 0
      %vm1825 = vcmp.lt.s32.totalorder %v1805, 0
      %vm1826 = vmand %vm1816, %vm1806
      %vm1827 = vmand %vm1817, %vm1807
      %vm1828 = vmand %vm1818, %vm1808
      %vm1829 = vmand %vm1819, %vm1809
      %vm1830 = vmand %vm1820, %vm1810
      %vm1831 = vmand %vm1821, %vm1811
      %vm1832 = vmand %vm1822, %vm1812
      %vm1833 = vmand %vm1823, %vm1813
      %vm1834 = vmand %vm1824, %vm1814
      %vm1835 = vmand %vm1825, %vm1815
      %v1836 = vadd.s32 %v1706, 10
      %v1837 = vadd.s32 %v1717, 10
      %v1838 = vadd.s32 %v1728, 10
      %v1839 = vadd.s32 %v1739, 10
      %v1840 = vadd.s32 %v1750, 10
      %v1841 = vadd.s32 %v1761, 10
      %v1842 = vadd.s32 %v1772, 10
      %v1843 = vadd.s32 %v1783, 10
      %v1844 = vadd.s32 %v1794, 10
      %v1845 = vadd.s32 %v1805, 10
      %v1846 = vsel %vm1826, %v1836, %v1706
      %v1847 = vsel %vm1827, %v1837, %v1717
      %v1848 = vsel %vm1828, %v1838, %v1728
      %v1849 = vsel %vm1829, %v1839, %v1739
      %v1850 = vsel %vm1830, %v1840, %v1750
      %v1851 = vsel %vm1831, %v1841, %v1761
      %v1852 = vsel %vm1832, %v1842, %v1772
      %v1853 = vsel %vm1833, %v1843, %v1783
      %v1854 = vsel %vm1834, %v1844, %v1794
      %v1855 = vsel %vm1835, %v1845, %v1805
      %vm1856 = vcmp.lt.s32.totalorder %v1846, 8
      %vm1857 = vcmp.lt.s32.totalorder %v1847, 8
      %vm1858 = vcmp.lt.s32.totalorder %v1848, 8
      %vm1859 = vcmp.lt.s32.totalorder %v1849, 8
      %vm1860 = vcmp.lt.s32.totalorder %v1850, 8
      %vm1861 = vcmp.lt.s32.totalorder %v1851, 8
      %vm1862 = vcmp.lt.s32.totalorder %v1852, 8
      %vm1863 = vcmp.lt.s32.totalorder %v1853, 8
      %vm1864 = vcmp.lt.s32.totalorder %v1854, 8
      %vm1865 = vcmp.lt.s32.totalorder %v1855, 8
      %v1866 = vsel %vm1856, %v1675, 0.0
      %v1867 = vsel %vm1857, %v1676, 0.0
      %v1868 = vsel %vm1858, %v1677, 0.0
      %v1869 = vsel %vm1859, %v1678, 0.0
      %v1870 = vsel %vm1860, %v1679, 0.0
      %v1871 = vsel %vm1861, %v1680, 0.0
      %v1872 = vsel %vm1862, %v1681, 0.0
      %v1873 = vsel %vm1863, %v1682, 0.0
      %v1874 = vsel %vm1864, %v1683, 0.0
      %v1875 = vsel %vm1865, %v1684, 0.0
      %v1876 = vadd.f32 %v1866, %v1867
      %v1877 = vadd.f32 %v1876, %v1868
      %v1878 = vadd.f32 %v1877, %v1869
      %v1879 = vadd.f32 %v1878, %v1870
      %v1880 = vadd.f32 %v1879, %v1871
      %v1881 = vadd.f32 %v1880, %v1872
      %v1882 = vadd.f32 %v1881, %v1873
      %v1883 = vadd.f32 %v1882, %v1874
      %v1884 = vadd.f32 %v1883, %v1875
      %v1885 = vrot.slane %v1884, 4
      %v1886 = vadd.f32 %v1884, %v1885
      %v1887 = vrot.slane %v1886, 2
      %v1888 = vadd.f32 %v1886, %v1887
      %v1889 = vrot.slane %v1888, 1
      %v1890 = vadd.f32 %v1888, %v1889
      %v1891 = vmul.f32 %v1866, %v1866
      %v1892 = vmul.f32 %v1867, %v1867
      %v1893 = vmul.f32 %v1868, %v1868
      %v1894 = vmul.f32 %v1869, %v1869
      %v1895 = vmul.f32 %v1870, %v1870
      %v1896 = vmul.f32 %v1871, %v1871
      %v1897 = vmul.f32 %v1872, %v1872
      %v1898 = vmul.f32 %v1873, %v1873
      %v1899 = vmul.f32 %v1874, %v1874
      %v1900 = vmul.f32 %v1875, %v1875
      %v1901 = vadd.f32 %v1891, %v1892
      %v1902 = vadd.f32 %v1901, %v1893
      %v1903 = vadd.f32 %v1902, %v1894
      %v1904 = vadd.f32 %v1903, %v1895
      %v1905 = vadd.f32 %v1904, %v1896
      %v1906 = vadd.f32 %v1905, %v1897
      %v1907 = vadd.f32 %v1906, %v1898
      %v1908 = vadd.f32 %v1907, %v1899
      %v1909 = vadd.f32 %v1908, %v1900
      %v1910 = vrot.slane %v1909, 4
      %v1911 = vadd.f32 %v1909, %v1910
      %v1912 = vrot.slane %v1911, 2
      %v1913 = vadd.f32 %v1911, %v1912
      %v1914 = vrot.slane %v1913, 1
      %v1915 = vadd.f32 %v1913, %v1914
      %v1916 = vld [vmem:[%s3] sm:$0x3]
      %vm1917 = vcmask 1040384
      %v1918 = vsel %vm1917, %v1890, %v1915
      %v1919 = vadd.f32 %v1916, %v1918
      %1920 = vst [vmem:[%s3] sm:$0x3] %v1919
      %1921 = vst [vmem:[%s168] sm:$0xff] %v1675
      %1922 = vst [vmem:[%s168 + $0x8] sm:$0xff] %v1676
      %1923 = vst [vmem:[%s168 + $0x10] sm:$0xff] %v1677
      %1924 = vst [vmem:[%s168 + $0x18] sm:$0xff] %v1678
      %1925 = vst [vmem:[%s168 + $0x20] sm:$0xff] %v1679
      %1926 = vst [vmem:[%s168 + $0x28] sm:$0xff] %v1680
      %1927 = vst [vmem:[%s168 + $0x30] sm:$0xff] %v1681
      %1928 = vst [vmem:[%s168 + $0x38] sm:$0xff] %v1682
      %1929 = vst [vmem:[%s168 + $0x40] sm:$0xff] %v1683
      %1930 = vst [vmem:[%s168 + $0x48] sm:$0xff] %v1684
      %p1931 = scmp.lt.s32.totalorder %s15, 1
      %s1932 = scalar_select %p1931, %s15, 1
      %s1933 = smul.addr %s1932, 10
      %s1934 = smul.addr %s1933, 8
      %s1935 = scalar_lea.vmem %s2, %s1934
      // Predicated region
      $region33: #{down_forward.6} parent=27 // pred_check
        %p1936 = pneg %p80
      $region34: #{down_forward.6} parent=27 // pred_check_branch
        %1938 = sbr.rel (%p1936) target = $region36
      $region35: #{down_forward.6} parent=27 // pred_region
        _
      $region36: #{down_forward.6} parent=27 // pred_fallthru
        _
      // Predicated region
      $region37: #{down_forward.6} parent=27 // pred_check
        %p1939 = pneg %p101
      $region38: #{down_forward.6} parent=27 // pred_check_branch
        %1941 = sbr.rel (%p1939) target = $region40
      $region39: #{down_forward.6} parent=27 // pred_region
        _
      $region40: #{down_forward.6} parent=27 // pred_fallthru
        _
      // Predicated region
      $region41: #{down_forward.6} parent=27 // pred_check
        %p1942 = pneg %p101
      $region42: #{down_forward.6} parent=27 // pred_check_branch
        %1944 = sbr.rel (%p1942) target = $region44
      $region43: #{down_forward.6} parent=27 // pred_region
        _
      $region44: #{down_forward.6} parent=27 // pred_fallthru
        _
    $region28: #{down_forward.6} parent=5 // pred_fallthru
      _
    %p1945 = scmp.le.s32.totalorder 2, %s10
    // Predicated region
    $region45: #{down_forward.6} parent=5 // pred_check
      %p1946 = pneg %p1945
    $region46: #{down_forward.6} parent=5 // pred_check_branch
      %1948 = sbr.rel (%p1946) target = $region48
    $region47: #{down_forward.6} parent=5 // pred_region
      %s1949 = ssub.s32 %s10, 2
      // Predicated region
      $region49: #{down_forward.6} parent=47 // pred_check
        %p1950 = pneg %p86
      $region50: #{down_forward.6} parent=47 // pred_check_branch
        %1952 = sbr.rel (%p1950) target = $region52
      $region51: #{down_forward.6} parent=47 // pred_region
        %p1953 = scmp.lt.s32.totalorder %s16, 1
        %s1954 = scalar_select %p1953, %s16, 1
        %s1955 = smul.addr %s1954, 10
        %s1956 = smul.addr %s1955, 8
        %s1957 = scalar_lea.vmem %s2, %s1956
      $region52: #{down_forward.6} parent=47 // pred_fallthru
        _
    $region48: #{down_forward.6} parent=5 // pred_fallthru
      _
  $region6: #{down_forward.6} parent=0 // loop_footer
    %s14 = sadd.s32 1, %s10
  $region7: #{down_forward.6} parent=0 // loop_footer_branch
    %9 = sbr.rel target = $region3
  $region8: #{down_forward.6} parent=0 // loop_exit
    _

// kernel: down_forward.8
$region0: #{down_forward.8}
  #allocation0 [shape = 'u32[]', space=smem, size = 0x4, offset = 0x4, fixed_abs, tag = 'smem constant byte address 0x4 - core index']
  #allocation1 [shape = 'u32[144,128]{1,0:T(1,128)}', space=vmem, size = 0x12000, scoped, tag = 'internal scratch']
  #allocation2 [shape = 'f32[100,384]{1,0:T(8,128)}', space=vmem, size = 0x27000, scoped, tag = 'scratch operand']
  %s0 = inlined_call_operand.vmem [shape: f32[2,110,128], index: 0, kind: input, shape index: {}]
  %s1 = inlined_call_operand.vmem [shape: f32[3,384,128], index: 1, kind: input, shape index: {}]
  %s2 = inlined_call_operand.vmem [shape: f32[2,80,128], index: 2, kind: output, shape index: {0}]
  %s3 = inlined_call_operand.vmem [shape: f32[2,128], index: 3, kind: output, shape index: {1}]
  %4 = xla_tuple %s2, %s3
  %s5 = sld [smem:[#allocation0]]
  $region53: #{down_forward.8} parent=0
    _
  %s7 = ssub.s32 1, %s5
  %s8 = scalar_select 0, %s7, %s5
  loop: start=0, step=1, limit=4
  $region2: #{down_forward.8} parent=0 // loop_pre_header
    _
  $region3: #{down_forward.8} parent=0 // loop_header
    %s10 = sphi 0, %s14
    %p11 = scmp.ge.s32.totalorder %s10, 4
    %s20 = sphi 0, %s22
    %s23 = sphi 0, %s20
    %s24 = sphi 0, %s23
    %s40 = sphi 0, %s24
    %s44 = sphi 0, %s44
    %s46 = sphi 0, %s44
    %s47 = sphi 0, %s46
    %s61 = sphi 0, %s47
    %s67 = sphi 0, %s69
    %s70 = sphi 0, %s67
    %s71 = sphi 0, %s70
    %s87 = sphi 0, %s71
    %s91 = sphi 0, %s91
    %s93 = sphi 0, %s91
    %s94 = sphi 0, %s93
    %s108 = sphi 0, %s94
  $region4: #{down_forward.8} parent=0 // loop_header_branch
    %13 = sbr.rel (%p11) target = $region8
  $region5: #{down_forward.8} parent=0 // loop_body
    %s15 = ssub.s32 %s10, 1
    %s16 = ssub.s32 %s10, 2
    %s17 = sadd.s32 %s10, 1
    %s18 = ssub.s32 %s10, %s17
    %p19 = scmp.eq.s32.totalorder %s18, 0
    %s21 = sadd.s32 %s20, 1
    %s22 = scalar_select %p19, %s20, %s21
    %p25 = pneg %p19
    %p26 = scmp.eq.s32.totalorder %s10, 1
    %p27 = por %p25, %p26
    %p28 = scmp.ne.s32.totalorder %s20, %s23
    %p29 = scmp.eq.s32.totalorder %s10, 0
    %p30 = por %p28, %p29
    %p31 = scmp.ne.s32.totalorder %s20, %s23
    %p32 = scmp.eq.s32.totalorder %s15, 1
    %p33 = por %p31, %p32
    %p34 = scmp.ne.s32.totalorder %s23, %s24
    %p35 = scmp.eq.s32.totalorder %s15, 0
    %p36 = por %p34, %p35
    %p37 = scmp.ne.s32.totalorder %s23, %s24
    %p38 = scmp.eq.s32.totalorder %s16, 1
    %p39 = por %p37, %p38
    %p41 = scmp.ne.s32.totalorder %s24, %s40
    %p42 = scmp.eq.s32.totalorder %s16, 0
    %p43 = por %p41, %p42
    %s45 = sadd.s32 %s44, 1
    %p48 = scmp.eq.s32.totalorder %s10, 1
    %p49 = scmp.ne.s32.totalorder %s44, %s46
    %p50 = scmp.eq.s32.totalorder %s10, 0
    %p51 = por %p49, %p50
    %p52 = scmp.ne.s32.totalorder %s44, %s46
    %p53 = scmp.eq.s32.totalorder %s15, 1
    %p54 = por %p52, %p53
    %p55 = scmp.ne.s32.totalorder %s46, %s47
    %p56 = scmp.eq.s32.totalorder %s15, 0
    %p57 = por %p55, %p56
    %p58 = scmp.ne.s32.totalorder %s46, %s47
    %p59 = scmp.eq.s32.totalorder %s16, 1
    %p60 = por %p58, %p59
    %p62 = scmp.ne.s32.totalorder %s47, %s61
    %p63 = scmp.eq.s32.totalorder %s16, 0
    %p64 = por %p62, %p63
    %s65 = ssub.s32 %s10, %s17
    %p66 = scmp.eq.s32.totalorder %s65, 0
    %s68 = sadd.s32 %s67, 1
    %s69 = scalar_select %p66, %s67, %s68
    %p72 = pneg %p66
    %p73 = scmp.eq.s32.totalorder %s10, 1
    %p74 = por %p72, %p73
    %p75 = scmp.ne.s32.totalorder %s67, %s70
    %p76 = scmp.eq.s32.totalorder %s10, 0
    %p77 = por %p75, %p76
    %p78 = scmp.ne.s32.totalorder %s67, %s70
    %p79 = scmp.eq.s32.totalorder %s15, 1
    %p80 = por %p78, %p79
    %p81 = scmp.ne.s32.totalorder %s70, %s71
    %p82 = scmp.eq.s32.totalorder %s15, 0
    %p83 = por %p81, %p82
    %p84 = scmp.ne.s32.totalorder %s70, %s71
    %p85 = scmp.eq.s32.totalorder %s16, 1
    %p86 = por %p84, %p85
    %p88 = scmp.ne.s32.totalorder %s71, %s87
    %p89 = scmp.eq.s32.totalorder %s16, 0
    %p90 = por %p88, %p89
    %s92 = sadd.s32 %s91, 1
    %p95 = scmp.eq.s32.totalorder %s10, 1
    %p96 = scmp.ne.s32.totalorder %s91, %s93
    %p97 = scmp.eq.s32.totalorder %s10, 0
    %p98 = por %p96, %p97
    %p99 = scmp.ne.s32.totalorder %s91, %s93
    %p100 = scmp.eq.s32.totalorder %s15, 1
    %p101 = por %p99, %p100
    %p102 = scmp.ne.s32.totalorder %s93, %s94
    %p103 = scmp.eq.s32.totalorder %s15, 0
    %p104 = por %p102, %p103
    %p105 = scmp.ne.s32.totalorder %s93, %s94
    %p106 = scmp.eq.s32.totalorder %s16, 1
    %p107 = por %p105, %p106
    %p109 = scmp.ne.s32.totalorder %s94, %s108
    %p110 = scmp.eq.s32.totalorder %s16, 0
    %p111 = por %p109, %p110
    %p112 = scmp.le.s32.totalorder 1, %s10
    %p113 = scmp.lt.s32.totalorder %s10, 3
    %p114 = pnand %p112, %p113
    %p115 = pneg %p114
    // Predicated region
    $region9: #{down_forward.8} parent=5 // pred_check
      _
    $region10: #{down_forward.8} parent=5 // pred_check_branch
      %117 = sbr.rel (%p114) target = $region12
    $region11: #{down_forward.8} parent=5 // pred_region
      %s118 = ssub.s32 %s10, 1
      // Predicated region
      $region13: #{down_forward.8} parent=11 // pred_check
        %p119 = pneg %p57
      $region14: #{down_forward.8} parent=11 // pred_check_branch
        %121 = sbr.rel (%p119) target = $region16
      $region15: #{down_forward.8} parent=11 // pred_region
        _
      $region16: #{down_forward.8} parent=11 // pred_fallthru
        _
    $region12: #{down_forward.8} parent=5 // pred_fallthru
      _
    %p122 = scmp.lt.s32.totalorder %s10, 2
    // Predicated region
    $region17: #{down_forward.8} parent=5 // pred_check
      %p123 = pneg %p122
    $region18: #{down_forward.8} parent=5 // pred_check_branch
      %125 = sbr.rel (%p123) target = $region20
    $region19: #{down_forward.8} parent=5 // pred_region
      // Predicated region
      $region21: #{down_forward.8} parent=19 // pred_check
        %p126 = pneg %p30
      $region22: #{down_forward.8} parent=19 // pred_check_branch
        %128 = sbr.rel (%p126) target = $region24
      $region23: #{down_forward.8} parent=19 // pred_region
        %p129 = scmp.lt.s32.totalorder %s10, 1
        %s130 = scalar_select %p129, %s10, 1
        %s131 = smul.addr %s130, 14
        %s132 = smul.addr %s131, 8
        %s133 = scalar_lea.vmem %s0, %s132
      $region24: #{down_forward.8} parent=19 // pred_fallthru
        _
    $region20: #{down_forward.8} parent=5 // pred_fallthru
      _
    %p134 = scmp.le.s32.totalorder 1, %s10
    %p135 = scmp.lt.s32.totalorder %s10, 3
    %p136 = pnand %p134, %p135
    %p137 = pneg %p136
    // Predicated region
    $region25: #{down_forward.8} parent=5 // pred_check
      _
    $region26: #{down_forward.8} parent=5 // pred_check_branch
      %139 = sbr.rel (%p136) target = $region28
    $region27: #{down_forward.8} parent=5 // pred_region
      %s140 = ssub.s32 %s10, 1
      %p141 = scmp.lt.s32.totalorder %s15, 1
      %s142 = scalar_select %p141, %s15, 1
      %s143 = smul.addr %s142, 14
      %s144 = smul.addr %s143, 8
      %s145 = scalar_lea.vmem %s0, %s144
      %p146 = pneg %p36
      %p147 = pneg %p33
      %p148 = pneg %p57
      %p149 = pneg %p54
      %p150 = pneg %p83
      %p151 = pneg %p80
      %p152 = scmp.lt.s32.totalorder %s15, 1
      %s153 = scalar_select %p152, %s15, 1
      %s154 = smul.addr %s153, 10
      %s155 = smul.addr %s154, 8
      %s156 = scalar_lea.vmem %s2, %s155
      %p157 = pneg %p104
      %p158 = pneg %p101
      %p159 = scmp.lt.s32.totalorder %s15, 1
      %s160 = scalar_select %p159, %s15, 1
      %s161 = smul.addr %s160, 14
      %s162 = smul.addr %s161, 8
      %s163 = scalar_lea.vmem %s0, %s162
      %p164 = scmp.lt.s32.totalorder %s15, 1
      %s165 = scalar_select %p164, %s15, 1
      %s166 = smul.addr %s165, 10
      %s167 = smul.addr %s166, 8
      %s168 = scalar_lea.vmem %s2, %s167
      %p169 = scmp.eq.s32.totalorder %s15, 0
      // Predicated region
      $region29: #{down_forward.8} parent=27 // pred_check
        %p170 = pneg %p169
      $region30: #{down_forward.8} parent=27 // pred_check_branch
        %172 = sbr.rel (%p170) target = $region32
      $region31: #{down_forward.8} parent=27 // pred_region
        %173 = vst [vmem:[%s3] sm:$0x3] 0.0
      $region32: #{down_forward.8} parent=27 // pred_fallthru
        _
      %v174 = vld [vmem:[%s163] sm:$0xff]
      %v175 = vld [vmem:[%s163 + $0x8] sm:$0xff]
      %v176 = vld [vmem:[%s163 + $0x10] sm:$0xff]
      %v177 = vld [vmem:[%s163 + $0x18] sm:$0xff]
      %v178 = vld [vmem:[%s163 + $0x20] sm:$0xff]
      %v179 = vld [vmem:[%s163 + $0x28] sm:$0xff]
      %v180 = vld [vmem:[%s163 + $0x30] sm:$0xff]
      %v181 = vld [vmem:[%s163 + $0x38] sm:$0xff]
      %v182 = vld [vmem:[%s163 + $0x40] sm:$0xff]
      %v183 = vld [vmem:[%s163 + $0x48] sm:$0xff]
      %v184 = vld [vmem:[%s163 + $0x50] sm:$0xff]
      %v185 = vld [vmem:[%s163 + $0x58] sm:$0xff]
      %v186 = vld [vmem:[%s163 + $0x60] sm:$0xf]
      %187 = vst [vmem:[#allocation2] sm:$0xff] %v174
      %188 = vst [vmem:[#allocation2 + $0x18] sm:$0xff] %v175
      %189 = vst [vmem:[#allocation2 + $0x30] sm:$0xff] %v176
      %190 = vst [vmem:[#allocation2 + $0x48] sm:$0xff] %v177
      %191 = vst [vmem:[#allocation2 + $0x60] sm:$0xff] %v178
      %192 = vst [vmem:[#allocation2 + $0x78] sm:$0xff] %v179
      %193 = vst [vmem:[#allocation2 + $0x90] sm:$0xff] %v180
      %194 = vst [vmem:[#allocation2 + $0xa8] sm:$0xff] %v181
      %195 = vst [vmem:[#allocation2 + $0xc0] sm:$0xff] %v182
      %196 = vst [vmem:[#allocation2 + $0xd8] sm:$0xff] %v183
      %197 = vst [vmem:[#allocation2 + $0xf0] sm:$0xff] %v184
      %198 = vst [vmem:[#allocation2 + $0x108] sm:$0xff] %v185
      %199 = vst [vmem:[#allocation2 + $0x120] sm:$0xf] %v186
      %v200 = vld [vmem:[%s163 + $0x1] sm:$0xff]
      %v201 = vld [vmem:[%s163 + $0x9] sm:$0xff]
      %v202 = vld [vmem:[%s163 + $0x11] sm:$0xff]
      %v203 = vld [vmem:[%s163 + $0x19] sm:$0xff]
      %v204 = vld [vmem:[%s163 + $0x21] sm:$0xff]
      %v205 = vld [vmem:[%s163 + $0x29] sm:$0xff]
      %v206 = vld [vmem:[%s163 + $0x31] sm:$0xff]
      %v207 = vld [vmem:[%s163 + $0x39] sm:$0xff]
      %v208 = vld [vmem:[%s163 + $0x41] sm:$0xff]
      %v209 = vld [vmem:[%s163 + $0x49] sm:$0xff]
      %v210 = vld [vmem:[%s163 + $0x51] sm:$0xff]
      %v211 = vld [vmem:[%s163 + $0x59] sm:$0xff]
      %v212 = vld [vmem:[%s163 + $0x61] sm:$0xf]
      %213 = vst [vmem:[#allocation2 + $0x8] sm:$0xff] %v200
      %214 = vst [vmem:[#allocation2 + $0x20] sm:$0xff] %v201
      %215 = vst [vmem:[#allocation2 + $0x38] sm:$0xff] %v202
      %216 = vst [vmem:[#allocation2 + $0x50] sm:$0xff] %v203
      %217 = vst [vmem:[#allocation2 + $0x68] sm:$0xff] %v204
      %218 = vst [vmem:[#allocation2 + $0x80] sm:$0xff] %v205
      %219 = vst [vmem:[#allocation2 + $0x98] sm:$0xff] %v206
      %220 = vst [vmem:[#allocation2 + $0xb0] sm:$0xff] %v207
      %221 = vst [vmem:[#allocation2 + $0xc8] sm:$0xff] %v208
      %222 = vst [vmem:[#allocation2 + $0xe0] sm:$0xff] %v209
      %223 = vst [vmem:[#allocation2 + $0xf8] sm:$0xff] %v210
      %224 = vst [vmem:[#allocation2 + $0x110] sm:$0xff] %v211
      %225 = vst [vmem:[#allocation2 + $0x128] sm:$0xf] %v212
      %v226 = vld [vmem:[%s163 + $0x2] sm:$0xff]
      %v227 = vld [vmem:[%s163 + $0xa] sm:$0xff]
      %v228 = vld [vmem:[%s163 + $0x12] sm:$0xff]
      %v229 = vld [vmem:[%s163 + $0x1a] sm:$0xff]
      %v230 = vld [vmem:[%s163 + $0x22] sm:$0xff]
      %v231 = vld [vmem:[%s163 + $0x2a] sm:$0xff]
      %v232 = vld [vmem:[%s163 + $0x32] sm:$0xff]
      %v233 = vld [vmem:[%s163 + $0x3a] sm:$0xff]
      %v234 = vld [vmem:[%s163 + $0x42] sm:$0xff]
      %v235 = vld [vmem:[%s163 + $0x4a] sm:$0xff]
      %v236 = vld [vmem:[%s163 + $0x52] sm:$0xff]
      %v237 = vld [vmem:[%s163 + $0x5a] sm:$0xff]
      %v238 = vld [vmem:[%s163 + $0x62] sm:$0xf]
      %239 = vst [vmem:[#allocation2 + $0x10] sm:$0xff] %v226
      %240 = vst [vmem:[#allocation2 + $0x28] sm:$0xff] %v227
      %241 = vst [vmem:[#allocation2 + $0x40] sm:$0xff] %v228
      %242 = vst [vmem:[#allocation2 + $0x58] sm:$0xff] %v229
      %243 = vst [vmem:[#allocation2 + $0x70] sm:$0xff] %v230
      %244 = vst [vmem:[#allocation2 + $0x88] sm:$0xff] %v231
      %245 = vst [vmem:[#allocation2 + $0xa0] sm:$0xff] %v232
      %246 = vst [vmem:[#allocation2 + $0xb8] sm:$0xff] %v233
      %247 = vst [vmem:[#allocation2 + $0xd0] sm:$0xff] %v234
      %248 = vst [vmem:[#allocation2 + $0xe8] sm:$0xff] %v235
      %249 = vst [vmem:[#allocation2 + $0x100] sm:$0xff] %v236
      %250 = vst [vmem:[#allocation2 + $0x118] sm:$0xff] %v237
      %251 = vst [vmem:[#allocation2 + $0x130] sm:$0xf] %v238
      %v252 = vld [vmem:[#allocation2] sm:$0xff]
      %v253 = vld [vmem:[#allocation2 + $0x8] sm:$0xff]
      %v254 = vld [vmem:[#allocation2 + $0x10] sm:$0xff]
      %v255 = vld [vmem:[#allocation2 + $0x18] sm:$0xff]
      %v256 = vld [vmem:[#allocation2 + $0x20] sm:$0xff]
      %v257 = vld [vmem:[#allocation2 + $0x28] sm:$0xff]
      %v258 = vld [vmem:[#allocation2 + $0x30] sm:$0xff]
      %v259 = vld [vmem:[#allocation2 + $0x38] sm:$0xff]
      %v260 = vld [vmem:[#allocation2 + $0x40] sm:$0xff]
      %v261 = vld [vmem:[#allocation2 + $0x48] sm:$0xff]
      %v262 = vld [vmem:[#allocation2 + $0x50] sm:$0xff]
      %v263 = vld [vmem:[#allocation2 + $0x58] sm:$0xff]
      %v264 = vld [vmem:[#allocation2 + $0x60] sm:$0xff]
      %v265 = vld [vmem:[#allocation2 + $0x68] sm:$0xff]
      %v266 = vld [vmem:[#allocation2 + $0x70] sm:$0xff]
      %v267 = vld [vmem:[#allocation2 + $0x78] sm:$0xff]
      %v268 = vld [vmem:[#allocation2 + $0x80] sm:$0xff]
      %v269 = vld [vmem:[#allocation2 + $0x88] sm:$0xff]
      %v270 = vld [vmem:[#allocation2 + $0x90] sm:$0xff]
      %v271 = vld [vmem:[#allocation2 + $0x98] sm:$0xff]
      %v272 = vld [vmem:[#allocation2 + $0xa0] sm:$0xff]
      %v273 = vld [vmem:[#allocation2 + $0xa8] sm:$0xff]
      %v274 = vld [vmem:[#allocation2 + $0xb0] sm:$0xff]
      %v275 = vld [vmem:[#allocation2 + $0xb8] sm:$0xff]
      %v276 = vld [vmem:[#allocation2 + $0xc0] sm:$0xff]
      %v277 = vld [vmem:[#allocation2 + $0xc8] sm:$0xff]
      %v278 = vld [vmem:[#allocation2 + $0xd0] sm:$0xff]
      %v279 = vld [vmem:[#allocation2 + $0xd8] sm:$0xff]
      %v280 = vld [vmem:[#allocation2 + $0xe0] sm:$0xff]
      %v281 = vld [vmem:[#allocation2 + $0xe8] sm:$0xff]
      %v282 = vld [vmem:[%s1] sm:$0xff]
      %v283 = vld [vmem:[%s1 + $0x8] sm:$0xff]
      %v284 = vld [vmem:[%s1 + $0x10] sm:$0xff]
      %v285 = vld [vmem:[%s1 + $0x18] sm:$0xff]
      %v286 = vld [vmem:[%s1 + $0x20] sm:$0xff]
      %v287 = vld [vmem:[%s1 + $0x28] sm:$0xff]
      %v288 = vld [vmem:[%s1 + $0x30] sm:$0xff]
      %v289 = vld [vmem:[%s1 + $0x38] sm:$0xff]
      %v290 = vld [vmem:[%s1 + $0x40] sm:$0xff]
      %v291 = vld [vmem:[%s1 + $0x48] sm:$0xff]
      %v292 = vld [vmem:[%s1 + $0x50] sm:$0xff]
      %v293 = vld [vmem:[%s1 + $0x58] sm:$0xff]
      %v294 = vld [vmem:[%s1 + $0x60] sm:$0xff]
      %v295 = vld [vmem:[%s1 + $0x68] sm:$0xff]
      %v296 = vld [vmem:[%s1 + $0x70] sm:$0xff]
      %v297 = vld [vmem:[%s1 + $0x78] sm:$0xff]
      %v298 = vld [vmem:[%s1 + $0x80] sm:$0xff]
      %v299 = vld [vmem:[%s1 + $0x88] sm:$0xff]
      %v300 = vld [vmem:[%s1 + $0x90] sm:$0xff]
      %v301 = vld [vmem:[%s1 + $0x98] sm:$0xff]
      %v302 = vld [vmem:[%s1 + $0xa0] sm:$0xff]
      %v303 = vld [vmem:[%s1 + $0xa8] sm:$0xff]
      %v304 = vld [vmem:[%s1 + $0xb0] sm:$0xff]
      %v305 = vld [vmem:[%s1 + $0xb8] sm:$0xff]
      %v306 = vld [vmem:[%s1 + $0xc0] sm:$0xff]
      %v307 = vld [vmem:[%s1 + $0xc8] sm:$0xff]
      %v308 = vld [vmem:[%s1 + $0xd0] sm:$0xff]
      %v309 = vld [vmem:[%s1 + $0xd8] sm:$0xff]
      %v310 = vld [vmem:[%s1 + $0xe0] sm:$0xff]
      %v311 = vld [vmem:[%s1 + $0xe8] sm:$0xff]
      %v312 = vld [vmem:[%s1 + $0xf0] sm:$0xff]
      %v313 = vld [vmem:[%s1 + $0xf8] sm:$0xff]
      %v314 = vld [vmem:[%s1 + $0x100] sm:$0xff]
      %v315 = vld [vmem:[%s1 + $0x108] sm:$0xff]
      %v316 = vld [vmem:[%s1 + $0x110] sm:$0xff]
      %v317 = vld [vmem:[%s1 + $0x118] sm:$0xff]
      %v318 = vld [vmem:[%s1 + $0x120] sm:$0xff]
      %v319 = vld [vmem:[%s1 + $0x128] sm:$0xff]
      %v320 = vld [vmem:[%s1 + $0x130] sm:$0xff]
      %v321 = vld [vmem:[%s1 + $0x138] sm:$0xff]
      %v322 = vld [vmem:[%s1 + $0x140] sm:$0xff]
      %v323 = vld [vmem:[%s1 + $0x148] sm:$0xff]
      %v324 = vld [vmem:[%s1 + $0x150] sm:$0xff]
      %v325 = vld [vmem:[%s1 + $0x158] sm:$0xff]
      %v326 = vld [vmem:[%s1 + $0x160] sm:$0xff]
      %v327 = vld [vmem:[%s1 + $0x168] sm:$0xff]
      %v328 = vld [vmem:[%s1 + $0x170] sm:$0xff]
      %v329 = vld [vmem:[%s1 + $0x178] sm:$0xff]
      %v330 = vld [vmem:[#allocation2 + $0x18] sm:$0xfc]
      %v331 = vld [vmem:[#allocation2 + $0x20] sm:$0xfc]
      %v332 = vld [vmem:[#allocation2 + $0x28] sm:$0xfc]
      %v333 = vld [vmem:[#allocation2 + $0xf0] sm:$0xff]
      %v334 = vld [vmem:[#allocation2 + $0xf8] sm:$0xff]
      %v335 = vld [vmem:[#allocation2 + $0x100] sm:$0xff]
      %v336 = vld [vmem:[#allocation2 + $0x108] sm:$0x3]
      %v337 = vld [vmem:[#allocation2 + $0x110] sm:$0x3]
      %v338 = vld [vmem:[#allocation2 + $0x118] sm:$0x3]
      %s339 = scalar_lea.vmem %s1, 384
      %v340 = vld [vmem:[%s339] sm:$0xff]
      %v341 = vld [vmem:[%s339 + $0x8] sm:$0xff]
      %v342 = vld [vmem:[%s339 + $0x10] sm:$0xff]
      %v343 = vld [vmem:[%s339 + $0x18] sm:$0xff]
      %v344 = vld [vmem:[%s339 + $0x20] sm:$0xff]
      %v345 = vld [vmem:[%s339 + $0x28] sm:$0xff]
      %v346 = vld [vmem:[%s339 + $0x30] sm:$0xff]
      %v347 = vld [vmem:[%s339 + $0x38] sm:$0xff]
      %v348 = vld [vmem:[%s339 + $0x40] sm:$0xff]
      %v349 = vld [vmem:[%s339 + $0x48] sm:$0xff]
      %v350 = vld [vmem:[%s339 + $0x50] sm:$0xff]
      %v351 = vld [vmem:[%s339 + $0x58] sm:$0xff]
      %v352 = vld [vmem:[%s339 + $0x60] sm:$0xff]
      %v353 = vld [vmem:[%s339 + $0x68] sm:$0xff]
      %v354 = vld [vmem:[%s339 + $0x70] sm:$0xff]
      %v355 = vld [vmem:[%s339 + $0x78] sm:$0xff]
      %v356 = vld [vmem:[%s339 + $0x80] sm:$0xff]
      %v357 = vld [vmem:[%s339 + $0x88] sm:$0xff]
      %v358 = vld [vmem:[%s339 + $0x90] sm:$0xff]
      %v359 = vld [vmem:[%s339 + $0x98] sm:$0xff]
      %v360 = vld [vmem:[%s339 + $0xa0] sm:$0xff]
      %v361 = vld [vmem:[%s339 + $0xa8] sm:$0xff]
      %v362 = vld [vmem:[%s339 + $0xb0] sm:$0xff]
      %v363 = vld [vmem:[%s339 + $0xb8] sm:$0xff]
      %v364 = vld [vmem:[%s339 + $0xc0] sm:$0xff]
      %v365 = vld [vmem:[%s339 + $0xc8] sm:$0xff]
      %v366 = vld [vmem:[%s339 + $0xd0] sm:$0xff]
      %v367 = vld [vmem:[%s339 + $0xd8] sm:$0xff]
      %v368 = vld [vmem:[%s339 + $0xe0] sm:$0xff]
      %v369 = vld [vmem:[%s339 + $0xe8] sm:$0xff]
      %v370 = vld [vmem:[%s339 + $0xf0] sm:$0xff]
      %v371 = vld [vmem:[%s339 + $0xf8] sm:$0xff]
      %v372 = vld [vmem:[%s339 + $0x100] sm:$0xff]
      %v373 = vld [vmem:[%s339 + $0x108] sm:$0xff]
      %v374 = vld [vmem:[%s339 + $0x110] sm:$0xff]
      %v375 = vld [vmem:[%s339 + $0x118] sm:$0xff]
      %v376 = vld [vmem:[%s339 + $0x120] sm:$0xff]
      %v377 = vld [vmem:[%s339 + $0x128] sm:$0xff]
      %v378 = vld [vmem:[%s339 + $0x130] sm:$0xff]
      %v379 = vld [vmem:[%s339 + $0x138] sm:$0xff]
      %v380 = vld [vmem:[%s339 + $0x140] sm:$0xff]
      %v381 = vld [vmem:[%s339 + $0x148] sm:$0xff]
      %v382 = vld [vmem:[%s339 + $0x150] sm:$0xff]
      %v383 = vld [vmem:[%s339 + $0x158] sm:$0xff]
      %v384 = vld [vmem:[%s339 + $0x160] sm:$0xff]
      %v385 = vld [vmem:[%s339 + $0x168] sm:$0xff]
      %v386 = vld [vmem:[%s339 + $0x170] sm:$0xff]
      %v387 = vld [vmem:[%s339 + $0x178] sm:$0xff]
      %vm421 = vcmask 1045504
      %v422 = vrot.slane %v330, 2
      %v423 = vrot.slane %v258, 2
      %v424 = vsel %vm421, %v422, %v423
      %v425 = vrot.slane %v331, 2
      %v426 = vrot.slane %v259, 2
      %v427 = vsel %vm421, %v425, %v426
      %v428 = vrot.slane %v332, 2
      %v429 = vrot.slane %v260, 2
      %v430 = vsel %vm421, %v428, %v429
      %v431 = vrot.slane %v261, 2
      %v432 = vsel %vm421, %v423, %v431
      %v433 = vrot.slane %v262, 2
      %v434 = vsel %vm421, %v426, %v433
      %v435 = vrot.slane %v263, 2
      %v436 = vsel %vm421, %v429, %v435
      %v437 = vrot.slane %v264, 2
      %v438 = vsel %vm421, %v431, %v437
      %v439 = vrot.slane %v265, 2
      %v440 = vsel %vm421, %v433, %v439
      %v441 = vrot.slane %v266, 2
      %v442 = vsel %vm421, %v435, %v441
      %v443 = vrot.slane %v267, 2
      %v444 = vsel %vm421, %v437, %v443
      %v445 = vrot.slane %v268, 2
      %v446 = vsel %vm421, %v439, %v445
      %v447 = vrot.slane %v269, 2
      %v448 = vsel %vm421, %v441, %v447
      %v449 = vrot.slane %v270, 2
      %v450 = vsel %vm421, %v443, %v449
      %v451 = vrot.slane %v271, 2
      %v452 = vsel %vm421, %v445, %v451
      %v453 = vrot.slane %v272, 2
      %v454 = vsel %vm421, %v447, %v453
      %v455 = vrot.slane %v273, 2
      %v456 = vsel %vm421, %v449, %v455
      %v457 = vrot.slane %v274, 2
      %v458 = vsel %vm421, %v451, %v457
      %v459 = vrot.slane %v275, 2
      %v460 = vsel %vm421, %v453, %v459
      %v461 = vrot.slane %v276, 2
      %v462 = vsel %vm421, %v455, %v461
      %v463 = vrot.slane %v277, 2
      %v464 = vsel %vm421, %v457, %v463
      %v465 = vrot.slane %v278, 2
      %v466 = vsel %vm421, %v459, %v465
      %v467 = vrot.slane %v279, 2
      %v468 = vsel %vm421, %v461, %v467
      %v469 = vrot.slane %v280, 2
      %v470 = vsel %vm421, %v463, %v469
      %v471 = vrot.slane %v281, 2
      %v472 = vsel %vm421, %v465, %v471
      %v473 = vrot.slane %v333, 2
      %v474 = vsel %vm421, %v467, %v473
      %v475 = vrot.slane %v334, 2
      %v476 = vsel %vm421, %v469, %v475
      %v477 = vrot.slane %v335, 2
      %v478 = vsel %vm421, %v471, %v477
      %v479 = vrot.slane %v336, 2
      %v480 = vsel %vm421, %v473, %v479
      %v481 = vrot.slane %v337, 2
      %v482 = vsel %vm421, %v475, %v481
      %v483 = vrot.slane %v338, 2
      %v484 = vsel %vm421, %v477, %v483
      %515 = vmatprep.subr.mxu0 0.0
      %516 = vmatpush1.msra.mxu0 %v340
      %517 = vmatprep.subr.mxu0 0.0
      %518 = vmatpush1.msra.mxu0 %v341
      %519 = vmatprep.subr.mxu0 0.0
      %520 = vmatpush1.msra.mxu0 %v342
      %521 = vmatprep.subr.mxu0 0.0
      %522 = vmatpush1.msra.mxu0 %v343
      %523 = vmatprep.subr.mxu0 0.0
      %524 = vmatpush1.msra.mxu0 %v344
      %525 = vmatprep.subr.mxu0 0.0
      %526 = vmatpush1.msra.mxu0 %v345
      %527 = vmatprep.subr.mxu0 0.0
      %528 = vmatpush1.msra.mxu0 %v346
      %529 = vmatprep.subr.mxu0 0.0
      %530 = vmatpush1.msra.mxu0 %v347
      %531 = vmatprep.subr.mxu0 0.0
      %532 = vmatpush1.msra.mxu0 %v348
      %533 = vmatprep.subr.mxu0 0.0
      %534 = vmatpush1.msra.mxu0 %v349
      %535 = vmatprep.subr.mxu0 0.0
      %536 = vmatpush1.msra.mxu0 %v350
      %537 = vmatprep.subr.mxu0 0.0
      %538 = vmatpush1.msra.mxu0 %v351
      %539 = vmatprep.subr.mxu0 0.0
      %540 = vmatpush1.msra.mxu0 %v352
      %541 = vmatprep.subr.mxu0 0.0
      %542 = vmatpush1.msra.mxu0 %v353
      %543 = vmatprep.subr.mxu0 0.0
      %544 = vmatpush1.msra.mxu0 %v354
      %545 = vmatprep.subr.mxu0 0.0
      %546 = vmatpush1.msra.mxu0 %v355
      %547 = vmatprep.subr.mxu0 0.0
      %548 = vmatpush1.msra.mxu0 %v356
      %549 = vmatprep.subr.mxu0 0.0
      %550 = vmatpush1.msra.mxu0 %v357
      %551 = vmatprep.subr.mxu0 0.0
      %552 = vmatpush1.msra.mxu0 %v358
      %553 = vmatprep.subr.mxu0 0.0
      %554 = vmatpush1.msra.mxu0 %v359
      %555 = vmatprep.subr.mxu0 0.0
      %556 = vmatpush1.msra.mxu0 %v360
      %557 = vmatprep.subr.mxu0 0.0
      %558 = vmatpush1.msra.mxu0 %v361
      %559 = vmatprep.subr.mxu0 0.0
      %560 = vmatpush1.msra.mxu0 %v362
      %561 = vmatprep.subr.mxu0 0.0
      %562 = vmatpush1.msra.mxu0 %v363
      %563 = vmatprep.subr.mxu0 0.0
      %564 = vmatpush1.msra.mxu0 %v364
      %565 = vmatprep.subr.mxu0 0.0
      %566 = vmatpush1.msra.mxu0 %v365
      %567 = vmatprep.subr.mxu0 0.0
      %568 = vmatpush1.msra.mxu0 %v366
      %569 = vmatprep.subr.mxu0 0.0
      %570 = vmatpush1.msra.mxu0 %v367
      %571 = vmatprep.subr.mxu0 0.0
      %572 = vmatpush1.msra.mxu0 %v368
      %573 = vmatprep.subr.mxu0 0.0
      %574 = vmatpush1.msra.mxu0 %v369
      %575 = vmatprep.subr.mxu0 0.0
      %576 = vmatpush1.msra.mxu0 %v370
      %577 = vmatprep.subr.mxu0 0.0
      %578 = vmatpush1.msra.mxu0 %v371
      %579 = vmatprep.mubr.f32.mxu0 %v427
      %580 = vmatmul.mubr.f32.gmra.mrb[0].mxu0 %v424
      %v581 = vpop.f32.mrb[0].mxu0
      %v582 = vadd.f32 0.0, %v581
      %v583 = vpop.f32.mrb[0].mxu0
      %584 = vmatprep.mubr.f32.mxu0 %v434
      %585 = vmatmul.mubr.f32.gmra.mrb[0].mxu0 %v432
      %v586 = vpop.f32.mrb[0].mxu0
      %v587 = vadd.f32 0.0, %v586
      %v588 = vpop.f32.mrb[0].mxu0
      %589 = vmatprep.mubr.f32.mxu0 %v440
      %590 = vmatmul.mubr.f32.gmra.mrb[0].mxu0 %v438
      %v591 = vpop.f32.mrb[0].mxu0
      %v592 = vadd.f32 0.0, %v591
      %v593 = vpop.f32.mrb[0].mxu0
      %594 = vmatprep.mubr.f32.mxu0 %v446
      %595 = vmatmul.mubr.f32.gmra.mrb[0].mxu0 %v444
      %v596 = vpop.f32.mrb[0].mxu0
      %v597 = vadd.f32 0.0, %v596
      %v598 = vpop.f32.mrb[0].mxu0
      %599 = vmatprep.mubr.f32.mxu0 %v452
      %600 = vmatmul.mubr.f32.gmra.mrb[0].mxu0 %v450
      %v601 = vpop.f32.mrb[0].mxu0
      %v602 = vadd.f32 0.0, %v601
      %v603 = vpop.f32.mrb[0].mxu0
      %604 = vmatprep.mubr.f32.mxu0 %v458
      %605 = vmatmul.mubr.f32.gmra.mrb[0].mxu0 %v456
      %v606 = vpop.f32.mrb[0].mxu0
      %v607 = vadd.f32 0.0, %v606
      %v608 = vpop.f32.mrb[0].mxu0
      %609 = vmatprep.mubr.f32.mxu0 %v464
      %610 = vmatmul.mubr.f32.gmra.mrb[0].mxu0 %v462
      %v611 = vpop.f32.mrb[0].mxu0
      %v612 = vadd.f32 0.0, %v611
      %v613 = vpop.f32.mrb[0].mxu0
      %614 = vmatprep.mubr.f32.mxu0 %v470
      %615 = vmatmul.mubr.f32.gmra.mrb[0].mxu0 %v468
      %v616 = vpop.f32.mrb[0].mxu0
      %v617 = vadd.f32 0.0, %v616
      %v618 = vpop.f32.mrb[0].mxu0
      %619 = vmatprep.mubr.f32.mxu0 %v476
      %620 = vmatmul.mubr.f32.gmra.mrb[0].mxu0 %v474
      %v621 = vpop.f32.mrb[0].mxu0
      %v622 = vadd.f32 0.0, %v621
      %v623 = vpop.f32.mrb[0].mxu0
      %624 = vmatprep.mubr.f32.mxu0 %v482
      %625 = vmatmul.mubr.f32.gmra.mrb[0].mxu0 %v480
      %v626 = vpop.f32.mrb[0].mxu0
      %v627 = vadd.f32 0.0, %v626
      %v628 = vpop.f32.mrb[0].mxu0
      %629 = vdwg.mxu0
      %630 = vmatprep.subr.mxu0 0.0
      %631 = vmatpush1.msra.mxu0 %v372
      %632 = vmatprep.subr.mxu0 0.0
      %633 = vmatpush1.msra.mxu0 %v373
      %634 = vmatprep.subr.mxu0 0.0
      %635 = vmatpush1.msra.mxu0 %v374
      %636 = vmatprep.subr.mxu0 0.0
      %637 = vmatpush1.msra.mxu0 %v375
      %638 = vmatprep.subr.mxu0 0.0
      %639 = vmatpush1.msra.mxu0 %v376
      %640 = vmatprep.subr.mxu0 0.0
      %641 = vmatpush1.msra.mxu0 %v377
      %642 = vmatprep.subr.mxu0 0.0
      %643 = vmatpush1.msra.mxu0 %v378
      %644 = vmatprep.subr.mxu0 0.0
      %645 = vmatpush1.msra.mxu0 %v379
      %646 = vmatprep.subr.mxu0 0.0
      %647 = vmatpush1.msra.mxu0 %v380
      %648 = vmatprep.subr.mxu0 0.0
      %649 = vmatpush1.msra.mxu0 %v381
      %650 = vmatprep.subr.mxu0 0.0
      %651 = vmatpush1.msra.mxu0 %v382
      %652 = vmatprep.subr.mxu0 0.0
      %653 = vmatpush1.msra.mxu0 %v383
      %654 = vmatprep.subr.mxu0 0.0
      %655 = vmatpush1.msra.mxu0 %v384
      %656 = vmatprep.subr.mxu0 0.0
      %657 = vmatpush1.msra.mxu0 %v385
      %658 = vmatprep.subr.mxu0 0.0
      %659 = vmatpush1.msra.mxu0 %v386
      %660 = vmatprep.subr.mxu0 0.0
      %661 = vmatpush1.msra.mxu0 %v387
      %662 = vmatprep.subr.mxu0 0.0
      %663 = vmatpush1.msra.mxu0 0.0
      %664 = vmatprep.subr.mxu0 0.0
      %665 = vmatpush1.msra.mxu0 0.0
      %666 = vmatprep.subr.mxu0 0.0
      %667 = vmatpush1.msra.mxu0 0.0
      %668 = vmatprep.subr.mxu0 0.0
      %669 = vmatpush1.msra.mxu0 0.0
      %670 = vmatprep.subr.mxu0 0.0
      %671 = vmatpush1.msra.mxu0 0.0
      %672 = vmatprep.subr.mxu0 0.0
      %673 = vmatpush1.msra.mxu0 0.0
      %674 = vmatprep.subr.mxu0 0.0
      %675 = vmatpush1.msra.mxu0 0.0
      %676 = vmatprep.subr.mxu0 0.0
      %677 = vmatpush1.msra.mxu0 0.0
      %678 = vmatprep.subr.mxu0 0.0
      %679 = vmatpush1.msra.mxu0 0.0
      %680 = vmatprep.subr.mxu0 0.0
      %681 = vmatpush1.msra.mxu0 0.0
      %682 = vmatprep.subr.mxu0 0.0
      %683 = vmatpush1.msra.mxu0 0.0
      %684 = vmatprep.subr.mxu0 0.0
      %685 = vmatpush1.msra.mxu0 0.0
      %686 = vmatprep.subr.mxu0 0.0
      %687 = vmatpush1.msra.mxu0 0.0
      %688 = vmatprep.subr.mxu0 0.0
      %689 = vmatpush1.msra.mxu0 0.0
      %690 = vmatprep.subr.mxu0 0.0
      %691 = vmatpush1.msra.mxu0 0.0
      %692 = vmatprep.subr.mxu0 0.0
      %693 = vmatpush1.msra.mxu0 0.0
      %694 = vmatprep.mubr.f32.mxu0 0.0
      %695 = vmatmul.mubr.f32.gmra.mrb[0].mxu0 %v430
      %v696 = vpop.f32.mrb[0].mxu0
      %v697 = vadd.f32 %v582, %v696
      %v698 = vpop.f32.mrb[0].mxu0
      %699 = vmatprep.mubr.f32.mxu0 0.0
      %700 = vmatmul.mubr.f32.gmra.mrb[0].mxu0 %v436
      %v701 = vpop.f32.mrb[0].mxu0
      %v702 = vadd.f32 %v587, %v701
      %v703 = vpop.f32.mrb[0].mxu0
      %704 = vmatprep.mubr.f32.mxu0 0.0
      %705 = vmatmul.mubr.f32.gmra.mrb[0].mxu0 %v442
      %v706 = vpop.f32.mrb[0].mxu0
      %v707 = vadd.f32 %v592, %v706
      %v708 = vpop.f32.mrb[0].mxu0
      %709 = vmatprep.mubr.f32.mxu0 0.0
      %710 = vmatmul.mubr.f32.gmra.mrb[0].mxu0 %v448
      %v711 = vpop.f32.mrb[0].mxu0
      %v712 = vadd.f32 %v597, %v711
      %v713 = vpop.f32.mrb[0].mxu0
      %714 = vmatprep.mubr.f32.mxu0 0.0
      %715 = vmatmul.mubr.f32.gmra.mrb[0].mxu0 %v454
      %v716 = vpop.f32.mrb[0].mxu0
      %v717 = vadd.f32 %v602, %v716
      %v718 = vpop.f32.mrb[0].mxu0
      %719 = vmatprep.mubr.f32.mxu0 0.0
      %720 = vmatmul.mubr.f32.gmra.mrb[0].mxu0 %v460
      %v721 = vpop.f32.mrb[0].mxu0
      %v722 = vadd.f32 %v607, %v721
      %v723 = vpop.f32.mrb[0].mxu0
      %724 = vmatprep.mubr.f32.mxu0 0.0
      %725 = vmatmul.mubr.f32.gmra.mrb[0].mxu0 %v466
      %v726 = vpop.f32.mrb[0].mxu0
      %v727 = vadd.f32 %v612, %v726
      %v728 = vpop.f32.mrb[0].mxu0
      %729 = vmatprep.mubr.f32.mxu0 0.0
      %730 = vmatmul.mubr.f32.gmra.mrb[0].mxu0 %v472
      %v731 = vpop.f32.mrb[0].mxu0
      %v732 = vadd.f32 %v617, %v731
      %v733 = vpop.f32.mrb[0].mxu0
      %734 = vmatprep.mubr.f32.mxu0 0.0
      %735 = vmatmul.mubr.f32.gmra.mrb[0].mxu0 %v478
      %v736 = vpop.f32.mrb[0].mxu0
      %v737 = vadd.f32 %v622, %v736
      %v738 = vpop.f32.mrb[0].mxu0
      %739 = vmatprep.mubr.f32.mxu0 0.0
      %740 = vmatmul.mubr.f32.gmra.mrb[0].mxu0 %v484
      %v741 = vpop.f32.mrb[0].mxu0
      %v742 = vadd.f32 %v627, %v741
      %v743 = vpop.f32.mrb[0].mxu0
      %744 = vdwg.mxu0
      %745 = vmatprep.subr.mxu0 0.0
      %746 = vmatpush1.msra.mxu0 %v282
      %747 = vmatprep.subr.mxu0 0.0
      %748 = vmatpush1.msra.mxu0 %v283
      %749 = vmatprep.subr.mxu0 0.0
      %750 = vmatpush1.msra.mxu0 %v284
      %751 = vmatprep.subr.mxu0 0.0
      %752 = vmatpush1.msra.mxu0 %v285
      %753 = vmatprep.subr.mxu0 0.0
      %754 = vmatpush1.msra.mxu0 %v286
      %755 = vmatprep.subr.mxu0 0.0
      %756 = vmatpush1.msra.mxu0 %v287
      %757 = vmatprep.subr.mxu0 0.0
      %758 = vmatpush1.msra.mxu0 %v288
      %759 = vmatprep.subr.mxu0 0.0
      %760 = vmatpush1.msra.mxu0 %v289
      %761 = vmatprep.subr.mxu0 0.0
      %762 = vmatpush1.msra.mxu0 %v290
      %763 = vmatprep.subr.mxu0 0.0
      %764 = vmatpush1.msra.mxu0 %v291
      %765 = vmatprep.subr.mxu0 0.0
      %766 = vmatpush1.msra.mxu0 %v292
      %767 = vmatprep.subr.mxu0 0.0
      %768 = vmatpush1.msra.mxu0 %v293
      %769 = vmatprep.subr.mxu0 0.0
      %770 = vmatpush1.msra.mxu0 %v294
      %771 = vmatprep.subr.mxu0 0.0
      %772 = vmatpush1.msra.mxu0 %v295
      %773 = vmatprep.subr.mxu0 0.0
      %774 = vmatpush1.msra.mxu0 %v296
      %775 = vmatprep.subr.mxu0 0.0
      %776 = vmatpush1.msra.mxu0 %v297
      %777 = vmatprep.subr.mxu0 0.0
      %778 = vmatpush1.msra.mxu0 %v298
      %779 = vmatprep.subr.mxu0 0.0
      %780 = vmatpush1.msra.mxu0 %v299
      %781 = vmatprep.subr.mxu0 0.0
      %782 = vmatpush1.msra.mxu0 %v300
      %783 = vmatprep.subr.mxu0 0.0
      %784 = vmatpush1.msra.mxu0 %v301
      %785 = vmatprep.subr.mxu0 0.0
      %786 = vmatpush1.msra.mxu0 %v302
      %787 = vmatprep.subr.mxu0 0.0
      %788 = vmatpush1.msra.mxu0 %v303
      %789 = vmatprep.subr.mxu0 0.0
      %790 = vmatpush1.msra.mxu0 %v304
      %791 = vmatprep.subr.mxu0 0.0
      %792 = vmatpush1.msra.mxu0 %v305
      %793 = vmatprep.subr.mxu0 0.0
      %794 = vmatpush1.msra.mxu0 %v306
      %795 = vmatprep.subr.mxu0 0.0
      %796 = vmatpush1.msra.mxu0 %v307
      %797 = vmatprep.subr.mxu0 0.0
      %798 = vmatpush1.msra.mxu0 %v308
      %799 = vmatprep.subr.mxu0 0.0
      %800 = vmatpush1.msra.mxu0 %v309
      %801 = vmatprep.subr.mxu0 0.0
      %802 = vmatpush1.msra.mxu0 %v310
      %803 = vmatprep.subr.mxu0 0.0
      %804 = vmatpush1.msra.mxu0 %v311
      %805 = vmatprep.subr.mxu0 0.0
      %806 = vmatpush1.msra.mxu0 %v312
      %807 = vmatprep.subr.mxu0 0.0
      %808 = vmatpush1.msra.mxu0 %v313
      %809 = vmatprep.mubr.f32.mxu0 %v253
      %810 = vmatmul.mubr.f32.gmra.mrb[0].mxu0 %v252
      %v811 = vpop.f32.mrb[0].mxu0
      %v812 = vadd.f32 %v697, %v811
      %v813 = vpop.f32.mrb[0].mxu0
      %814 = vmatprep.mubr.f32.mxu0 %v256
      %815 = vmatmul.mubr.f32.gmra.mrb[0].mxu0 %v255
      %v816 = vpop.f32.mrb[0].mxu0
      %v817 = vadd.f32 %v702, %v816
      %v818 = vpop.f32.mrb[0].mxu0
      %819 = vmatprep.mubr.f32.mxu0 %v259
      %820 = vmatmul.mubr.f32.gmra.mrb[0].mxu0 %v258
      %v821 = vpop.f32.mrb[0].mxu0
      %v822 = vadd.f32 %v707, %v821
      %v823 = vpop.f32.mrb[0].mxu0
      %824 = vmatprep.mubr.f32.mxu0 %v262
      %825 = vmatmul.mubr.f32.gmra.mrb[0].mxu0 %v261
      %v826 = vpop.f32.mrb[0].mxu0
      %v827 = vadd.f32 %v712, %v826
      %v828 = vpop.f32.mrb[0].mxu0
      %829 = vmatprep.mubr.f32.mxu0 %v265
      %830 = vmatmul.mubr.f32.gmra.mrb[0].mxu0 %v264
      %v831 = vpop.f32.mrb[0].mxu0
      %v832 = vadd.f32 %v717, %v831
      %v833 = vpop.f32.mrb[0].mxu0
      %834 = vmatprep.mubr.f32.mxu0 %v268
      %835 = vmatmul.mubr.f32.gmra.mrb[0].mxu0 %v267
      %v836 = vpop.f32.mrb[0].mxu0
      %v837 = vadd.f32 %v722, %v836
      %v838 = vpop.f32.mrb[0].mxu0
      %839 = vmatprep.mubr.f32.mxu0 %v271
      %840 = vmatmul.mubr.f32.gmra.mrb[0].mxu0 %v270
      %v841 = vpop.f32.mrb[0].mxu0
      %v842 = vadd.f32 %v727, %v841
      %v843 = vpop.f32.mrb[0].mxu0
      %844 = vmatprep.mubr.f32.mxu0 %v274
      %845 = vmatmul.mubr.f32.gmra.mrb[0].mxu0 %v273
      %v846 = vpop.f32.mrb[0].mxu0
      %v847 = vadd.f32 %v732, %v846
      %v848 = vpop.f32.mrb[0].mxu0
      %849 = vmatprep.mubr.f32.mxu0 %v277
      %850 = vmatmul.mubr.f32.gmra.mrb[0].mxu0 %v276
      %v851 = vpop.f32.mrb[0].mxu0
      %v852 = vadd.f32 %v737, %v851
      %v853 = vpop.f32.mrb[0].mxu0
      %854 = vmatprep.mubr.f32.mxu0 %v280
      %855 = vmatmul.mubr.f32.gmra.mrb[0].mxu0 %v279
      %v856 = vpop.f32.mrb[0].mxu0
      %v857 = vadd.f32 %v742, %v856
      %v858 = vpop.f32.mrb[0].mxu0
      %859 = vdwg.mxu0
      %860 = vmatprep.subr.mxu0 0.0
      %861 = vmatpush1.msra.mxu0 %v314
      %862 = vmatprep.subr.mxu0 0.0
      %863 = vmatpush1.msra.mxu0 %v315
      %864 = vmatprep.subr.mxu0 0.0
      %865 = vmatpush1.msra.mxu0 %v316
      %866 = vmatprep.subr.mxu0 0.0
      %867 = vmatpush1.msra.mxu0 %v317
      %868 = vmatprep.subr.mxu0 0.0
      %869 = vmatpush1.msra.mxu0 %v318
      %870 = vmatprep.subr.mxu0 0.0
      %871 = vmatpush1.msra.mxu0 %v319
      %872 = vmatprep.subr.mxu0 0.0
      %873 = vmatpush1.msra.mxu0 %v320
      %874 = vmatprep.subr.mxu0 0.0
      %875 = vmatpush1.msra.mxu0 %v321
      %876 = vmatprep.subr.mxu0 0.0
      %877 = vmatpush1.msra.mxu0 %v322
      %878 = vmatprep.subr.mxu0 0.0
      %879 = vmatpush1.msra.mxu0 %v323
      %880 = vmatprep.subr.mxu0 0.0
      %881 = vmatpush1.msra.mxu0 %v324
      %882 = vmatprep.subr.mxu0 0.0
      %883 = vmatpush1.msra.mxu0 %v325
      %884 = vmatprep.subr.mxu0 0.0
      %885 = vmatpush1.msra.mxu0 %v326
      %886 = vmatprep.subr.mxu0 0.0
      %887 = vmatpush1.msra.mxu0 %v327
      %888 = vmatprep.subr.mxu0 0.0
      %889 = vmatpush1.msra.mxu0 %v328
      %890 = vmatprep.subr.mxu0 0.0
      %891 = vmatpush1.msra.mxu0 %v329
      %892 = vmatprep.subr.mxu0 0.0
      %893 = vmatpush1.msra.mxu0 0.0
      %894 = vmatprep.subr.mxu0 0.0
      %895 = vmatpush1.msra.mxu0 0.0
      %896 = vmatprep.subr.mxu0 0.0
      %897 = vmatpush1.msra.mxu0 0.0
      %898 = vmatprep.subr.mxu0 0.0
      %899 = vmatpush1.msra.mxu0 0.0
      %900 = vmatprep.subr.mxu0 0.0
      %901 = vmatpush1.msra.mxu0 0.0
      %902 = vmatprep.subr.mxu0 0.0
      %903 = vmatpush1.msra.mxu0 0.0
      %904 = vmatprep.subr.mxu0 0.0
      %905 = vmatpush1.msra.mxu0 0.0
      %906 = vmatprep.subr.mxu0 0.0
      %907 = vmatpush1.msra.mxu0 0.0
      %908 = vmatprep.subr.mxu0 0.0
      %909 = vmatpush1.msra.mxu0 0.0
      %910 = vmatprep.subr.mxu0 0.0
      %911 = vmatpush1.msra.mxu0 0.0
      %912 = vmatprep.subr.mxu0 0.0
      %913 = vmatpush1.msra.mxu0 0.0
      %914 = vmatprep.subr.mxu0 0.0
      %915 = vmatpush1.msra.mxu0 0.0
      %916 = vmatprep.subr.mxu0 0.0
      %917 = vmatpush1.msra.mxu0 0.0
      %918 = vmatprep.subr.mxu0 0.0
      %919 = vmatpush1.msra.mxu0 0.0
      %920 = vmatprep.subr.mxu0 0.0
      %921 = vmatpush1.msra.mxu0 0.0
      %922 = vmatprep.subr.mxu0 0.0
      %923 = vmatpush1.msra.mxu0 0.0
      %924 = vmatprep.mubr.f32.mxu0 0.0
      %925 = vmatmul.mubr.f32.gmra.mrb[0].mxu0 %v254
      %v926 = vpop.f32.mrb[0].mxu0
      %v927 = vadd.f32 %v812, %v926
      %v928 = vpop.f32.mrb[0].mxu0
      %929 = vmatprep.mubr.f32.mxu0 0.0
      %930 = vmatmul.mubr.f32.gmra.mrb[0].mxu0 %v257
      %v931 = vpop.f32.mrb[0].mxu0
      %v932 = vadd.f32 %v817, %v931
      %v933 = vpop.f32.mrb[0].mxu0
      %934 = vmatprep.mubr.f32.mxu0 0.0
      %935 = vmatmul.mubr.f32.gmra.mrb[0].mxu0 %v260
      %v936 = vpop.f32.mrb[0].mxu0
      %v937 = vadd.f32 %v822, %v936
      %v938 = vpop.f32.mrb[0].mxu0
      %939 = vmatprep.mubr.f32.mxu0 0.0
      %940 = vmatmul.mubr.f32.gmra.mrb[0].mxu0 %v263
      %v941 = vpop.f32.mrb[0].mxu0
      %v942 = vadd.f32 %v827, %v941
      %v943 = vpop.f32.mrb[0].mxu0
      %944 = vmatprep.mubr.f32.mxu0 0.0
      %945 = vmatmul.mubr.f32.gmra.mrb[0].mxu0 %v266
      %v946 = vpop.f32.mrb[0].mxu0
      %v947 = vadd.f32 %v832, %v946
      %v948 = vpop.f32.mrb[0].mxu0
      %949 = vmatprep.mubr.f32.mxu0 0.0
      %950 = vmatmul.mubr.f32.gmra.mrb[0].mxu0 %v269
      %v951 = vpop.f32.mrb[0].mxu0
      %v952 = vadd.f32 %v837, %v951
      %v953 = vpop.f32.mrb[0].mxu0
      %954 = vmatprep.mubr.f32.mxu0 0.0
      %955 = vmatmul.mubr.f32.gmra.mrb[0].mxu0 %v272
      %v956 = vpop.f32.mrb[0].mxu0
      %v957 = vadd.f32 %v842, %v956
      %v958 = vpop.f32.mrb[0].mxu0
      %959 = vmatprep.mubr.f32.mxu0 0.0
      %960 = vmatmul.mubr.f32.gmra.mrb[0].mxu0 %v275
      %v961 = vpop.f32.mrb[0].mxu0
      %v962 = vadd.f32 %v847, %v961
      %v963 = vpop.f32.mrb[0].mxu0
      %964 = vmatprep.mubr.f32.mxu0 0.0
      %965 = vmatmul.mubr.f32.gmra.mrb[0].mxu0 %v278
      %v966 = vpop.f32.mrb[0].mxu0
      %v967 = vadd.f32 %v852, %v966
      %v968 = vpop.f32.mrb[0].mxu0
      %969 = vmatprep.mubr.f32.mxu0 0.0
      %970 = vmatmul.mubr.f32.gmra.mrb[0].mxu0 %v281
      %v971 = vpop.f32.mrb[0].mxu0
      %v972 = vadd.f32 %v857, %v971
      %v973 = vpop.f32.mrb[0].mxu0
      %974 = vdwg.mxu0
      %v975 = vld [vmem:[#allocation2 + $0x30] sm:$0xf0]
      %v976 = vld [vmem:[#allocation2 + $0x38] sm:$0xf0]
      %v977 = vld [vmem:[#allocation2 + $0x40] sm:$0xf0]
      %v978 = vld [vmem:[#allocation2 + $0x48] sm:$0xff]
      %v979 = vld [vmem:[#allocation2 + $0x50] sm:$0xff]
      %v980 = vld [vmem:[#allocation2 + $0x58] sm:$0xff]
      %v981 = vld [vmem:[#allocation2 + $0x60] sm:$0xff]
      %v982 = vld [vmem:[#allocation2 + $0x68] sm:$0xff]
      %v983 = vld [vmem:[#allocation2 + $0x70] sm:$0xff]
      %v984 = vld [vmem:[#allocation2 + $0x78] sm:$0xff]
      %v985 = vld [vmem:[#allocation2 + $0x80] sm:$0xff]
      %v986 = vld [vmem:[#allocation2 + $0x88] sm:$0xff]
      %v987 = vld [vmem:[#allocation2 + $0x90] sm:$0xff]
      %v988 = vld [vmem:[#allocation2 + $0x98] sm:$0xff]
      %v989 = vld [vmem:[#allocation2 + $0xa0] sm:$0xff]
      %v990 = vld [vmem:[#allocation2 + $0xa8] sm:$0xff]
      %v991 = vld [vmem:[#allocation2 + $0xb0] sm:$0xff]
      %v992 = vld [vmem:[#allocation2 + $0xb8] sm:$0xff]
      %v993 = vld [vmem:[#allocation2 + $0xc0] sm:$0xff]
      %v994 = vld [vmem:[#allocation2 + $0xc8] sm:$0xff]
      %v995 = vld [vmem:[#allocation2 + $0xd0] sm:$0xff]
      %v996 = vld [vmem:[#allocation2 + $0xd8] sm:$0xff]
      %v997 = vld [vmem:[#allocation2 + $0xe0] sm:$0xff]
      %v998 = vld [vmem:[#allocation2 + $0xe8] sm:$0xff]
      %v999 = vld [vmem:[#allocation2 + $0xf0] sm:$0xff]
      %v1000 = vld [vmem:[#allocation2 + $0xf8] sm:$0xff]
      %v1001 = vld [vmem:[#allocation2 + $0x100] sm:$0xff]
      %v1002 = vld [vmem:[#allocation2 + $0x108] sm:$0xff]
      %v1003 = vld [vmem:[#allocation2 + $0x110] sm:$0xff]
      %v1004 = vld [vmem:[#allocation2 + $0x118] sm:$0xff]
      %v1005 = vld [vmem:[#allocation2 + $0x120] sm:$0xf]
      %v1006 = vld [vmem:[#allocation2 + $0x128] sm:$0xf]
      %v1007 = vld [vmem:[#allocation2 + $0x130] sm:$0xf]
      %s1008 = scalar_lea.vmem %s1, 768
      %v1009 = vld [vmem:[%s1008] sm:$0xff]
      %v1010 = vld [vmem:[%s1008 + $0x8] sm:$0xff]
      %v1011 = vld [vmem:[%s1008 + $0x10] sm:$0xff]
      %v1012 = vld [vmem:[%s1008 + $0x18] sm:$0xff]
      %v1013 = vld [vmem:[%s1008 + $0x20] sm:$0xff]
      %v1014 = vld [vmem:[%s1008 + $0x28] sm:$0xff]
      %v1015 = vld [vmem:[%s1008 + $0x30] sm:$0xff]
      %v1016 = vld [vmem:[%s1008 + $0x38] sm:$0xff]
      %v1017 = vld [vmem:[%s1008 + $0x40] sm:$0xff]
      %v1018 = vld [vmem:[%s1008 + $0x48] sm:$0xff]
      %v1019 = vld [vmem:[%s1008 + $0x50] sm:$0xff]
      %v1020 = vld [vmem:[%s1008 + $0x58] sm:$0xff]
      %v1021 = vld [vmem:[%s1008 + $0x60] sm:$0xff]
      %v1022 = vld [vmem:[%s1008 + $0x68] sm:$0xff]
      %v1023 = vld [vmem:[%s1008 + $0x70] sm:$0xff]
      %v1024 = vld [vmem:[%s1008 + $0x78] sm:$0xff]
      %v1025 = vld [vmem:[%s1008 + $0x80] sm:$0xff]
      %v1026 = vld [vmem:[%s1008 + $0x88] sm:$0xff]
      %v1027 = vld [vmem:[%s1008 + $0x90] sm:$0xff]
      %v1028 = vld [vmem:[%s1008 + $0x98] sm:$0xff]
      %v1029 = vld [vmem:[%s1008 + $0xa0] sm:$0xff]
      %v1030 = vld [vmem:[%s1008 + $0xa8] sm:$0xff]
      %v1031 = vld [vmem:[%s1008 + $0xb0] sm:$0xff]
      %v1032 = vld [vmem:[%s1008 + $0xb8] sm:$0xff]
      %v1033 = vld [vmem:[%s1008 + $0xc0] sm:$0xff]
      %v1034 = vld [vmem:[%s1008 + $0xc8] sm:$0xff]
      %v1035 = vld [vmem:[%s1008 + $0xd0] sm:$0xff]
      %v1036 = vld [vmem:[%s1008 + $0xd8] sm:$0xff]
      %v1037 = vld [vmem:[%s1008 + $0xe0] sm:$0xff]
      %v1038 = vld [vmem:[%s1008 + $0xe8] sm:$0xff]
      %v1039 = vld [vmem:[%s1008 + $0xf0] sm:$0xff]
      %v1040 = vld [vmem:[%s1008 + $0xf8] sm:$0xff]
      %v1041 = vld [vmem:[%s1008 + $0x100] sm:$0xff]
      %v1042 = vld [vmem:[%s1008 + $0x108] sm:$0xff]
      %v1043 = vld [vmem:[%s1008 + $0x110] sm:$0xff]
      %v1044 = vld [vmem:[%s1008 + $0x118] sm:$0xff]
      %v1045 = vld [vmem:[%s1008 + $0x120] sm:$0xff]
      %v1046 = vld [vmem:[%s1008 + $0x128] sm:$0xff]
      %v1047 = vld [vmem:[%s1008 + $0x130] sm:$0xff]
      %v1048 = vld [vmem:[%s1008 + $0x138] sm:$0xff]
      %v1049 = vld [vmem:[%s1008 + $0x140] sm:$0xff]
      %v1050 = vld [vmem:[%s1008 + $0x148] sm:$0xff]
      %v1051 = vld [vmem:[%s1008 + $0x150] sm:$0xff]
      %v1052 = vld [vmem:[%s1008 + $0x158] sm:$0xff]
      %v1053 = vld [vmem:[%s1008 + $0x160] sm:$0xff]
      %v1054 = vld [vmem:[%s1008 + $0x168] sm:$0xff]
      %v1055 = vld [vmem:[%s1008 + $0x170] sm:$0xff]
      %v1056 = vld [vmem:[%s1008 + $0x178] sm:$0xff]
      %vm1090 = vcmask 1043456
      %v1091 = vrot.slane %v975, 4
      %v1092 = vrot.slane %v978, 4
      %v1093 = vsel %vm1090, %v1091, %v1092
      %v1094 = vrot.slane %v976, 4
      %v1095 = vrot.slane %v979, 4
      %v1096 = vsel %vm1090, %v1094, %v1095
      %v1097 = vrot.slane %v977, 4
      %v1098 = vrot.slane %v980, 4
      %v1099 = vsel %vm1090, %v1097, %v1098
      %v1100 = vrot.slane %v981, 4
      %v1101 = vsel %vm1090, %v1092, %v1100
      %v1102 = vrot.slane %v982, 4
      %v1103 = vsel %vm1090, %v1095, %v1102
      %v1104 = vrot.slane %v983, 4
      %v1105 = vsel %vm1090, %v1098, %v1104
      %v1106 = vrot.slane %v984, 4
      %v1107 = vsel %vm1090, %v1100, %v1106
      %v1108 = vrot.slane %v985, 4
      %v1109 = vsel %vm1090, %v1102, %v1108
      %v1110 = vrot.slane %v986, 4
      %v1111 = vsel %vm1090, %v1104, %v1110
      %v1112 = vrot.slane %v987, 4
      %v1113 = vsel %vm1090, %v1106, %v1112
      %v1114 = vrot.slane %v988, 4
      %v1115 = vsel %vm1090, %v1108, %v1114
      %v1116 = vrot.slane %v989, 4
      %v1117 = vsel %vm1090, %v1110, %v1116
      %v1118 = vrot.slane %v990, 4
      %v1119 = vsel %vm1090, %v1112, %v1118
      %v1120 = vrot.slane %v991, 4
      %v1121 = vsel %vm1090, %v1114, %v1120
      %v1122 = vrot.slane %v992, 4
      %v1123 = vsel %vm1090, %v1116, %v1122
      %v1124 = vrot.slane %v993, 4
      %v1125 = vsel %vm1090, %v1118, %v1124
      %v1126 = vrot.slane %v994, 4
      %v1127 = vsel %vm1090, %v1120, %v1126
      %v1128 = vrot.slane %v995, 4
      %v1129 = vsel %vm1090, %v1122, %v1128
      %v1130 = vrot.slane %v996, 4
      %v1131 = vsel %vm1090, %v1124, %v1130
      %v1132 = vrot.slane %v997, 4
      %v1133 = vsel %vm1090, %v1126, %v1132
      %v1134 = vrot.slane %v998, 4
      %v1135 = vsel %vm1090, %v1128, %v1134
      %v1136 = vrot.slane %v999, 4
      %v1137 = vsel %vm1090, %v1130, %v1136
      %v1138 = vrot.slane %v1000, 4
      %v1139 = vsel %vm1090, %v1132, %v1138
      %v1140 = vrot.slane %v1001, 4
      %v1141 = vsel %vm1090, %v1134, %v1140
      %v1142 = vrot.slane %v1002, 4
      %v1143 = vsel %vm1090, %v1136, %v1142
      %v1144 = vrot.slane %v1003, 4
      %v1145 = vsel %vm1090, %v1138, %v1144
      %v1146 = vrot.slane %v1004, 4
      %v1147 = vsel %vm1090, %v1140, %v1146
      %v1148 = vrot.slane %v1005, 4
      %v1149 = vsel %vm1090, %v1142, %v1148
      %v1150 = vrot.slane %v1006, 4
      %v1151 = vsel %vm1090, %v1144, %v1150
      %v1152 = vrot.slane %v1007, 4
      %v1153 = vsel %vm1090, %v1146, %v1152
      %1184 = vmatprep.subr.mxu0 0.0
      %1185 = vmatpush1.msra.mxu0 %v1009
      %1186 = vmatprep.subr.mxu0 0.0
      %1187 = vmatpush1.msra.mxu0 %v1010
      %1188 = vmatprep.subr.mxu0 0.0
      %1189 = vmatpush1.msra.mxu0 %v1011
      %1190 = vmatprep.subr.mxu0 0.0
      %1191 = vmatpush1.msra.mxu0 %v1012
      %1192 = vmatprep.subr.mxu0 0.0
      %1193 = vmatpush1.msra.mxu0 %v1013
      %1194 = vmatprep.subr.mxu0 0.0
      %1195 = vmatpush1.msra.mxu0 %v1014
      %1196 = vmatprep.subr.mxu0 0.0
      %1197 = vmatpush1.msra.mxu0 %v1015
      %1198 = vmatprep.subr.mxu0 0.0
      %1199 = vmatpush1.msra.mxu0 %v1016
      %1200 = vmatprep.subr.mxu0 0.0
      %1201 = vmatpush1.msra.mxu0 %v1017
      %1202 = vmatprep.subr.mxu0 0.0
      %1203 = vmatpush1.msra.mxu0 %v1018
      %1204 = vmatprep.subr.mxu0 0.0
      %1205 = vmatpush1.msra.mxu0 %v1019
      %1206 = vmatprep.subr.mxu0 0.0
      %1207 = vmatpush1.msra.mxu0 %v1020
      %1208 = vmatprep.subr.mxu0 0.0
      %1209 = vmatpush1.msra.mxu0 %v1021
      %1210 = vmatprep.subr.mxu0 0.0
      %1211 = vmatpush1.msra.mxu0 %v1022
      %1212 = vmatprep.subr.mxu0 0.0
      %1213 = vmatpush1.msra.mxu0 %v1023
      %1214 = vmatprep.subr.mxu0 0.0
      %1215 = vmatpush1.msra.mxu0 %v1024
      %1216 = vmatprep.subr.mxu0 0.0
      %1217 = vmatpush1.msra.mxu0 %v1025
      %1218 = vmatprep.subr.mxu0 0.0
      %1219 = vmatpush1.msra.mxu0 %v1026
      %1220 = vmatprep.subr.mxu0 0.0
      %1221 = vmatpush1.msra.mxu0 %v1027
      %1222 = vmatprep.subr.mxu0 0.0
      %1223 = vmatpush1.msra.mxu0 %v1028
      %1224 = vmatprep.subr.mxu0 0.0
      %1225 = vmatpush1.msra.mxu0 %v1029
      %1226 = vmatprep.subr.mxu0 0.0
      %1227 = vmatpush1.msra.mxu0 %v1030
      %1228 = vmatprep.subr.mxu0 0.0
      %1229 = vmatpush1.msra.mxu0 %v1031
      %1230 = vmatprep.subr.mxu0 0.0
      %1231 = vmatpush1.msra.mxu0 %v1032
      %1232 = vmatprep.subr.mxu0 0.0
      %1233 = vmatpush1.msra.mxu0 %v1033
      %1234 = vmatprep.subr.mxu0 0.0
      %1235 = vmatpush1.msra.mxu0 %v1034
      %1236 = vmatprep.subr.mxu0 0.0
      %1237 = vmatpush1.msra.mxu0 %v1035
      %1238 = vmatprep.subr.mxu0 0.0
      %1239 = vmatpush1.msra.mxu0 %v1036
      %1240 = vmatprep.subr.mxu0 0.0
      %1241 = vmatpush1.msra.mxu0 %v1037
      %1242 = vmatprep.subr.mxu0 0.0
      %1243 = vmatpush1.msra.mxu0 %v1038
      %1244 = vmatprep.subr.mxu0 0.0
      %1245 = vmatpush1.msra.mxu0 %v1039
      %1246 = vmatprep.subr.mxu0 0.0
      %1247 = vmatpush1.msra.mxu0 %v1040
      %1248 = vmatprep.mubr.f32.mxu0 %v1096
      %1249 = vmatmul.mubr.f32.gmra.mrb[0].mxu0 %v1093
      %v1250 = vpop.f32.mrb[0].mxu0
      %v1251 = vadd.f32 0.0, %v1250
      %v1252 = vpop.f32.mrb[0].mxu0
      %1253 = vmatprep.mubr.f32.mxu0 %v1103
      %1254 = vmatmul.mubr.f32.gmra.mrb[0].mxu0 %v1101
      %v1255 = vpop.f32.mrb[0].mxu0
      %v1256 = vadd.f32 0.0, %v1255
      %v1257 = vpop.f32.mrb[0].mxu0
      %1258 = vmatprep.mubr.f32.mxu0 %v1109
      %1259 = vmatmul.mubr.f32.gmra.mrb[0].mxu0 %v1107
      %v1260 = vpop.f32.mrb[0].mxu0
      %v1261 = vadd.f32 0.0, %v1260
      %v1262 = vpop.f32.mrb[0].mxu0
      %1263 = vmatprep.mubr.f32.mxu0 %v1115
      %1264 = vmatmul.mubr.f32.gmra.mrb[0].mxu0 %v1113
      %v1265 = vpop.f32.mrb[0].mxu0
      %v1266 = vadd.f32 0.0, %v1265
      %v1267 = vpop.f32.mrb[0].mxu0
      %1268 = vmatprep.mubr.f32.mxu0 %v1121
      %1269 = vmatmul.mubr.f32.gmra.mrb[0].mxu0 %v1119
      %v1270 = vpop.f32.mrb[0].mxu0
      %v1271 = vadd.f32 0.0, %v1270
      %v1272 = vpop.f32.mrb[0].mxu0
      %1273 = vmatprep.mubr.f32.mxu0 %v1127
      %1274 = vmatmul.mubr.f32.gmra.mrb[0].mxu0 %v1125
      %v1275 = vpop.f32.mrb[0].mxu0
      %v1276 = vadd.f32 0.0, %v1275
      %v1277 = vpop.f32.mrb[0].mxu0
      %1278 = vmatprep.mubr.f32.mxu0 %v1133
      %1279 = vmatmul.mubr.f32.gmra.mrb[0].mxu0 %v1131
      %v1280 = vpop.f32.mrb[0].mxu0
      %v1281 = vadd.f32 0.0, %v1280
      %v1282 = vpop.f32.mrb[0].mxu0
      %1283 = vmatprep.mubr.f32.mxu0 %v1139
      %1284 = vmatmul.mubr.f32.gmra.mrb[0].mxu0 %v1137
      %v1285 = vpop.f32.mrb[0].mxu0
      %v1286 = vadd.f32 0.0, %v1285
      %v1287 = vpop.f32.mrb[0].mxu0
      %1288 = vmatprep.mubr.f32.mxu0 %v1145
      %1289 = vmatmul.mubr.f32.gmra.mrb[0].mxu0 %v1143
      %v1290 = vpop.f32.mrb[0].mxu0
      %v1291 = vadd.f32 0.0, %v1290
      %v1292 = vpop.f32.mrb[0].mxu0
      %1293 = vmatprep.mubr.f32.mxu0 %v1151
      %1294 = vmatmul.mubr.f32.gmra.mrb[0].mxu0 %v1149
      %v1295 = vpop.f32.mrb[0].mxu0
      %v1296 = vadd.f32 0.0, %v1295
      %v1297 = vpop.f32.mrb[0].mxu0
      %1298 = vdwg.mxu0
      %1299 = vmatprep.subr.mxu0 0.0
      %1300 = vmatpush1.msra.mxu0 %v1041
      %1301 = vmatprep.subr.mxu0 0.0
      %1302 = vmatpush1.msra.mxu0 %v1042
      %1303 = vmatprep.subr.mxu0 0.0
      %1304 = vmatpush1.msra.mxu0 %v1043
      %1305 = vmatprep.subr.mxu0 0.0
      %1306 = vmatpush1.msra.mxu0 %v1044
      %1307 = vmatprep.subr.mxu0 0.0
      %1308 = vmatpush1.msra.mxu0 %v1045
      %1309 = vmatprep.subr.mxu0 0.0
      %1310 = vmatpush1.msra.mxu0 %v1046
      %1311 = vmatprep.subr.mxu0 0.0
      %1312 = vmatpush1.msra.mxu0 %v1047
      %1313 = vmatprep.subr.mxu0 0.0
      %1314 = vmatpush1.msra.mxu0 %v1048
      %1315 = vmatprep.subr.mxu0 0.0
      %1316 = vmatpush1.msra.mxu0 %v1049
      %1317 = vmatprep.subr.mxu0 0.0
      %1318 = vmatpush1.msra.mxu0 %v1050
      %1319 = vmatprep.subr.mxu0 0.0
      %1320 = vmatpush1.msra.mxu0 %v1051
      %1321 = vmatprep.subr.mxu0 0.0
      %1322 = vmatpush1.msra.mxu0 %v1052
      %1323 = vmatprep.subr.mxu0 0.0
      %1324 = vmatpush1.msra.mxu0 %v1053
      %1325 = vmatprep.subr.mxu0 0.0
      %1326 = vmatpush1.msra.mxu0 %v1054
      %1327 = vmatprep.subr.mxu0 0.0
      %1328 = vmatpush1.msra.mxu0 %v1055
      %1329 = vmatprep.subr.mxu0 0.0
      %1330 = vmatpush1.msra.mxu0 %v1056
      %1331 = vmatprep.subr.mxu0 0.0
      %1332 = vmatpush1.msra.mxu0 0.0
      %1333 = vmatprep.subr.mxu0 0.0
      %1334 = vmatpush1.msra.mxu0 0.0
      %1335 = vmatprep.subr.mxu0 0.0
      %1336 = vmatpush1.msra.mxu0 0.0
      %1337 = vmatprep.subr.mxu0 0.0
      %1338 = vmatpush1.msra.mxu0 0.0
      %1339 = vmatprep.subr.mxu0 0.0
      %1340 = vmatpush1.msra.mxu0 0.0
      %1341 = vmatprep.subr.mxu0 0.0
      %1342 = vmatpush1.msra.mxu0 0.0
      %1343 = vmatprep.subr.mxu0 0.0
      %1344 = vmatpush1.msra.mxu0 0.0
      %1345 = vmatprep.subr.mxu0 0.0
      %1346 = vmatpush1.msra.mxu0 0.0
      %1347 = vmatprep.subr.mxu0 0.0
      %1348 = vmatpush1.msra.mxu0 0.0
      %1349 = vmatprep.subr.mxu0 0.0
      %1350 = vmatpush1.msra.mxu0 0.0
      %1351 = vmatprep.subr.mxu0 0.0
      %1352 = vmatpush1.msra.mxu0 0.0
      %1353 = vmatprep.subr.mxu0 0.0
      %1354 = vmatpush1.msra.mxu0 0.0
      %1355 = vmatprep.subr.mxu0 0.0
      %1356 = vmatpush1.msra.mxu0 0.0
      %1357 = vmatprep.subr.mxu0 0.0
      %1358 = vmatpush1.msra.mxu0 0.0
      %1359 = vmatprep.subr.mxu0 0.0
      %1360 = vmatpush1.msra.mxu0 0.0
      %1361 = vmatprep.subr.mxu0 0.0
      %1362 = vmatpush1.msra.mxu0 0.0
      %1363 = vmatprep.mubr.f32.mxu0 0.0
      %1364 = vmatmul.mubr.f32.gmra.mrb[0].mxu0 %v1099
      %v1365 = vpop.f32.mrb[0].mxu0
      %v1366 = vadd.f32 %v1251, %v1365
      %v1367 = vpop.f32.mrb[0].mxu0
      %1368 = vmatprep.mubr.f32.mxu0 0.0
      %1369 = vmatmul.mubr.f32.gmra.mrb[0].mxu0 %v1105
      %v1370 = vpop.f32.mrb[0].mxu0
      %v1371 = vadd.f32 %v1256, %v1370
      %v1372 = vpop.f32.mrb[0].mxu0
      %1373 = vmatprep.mubr.f32.mxu0 0.0
      %1374 = vmatmul.mubr.f32.gmra.mrb[0].mxu0 %v1111
      %v1375 = vpop.f32.mrb[0].mxu0
      %v1376 = vadd.f32 %v1261, %v1375
      %v1377 = vpop.f32.mrb[0].mxu0
      %1378 = vmatprep.mubr.f32.mxu0 0.0
      %1379 = vmatmul.mubr.f32.gmra.mrb[0].mxu0 %v1117
      %v1380 = vpop.f32.mrb[0].mxu0
      %v1381 = vadd.f32 %v1266, %v1380
      %v1382 = vpop.f32.mrb[0].mxu0
      %1383 = vmatprep.mubr.f32.mxu0 0.0
      %1384 = vmatmul.mubr.f32.gmra.mrb[0].mxu0 %v1123
      %v1385 = vpop.f32.mrb[0].mxu0
      %v1386 = vadd.f32 %v1271, %v1385
      %v1387 = vpop.f32.mrb[0].mxu0
      %1388 = vmatprep.mubr.f32.mxu0 0.0
      %1389 = vmatmul.mubr.f32.gmra.mrb[0].mxu0 %v1129
      %v1390 = vpop.f32.mrb[0].mxu0
      %v1391 = vadd.f32 %v1276, %v1390
      %v1392 = vpop.f32.mrb[0].mxu0
      %1393 = vmatprep.mubr.f32.mxu0 0.0
      %1394 = vmatmul.mubr.f32.gmra.mrb[0].mxu0 %v1135
      %v1395 = vpop.f32.mrb[0].mxu0
      %v1396 = vadd.f32 %v1281, %v1395
      %v1397 = vpop.f32.mrb[0].mxu0
      %1398 = vmatprep.mubr.f32.mxu0 0.0
      %1399 = vmatmul.mubr.f32.gmra.mrb[0].mxu0 %v1141
      %v1400 = vpop.f32.mrb[0].mxu0
      %v1401 = vadd.f32 %v1286, %v1400
      %v1402 = vpop.f32.mrb[0].mxu0
      %1403 = vmatprep.mubr.f32.mxu0 0.0
      %1404 = vmatmul.mubr.f32.gmra.mrb[0].mxu0 %v1147
      %v1405 = vpop.f32.mrb[0].mxu0
      %v1406 = vadd.f32 %v1291, %v1405
      %v1407 = vpop.f32.mrb[0].mxu0
      %1408 = vmatprep.mubr.f32.mxu0 0.0
      %1409 = vmatmul.mubr.f32.gmra.mrb[0].mxu0 %v1153
      %v1410 = vpop.f32.mrb[0].mxu0
      %v1411 = vadd.f32 %v1296, %v1410
      %v1412 = vpop.f32.mrb[0].mxu0
      %1413 = vdwg.mxu0
      %v1414 = vadd.f32 %v927, %v1366
      %v1415 = vadd.f32 %v932, %v1371
      %v1416 = vadd.f32 %v937, %v1376
      %v1417 = vadd.f32 %v942, %v1381
      %v1418 = vadd.f32 %v947, %v1386
      %v1419 = vadd.f32 %v952, %v1391
      %v1420 = vadd.f32 %v957, %v1396
      %v1421 = vadd.f32 %v962, %v1401
      %v1422 = vadd.f32 %v967, %v1406
      %v1423 = vadd.f32 %v972, %v1411
      %v1424 = vlaneseq
      %v1425 = vshrl.u32 %v1424, 7
      %v1426 = vadd.s32 %v1425, 8
      %v1427 = vadd.s32 %v1425, 16
      %v1428 = vadd.s32 %v1425, 24
      %v1429 = vadd.s32 %v1425, 32
      %v1430 = vadd.s32 %v1425, 40
      %v1431 = vadd.s32 %v1425, 48
      %v1432 = vadd.s32 %v1425, 56
      %v1433 = vadd.s32 %v1425, 64
      %v1434 = vadd.s32 %v1425, 72
      %vm1435 = vcmp.lt.s32.totalorder %v1425, 0
      %v1436 = vsub.s32 0, %v1425
      %v1437 = vsel %vm1435, %v1436, %v1425
      %v1438 = vmul.u32.u64.compose %v1437, 3435973837
      %v1439 = vextract.low.u32 %v1438
      %v1440 = vextract.high.u32 %v1438
      %v1441 = vshrl.u32 %v1440, 3
      %v1442 = vmul.u32 %v1441, 10
      %v1443 = vsub.s32 %v1437, %v1442
      %v1444 = vsub.s32 0, %v1443
      %v1445 = vsel %vm1435, %v1444, %v1443
      %vm1446 = vcmp.lt.s32.totalorder %v1426, 0
      %v1447 = vsub.s32 0, %v1426
      %v1448 = vsel %vm1446, %v1447, %v1426
      %v1449 = vmul.u32.u64.compose %v1448, 3435973837
      %v1450 = vextract.low.u32 %v1449
      %v1451 = vextract.high.u32 %v1449
      %v1452 = vshrl.u32 %v1451, 3
      %v1453 = vmul.u32 %v1452, 10
      %v1454 = vsub.s32 %v1448, %v1453
      %v1455 = vsub.s32 0, %v1454
      %v1456 = vsel %vm1446, %v1455, %v1454
      %vm1457 = vcmp.lt.s32.totalorder %v1427, 0
      %v1458 = vsub.s32 0, %v1427
      %v1459 = vsel %vm1457, %v1458, %v1427
      %v1460 = vmul.u32.u64.compose %v1459, 3435973837
      %v1461 = vextract.low.u32 %v1460
      %v1462 = vextract.high.u32 %v1460
      %v1463 = vshrl.u32 %v1462, 3
      %v1464 = vmul.u32 %v1463, 10
      %v1465 = vsub.s32 %v1459, %v1464
      %v1466 = vsub.s32 0, %v1465
      %v1467 = vsel %vm1457, %v1466, %v1465
      %vm1468 = vcmp.lt.s32.totalorder %v1428, 0
      %v1469 = vsub.s32 0, %v1428
      %v1470 = vsel %vm1468, %v1469, %v1428
      %v1471 = vmul.u32.u64.compose %v1470, 3435973837
      %v1472 = vextract.low.u32 %v1471
      %v1473 = vextract.high.u32 %v1471
      %v1474 = vshrl.u32 %v1473, 3
      %v1475 = vmul.u32 %v1474, 10
      %v1476 = vsub.s32 %v1470, %v1475
      %v1477 = vsub.s32 0, %v1476
      %v1478 = vsel %vm1468, %v1477, %v1476
      %vm1479 = vcmp.lt.s32.totalorder %v1429, 0
      %v1480 = vsub.s32 0, %v1429
      %v1481 = vsel %vm1479, %v1480, %v1429
      %v1482 = vmul.u32.u64.compose %v1481, 3435973837
      %v1483 = vextract.low.u32 %v1482
      %v1484 = vextract.high.u32 %v1482
      %v1485 = vshrl.u32 %v1484, 3
      %v1486 = vmul.u32 %v1485, 10
      %v1487 = vsub.s32 %v1481, %v1486
      %v1488 = vsub.s32 0, %v1487
      %v1489 = vsel %vm1479, %v1488, %v1487
      %vm1490 = vcmp.lt.s32.totalorder %v1430, 0
      %v1491 = vsub.s32 0, %v1430
      %v1492 = vsel %vm1490, %v1491, %v1430
      %v1493 = vmul.u32.u64.compose %v1492, 3435973837
      %v1494 = vextract.low.u32 %v1493
      %v1495 = vextract.high.u32 %v1493
      %v1496 = vshrl.u32 %v1495, 3
      %v1497 = vmul.u32 %v1496, 10
      %v1498 = vsub.s32 %v1492, %v1497
      %v1499 = vsub.s32 0, %v1498
      %v1500 = vsel %vm1490, %v1499, %v1498
      %vm1501 = vcmp.lt.s32.totalorder %v1431, 0
      %v1502 = vsub.s32 0, %v1431
      %v1503 = vsel %vm1501, %v1502, %v1431
      %v1504 = vmul.u32.u64.compose %v1503, 3435973837
      %v1505 = vextract.low.u32 %v1504
      %v1506 = vextract.high.u32 %v1504
      %v1507 = vshrl.u32 %v1506, 3
      %v1508 = vmul.u32 %v1507, 10
      %v1509 = vsub.s32 %v1503, %v1508
      %v1510 = vsub.s32 0, %v1509
      %v1511 = vsel %vm1501, %v1510, %v1509
      %vm1512 = vcmp.lt.s32.totalorder %v1432, 0
      %v1513 = vsub.s32 0, %v1432
      %v1514 = vsel %vm1512, %v1513, %v1432
      %v1515 = vmul.u32.u64.compose %v1514, 3435973837
      %v1516 = vextract.low.u32 %v1515
      %v1517 = vextract.high.u32 %v1515
      %v1518 = vshrl.u32 %v1517, 3
      %v1519 = vmul.u32 %v1518, 10
      %v1520 = vsub.s32 %v1514, %v1519
      %v1521 = vsub.s32 0, %v1520
      %v1522 = vsel %vm1512, %v1521, %v1520
      %vm1523 = vcmp.lt.s32.totalorder %v1433, 0
      %v1524 = vsub.s32 0, %v1433
      %v1525 = vsel %vm1523, %v1524, %v1433
      %v1526 = vmul.u32.u64.compose %v1525, 3435973837
      %v1527 = vextract.low.u32 %v1526
      %v1528 = vextract.high.u32 %v1526
      %v1529 = vshrl.u32 %v1528, 3
      %v1530 = vmul.u32 %v1529, 10
      %v1531 = vsub.s32 %v1525, %v1530
      %v1532 = vsub.s32 0, %v1531
      %v1533 = vsel %vm1523, %v1532, %v1531
      %vm1534 = vcmp.lt.s32.totalorder %v1434, 0
      %v1535 = vsub.s32 0, %v1434
      %v1536 = vsel %vm1534, %v1535, %v1434
      %v1537 = vmul.u32.u64.compose %v1536, 3435973837
      %v1538 = vextract.low.u32 %v1537
      %v1539 = vextract.high.u32 %v1537
      %v1540 = vshrl.u32 %v1539, 3
      %v1541 = vmul.u32 %v1540, 10
      %v1542 = vsub.s32 %v1536, %v1541
      %v1543 = vsub.s32 0, %v1542
      %v1544 = vsel %vm1534, %v1543, %v1542
      %vm1545 = vcmp.ne.s32.totalorder %v1445, 0
      %vm1546 = vcmp.ne.s32.totalorder %v1456, 0
      %vm1547 = vcmp.ne.s32.totalorder %v1467, 0
      %vm1548 = vcmp.ne.s32.totalorder %v1478, 0
      %vm1549 = vcmp.ne.s32.totalorder %v1489, 0
      %vm1550 = vcmp.ne.s32.totalorder %v1500, 0
      %vm1551 = vcmp.ne.s32.totalorder %v1511, 0
      %vm1552 = vcmp.ne.s32.totalorder %v1522, 0
      %vm1553 = vcmp.ne.s32.totalorder %v1533, 0
      %vm1554 = vcmp.ne.s32.totalorder %v1544, 0
      %vm1555 = vcmp.lt.s32.totalorder %v1445, 0
      %vm1556 = vcmp.lt.s32.totalorder %v1456, 0
      %vm1557 = vcmp.lt.s32.totalorder %v1467, 0
      %vm1558 = vcmp.lt.s32.totalorder %v1478, 0
      %vm1559 = vcmp.lt.s32.totalorder %v1489, 0
      %vm1560 = vcmp.lt.s32.totalorder %v1500, 0
      %vm1561 = vcmp.lt.s32.totalorder %v1511, 0
      %vm1562 = vcmp.lt.s32.totalorder %v1522, 0
      %vm1563 = vcmp.lt.s32.totalorder %v1533, 0
      %vm1564 = vcmp.lt.s32.totalorder %v1544, 0
      %vm1565 = vmand %vm1555, %vm1545
      %vm1566 = vmand %vm1556, %vm1546
      %vm1567 = vmand %vm1557, %vm1547
      %vm1568 = vmand %vm1558, %vm1548
      %vm1569 = vmand %vm1559, %vm1549
      %vm1570 = vmand %vm1560, %vm1550
      %vm1571 = vmand %vm1561, %vm1551
      %vm1572 = vmand %vm1562, %vm1552
      %vm1573 = vmand %vm1563, %vm1553
      %vm1574 = vmand %vm1564, %vm1554
      %v1575 = vadd.s32 %v1445, 10
      %v1576 = vadd.s32 %v1456, 10
      %v1577 = vadd.s32 %v1467, 10
      %v1578 = vadd.s32 %v1478, 10
      %v1579 = vadd.s32 %v1489, 10
      %v1580 = vadd.s32 %v1500, 10
      %v1581 = vadd.s32 %v1511, 10
      %v1582 = vadd.s32 %v1522, 10
      %v1583 = vadd.s32 %v1533, 10
      %v1584 = vadd.s32 %v1544, 10
      %v1585 = vsel %vm1565, %v1575, %v1445
      %v1586 = vsel %vm1566, %v1576, %v1456
      %v1587 = vsel %vm1567, %v1577, %v1467
      %v1588 = vsel %vm1568, %v1578, %v1478
      %v1589 = vsel %vm1569, %v1579, %v1489
      %v1590 = vsel %vm1570, %v1580, %v1500
      %v1591 = vsel %vm1571, %v1581, %v1511
      %v1592 = vsel %vm1572, %v1582, %v1522
      %v1593 = vsel %vm1573, %v1583, %v1533
      %v1594 = vsel %vm1574, %v1584, %v1544
      %vm1595 = vcmp.lt.s32.totalorder %v1585, 8
      %vm1596 = vcmp.lt.s32.totalorder %v1586, 8
      %vm1597 = vcmp.lt.s32.totalorder %v1587, 8
      %vm1598 = vcmp.lt.s32.totalorder %v1588, 8
      %vm1599 = vcmp.lt.s32.totalorder %v1589, 8
      %vm1600 = vcmp.lt.s32.totalorder %v1590, 8
      %vm1601 = vcmp.lt.s32.totalorder %v1591, 8
      %vm1602 = vcmp.lt.s32.totalorder %v1592, 8
      %vm1603 = vcmp.lt.s32.totalorder %v1593, 8
      %vm1604 = vcmp.lt.s32.totalorder %v1594, 8
      %v1605 = vsel %vm1595, %v1414, 0.0
      %v1606 = vsel %vm1596, %v1415, 0.0
      %v1607 = vsel %vm1597, %v1416, 0.0
      %v1608 = vsel %vm1598, %v1417, 0.0
      %v1609 = vsel %vm1599, %v1418, 0.0
      %v1610 = vsel %vm1600, %v1419, 0.0
      %v1611 = vsel %vm1601, %v1420, 0.0
      %v1612 = vsel %vm1602, %v1421, 0.0
      %v1613 = vsel %vm1603, %v1422, 0.0
      %v1614 = vsel %vm1604, %v1423, 0.0
      %v1615 = vadd.f32 %v1605, %v1606
      %v1616 = vadd.f32 %v1615, %v1607
      %v1617 = vadd.f32 %v1616, %v1608
      %v1618 = vadd.f32 %v1617, %v1609
      %v1619 = vadd.f32 %v1618, %v1610
      %v1620 = vadd.f32 %v1619, %v1611
      %v1621 = vadd.f32 %v1620, %v1612
      %v1622 = vadd.f32 %v1621, %v1613
      %v1623 = vadd.f32 %v1622, %v1614
      %v1624 = vrot.slane %v1623, 4
      %v1625 = vadd.f32 %v1623, %v1624
      %v1626 = vrot.slane %v1625, 2
      %v1627 = vadd.f32 %v1625, %v1626
      %v1628 = vrot.slane %v1627, 1
      %v1629 = vadd.f32 %v1627, %v1628
      %v1630 = vmul.f32 %v1605, %v1605
      %v1631 = vmul.f32 %v1606, %v1606
      %v1632 = vmul.f32 %v1607, %v1607
      %v1633 = vmul.f32 %v1608, %v1608
      %v1634 = vmul.f32 %v1609, %v1609
      %v1635 = vmul.f32 %v1610, %v1610
      %v1636 = vmul.f32 %v1611, %v1611
      %v1637 = vmul.f32 %v1612, %v1612
      %v1638 = vmul.f32 %v1613, %v1613
      %v1639 = vmul.f32 %v1614, %v1614
      %v1640 = vadd.f32 %v1630, %v1631
      %v1641 = vadd.f32 %v1640, %v1632
      %v1642 = vadd.f32 %v1641, %v1633
      %v1643 = vadd.f32 %v1642, %v1634
      %v1644 = vadd.f32 %v1643, %v1635
      %v1645 = vadd.f32 %v1644, %v1636
      %v1646 = vadd.f32 %v1645, %v1637
      %v1647 = vadd.f32 %v1646, %v1638
      %v1648 = vadd.f32 %v1647, %v1639
      %v1649 = vrot.slane %v1648, 4
      %v1650 = vadd.f32 %v1648, %v1649
      %v1651 = vrot.slane %v1650, 2
      %v1652 = vadd.f32 %v1650, %v1651
      %v1653 = vrot.slane %v1652, 1
      %v1654 = vadd.f32 %v1652, %v1653
      %v1655 = vld [vmem:[%s3] sm:$0x3]
      %vm1656 = vcmask 1040384
      %v1657 = vsel %vm1656, %v1629, %v1654
      %v1658 = vadd.f32 %v1655, %v1657
      %1659 = vst [vmem:[%s3] sm:$0x3] %v1658
      %1660 = vst [vmem:[%s168] sm:$0xff] %v1414
      %1661 = vst [vmem:[%s168 + $0x8] sm:$0xff] %v1415
      %1662 = vst [vmem:[%s168 + $0x10] sm:$0xff] %v1416
      %1663 = vst [vmem:[%s168 + $0x18] sm:$0xff] %v1417
      %1664 = vst [vmem:[%s168 + $0x20] sm:$0xff] %v1418
      %1665 = vst [vmem:[%s168 + $0x28] sm:$0xff] %v1419
      %1666 = vst [vmem:[%s168 + $0x30] sm:$0xff] %v1420
      %1667 = vst [vmem:[%s168 + $0x38] sm:$0xff] %v1421
      %1668 = vst [vmem:[%s168 + $0x40] sm:$0xff] %v1422
      %1669 = vst [vmem:[%s168 + $0x48] sm:$0xff] %v1423
      %p1670 = scmp.lt.s32.totalorder %s15, 1
      %s1671 = scalar_select %p1670, %s15, 1
      %s1672 = smul.addr %s1671, 10
      %s1673 = smul.addr %s1672, 8
      %s1674 = scalar_lea.vmem %s2, %s1673
      // Predicated region
      $region33: #{down_forward.8} parent=27 // pred_check
        %p1675 = pneg %p80
      $region34: #{down_forward.8} parent=27 // pred_check_branch
        %1677 = sbr.rel (%p1675) target = $region36
      $region35: #{down_forward.8} parent=27 // pred_region
        _
      $region36: #{down_forward.8} parent=27 // pred_fallthru
        _
      // Predicated region
      $region37: #{down_forward.8} parent=27 // pred_check
        %p1678 = pneg %p101
      $region38: #{down_forward.8} parent=27 // pred_check_branch
        %1680 = sbr.rel (%p1678) target = $region40
      $region39: #{down_forward.8} parent=27 // pred_region
        _
      $region40: #{down_forward.8} parent=27 // pred_fallthru
        _
      // Predicated region
      $region41: #{down_forward.8} parent=27 // pred_check
        %p1681 = pneg %p101
      $region42: #{down_forward.8} parent=27 // pred_check_branch
        %1683 = sbr.rel (%p1681) target = $region44
      $region43: #{down_forward.8} parent=27 // pred_region
        _
      $region44: #{down_forward.8} parent=27 // pred_fallthru
        _
    $region28: #{down_forward.8} parent=5 // pred_fallthru
      _
    %p1684 = scmp.le.s32.totalorder 2, %s10
    // Predicated region
    $region45: #{down_forward.8} parent=5 // pred_check
      %p1685 = pneg %p1684
    $region46: #{down_forward.8} parent=5 // pred_check_branch
      %1687 = sbr.rel (%p1685) target = $region48
    $region47: #{down_forward.8} parent=5 // pred_region
      %s1688 = ssub.s32 %s10, 2
      // Predicated region
      $region49: #{down_forward.8} parent=47 // pred_check
        %p1689 = pneg %p86
      $region50: #{down_forward.8} parent=47 // pred_check_branch
        %1691 = sbr.rel (%p1689) target = $region52
      $region51: #{down_forward.8} parent=47 // pred_region
        %p1692 = scmp.lt.s32.totalorder %s16, 1
        %s1693 = scalar_select %p1692, %s16, 1
        %s1694 = smul.addr %s1693, 10
        %s1695 = smul.addr %s1694, 8
        %s1696 = scalar_lea.vmem %s2, %s1695
      $region52: #{down_forward.8} parent=47 // pred_fallthru
        _
    $region48: #{down_forward.8} parent=5 // pred_fallthru
      _
  $region6: #{down_forward.8} parent=0 // loop_footer
    %s14 = sadd.s32 1, %s10
  $region7: #{down_forward.8} parent=0 // loop_footer_branch
    %9 = sbr.rel target = $region3
  $region8: #{down_forward.8} parent=0 // loop_exit
    _

</llo_original>
